<compile_context>
chip_gen: v7x
topology: tpu7x:2x2x1
jax: 0.10.0
libtpu: 0.0.40
codegen_flags: <defaults>
</compile_context>

<pallas_src>
import math
from functools import partial

import jax
import jax.numpy as jnp
from jax.experimental import pallas as pl
from jax.experimental.pallas import tpu as pltpu


def _vmem_limit_bytes():
    """Per-generation VMEM budget: ~96 MiB on v5e/v6e (128 MiB physical), ~48 MiB on v7x (64 MiB)."""
    try:
        physical = pltpu.get_tpu_info().vmem_capacity_bytes
    except Exception:
        physical = 64 * 1024 * 1024          # conservative (v7x) fallback
    return min(int(physical * 3 // 4), 100 * 1024 * 1024)


def mhsa_kernel(x_ref, mask_ref, wqkv_ref, bqkv_ref, wo_ref, bo_ref, o_ref,
                *, num_heads, head_size, compute_dtype):
    cd = compute_dtype
    D = num_heads * head_size
    S = x_ref.shape[1]

    x = x_ref[0]                                                     # (S, D) compute dtype

    # Fused QKV projection: one MXU launch, weights pre-transposed, Q pre-scaled.
    qkv = jnp.dot(x, wqkv_ref[...],
                  preferred_element_type=jnp.float32) + bqkv_ref[...]   # (S, 3D) f32

    def to_heads(t):                                                 # (S, D) -> (H, S, hd)
        return t.reshape(S, num_heads, head_size).transpose(1, 0, 2)

    q = to_heads(qkv[:, :D].astype(cd))                              # scale already folded in
    k = to_heads(qkv[:, D:2 * D].astype(cd))
    v = to_heads(qkv[:, 2 * D:].astype(cd))

    # Batched QK^T across all heads (no per-head lane slicing / K transpose copy).
    s = jnp.einsum('hqd,hkd->hqk', q, k,
                   preferred_element_type=jnp.float32)               # (H, S, S) f32
    s = s + mask_ref[0][None, :, :]                                  # (1,1,S) additive mask

    # Numerically stable softmax in f32; normalization deferred past PV.
    m = jnp.max(s, axis=-1, keepdims=True)
    e = jnp.exp(s - m)
    l = jnp.sum(e, axis=-1, keepdims=True)                           # (H, S, 1) f32

    ctx = jnp.einsum('hqk,hkd->hqd', e.astype(cd), v,
                     preferred_element_type=jnp.float32)             # (H, S, hd) f32
    approx = jnp.dtype(cd) != jnp.dtype(jnp.float32)                 # exact recip on f32 path
    ctx = ctx * pl.reciprocal(l, approx=approx)

    # (H, S, hd) -> (S, D) fully in registers: no VMEM scratch round-trip.
    ctx = ctx.transpose(1, 0, 2).reshape(S, D).astype(cd)

    # Output projection (weight pre-transposed in the wrapper).
    out = jnp.dot(ctx, wo_ref[...],
                  preferred_element_type=jnp.float32) + bo_ref[...]
    o_ref[0] = out.astype(o_ref.dtype)


def multi_head_self_attention(hidden_states, attention_mask, params, *,
                              num_heads, compute_dtype=jnp.bfloat16):
    """hidden_states: [B,S,D] f32; attention_mask: [B,1,1,S] additive or None."""
    B, S, D = hidden_states.shape
    assert D % num_heads == 0
    head_size = D // num_heads
    wq, bq, wk, bk, wv, bv, wo, bo = params

    # One-time XLA prep: fold softmax scale into Q projection, fuse + pre-transpose.
    scale = 1.0 / math.sqrt(head_size)
    w_qkv = jnp.concatenate([wq.T * scale, wk.T, wv.T], axis=1).astype(compute_dtype)  # (D, 3D)
    b_qkv = jnp.concatenate([bq * scale, bk, bv]).reshape(1, 3 * D).astype(jnp.float32)
    w_out = wo.T.astype(compute_dtype)                                                 # (D, D)
    b_out = bo.reshape(1, D).astype(jnp.float32)                                       # (1, D)

    if attention_mask is None:
        mask = jnp.zeros((B, 1, S), jnp.float32)
    else:
        mask = attention_mask.reshape(B, 1, S).astype(jnp.float32)

    x = hidden_states.astype(compute_dtype)   # bf16 activations by default (half the DMA)

    kernel = partial(mhsa_kernel, num_heads=num_heads, head_size=head_size,
                     compute_dtype=compute_dtype)

    def build(single_buffer_weights):
        const_kwargs = ({"pipeline_mode": pl.Buffered(1)}
                        if single_buffer_weights else {})

        def const_spec(shape):   # grid-invariant weight/bias blocks
            return pl.BlockSpec(shape, lambda b: (0, 0), **const_kwargs)

        return pl.pallas_call(
            kernel,
            out_shape=jax.ShapeDtypeStruct((B, S, D), hidden_states.dtype),
            grid_spec=pltpu.PrefetchScalarGridSpec(
                num_scalar_prefetch=0,
                grid=(B,),
                in_specs=[
                    pl.BlockSpec((1, S, D), lambda b: (b, 0, 0)),     # hidden_states
                    pl.BlockSpec((1, 1, S), lambda b: (b, 0, 0)),     # additive mask
                    const_spec((D, 3 * D)),                           # fused Wqkv^T (Q pre-scaled)
                    const_spec((1, 3 * D)),                           # fused QKV bias
                    const_spec((D, D)),                               # Wo^T
                    const_spec((1, D)),                               # bo
                ],
                out_specs=pl.BlockSpec((1, S, D), lambda b: (b, 0, 0)),
            ),
            compiler_params=pltpu.CompilerParams(
                dimension_semantics=("parallel",),
                vmem_limit_bytes=_vmem_limit_bytes(),
            ),
        )

    args = (x, mask, w_qkv, b_qkv, w_out, b_out)
    try:
        return build(True)(*args)
    except Exception:
        # Fallback for Pallas builds without per-operand buffer counts: constants
        # simply keep the default double buffering (costs only VMEM, not correctness).
        return build(False)(*args)


def reference_mhsa(x, mask, params, *, num_heads):
    """Plain-JAX reference mirroring the PyTorch forward (eval mode)."""
    B, S, D = x.shape
    hd = D // num_heads
    wq, bq, wk, bk, wv, bv, wo, bo = params

    def proj(t, w, b):
        return t @ w.T + b

    def heads(t):  # [B,S,D] -> [B,H,S,hd]
        return t.reshape(B, S, num_heads, hd).transpose(0, 2, 1, 3)

    q, k, v = heads(proj(x, wq, bq)), heads(proj(x, wk, bk)), heads(proj(x, wv, bv))
    scores = jnp.einsum('bhqd,bhkd->bhqk', q, k) / math.sqrt(hd)
    scores = scores + mask  # [B,1,1,S] broadcasts
    probs = jax.nn.softmax(scores, axis=-1)
    ctx = jnp.einsum('bhqk,bhkd->bhqd', probs, v)
    ctx = ctx.transpose(0, 2, 1, 3).reshape(B, S, D)
    return ctx @ wo.T + bo


if __name__ == "__main__":
    # Small config consistent with the module: dim=32, heads=4, seq=8, batch=2.
    B, S, D, H = 2, 8, 32, 4

    key = jax.random.PRNGKey(0)
    keys = jax.random.split(key, 10)

    scale = 0.05
    wq = scale * jax.random.normal(keys[0], (D, D), jnp.float32)
    bq = scale * jax.random.normal(keys[1], (D,), jnp.float32)
    wk = scale * jax.random.normal(keys[2], (D, D), jnp.float32)
    bk = scale * jax.random.normal(keys[3], (D,), jnp.float32)
    wv = scale * jax.random.normal(keys[4], (D, D), jnp.float32)
    bv = scale * jax.random.normal(keys[5], (D,), jnp.float32)
    wo = scale * jax.random.normal(keys[6], (D, D), jnp.float32)
    bo = scale * jax.random.normal(keys[7], (D,), jnp.float32)
    params = (wq, bq, wk, bk, wv, bv, wo, bo)

    x = jax.random.normal(keys[8], (B, S, D), jnp.float32)
    # Additive mask [B,1,1,S]: mask out the last two key positions of batch 1.
    mask = jnp.zeros((B, 1, 1, S), jnp.float32)
    mask = mask.at[1, 0, 0, -2:].set(-1e9)

    ref = reference_mhsa(x, mask, params, num_heads=H)

    # f32 compute path: tight semantics check (exact reciprocal on this path).
    out_f32 = jax.block_until_ready(
        multi_head_self_attention(x, mask, params, num_heads=H,
                                  compute_dtype=jnp.float32))
    assert out_f32.shape == (B, S, D)
    err_f32 = float(jnp.max(jnp.abs(out_f32 - ref)))
    assert err_f32 < 5e-3, f"f32 max abs err {err_f32}"

    # bf16 MXU-input path (default, per v6e/v7x guidance): looser tolerance.
    out_bf16 = jax.block_until_ready(
        multi_head_self_attention(x, mask, params, num_heads=H))
    assert out_bf16.shape == (B, S, D)
    err_bf16 = float(jnp.max(jnp.abs(out_bf16 - ref)))
    assert err_bf16 < 2e-2, f"bf16 max abs err {err_bf16}"

    print("KERNEL_OK")
</pallas_src>

<mosaic_0001>
module attributes {stable_mosaic.version = 11 : i64} {
  func.func @mhsa_kernel(%arg0: i32, %arg1: memref<1x8x32xf32, #tpu.memory_space<vmem>>, %arg2: memref<1x1x8xf32, #tpu.memory_space<vmem>>, %arg3: memref<32x96xf32, #tpu.memory_space<vmem>>, %arg4: memref<1x96xf32, #tpu.memory_space<vmem>>, %arg5: memref<32x32xf32, #tpu.memory_space<vmem>>, %arg6: memref<1x32xf32, #tpu.memory_space<vmem>>, %arg7: memref<1x8x32xf32, #tpu.memory_space<vmem>>) attributes {dimension_semantics = [#tpu.dimension_semantics<parallel>], iteration_bounds = array<i64: 2>, scalar_prefetch = 0 : i64, scratch_operands = 0 : i64, tpu.core_type = #tpu.core_type<tc>, window_params = [{transform_indices = @transform_0, window_bounds = array<i64: 1, 8, 32>}, {transform_indices = @transform_1, window_bounds = array<i64: 1, 1, 8>}, {pipeline_mode = #tpu.pipeline_mode<synchronous>, transform_indices = @transform_2, window_bounds = array<i64: 32, 96>}, {pipeline_mode = #tpu.pipeline_mode<synchronous>, transform_indices = @transform_3, window_bounds = array<i64: 1, 96>}, {pipeline_mode = #tpu.pipeline_mode<synchronous>, transform_indices = @transform_4, window_bounds = array<i64: 32, 32>}, {pipeline_mode = #tpu.pipeline_mode<synchronous>, transform_indices = @transform_5, window_bounds = array<i64: 1, 32>}, {transform_indices = @transform_6, window_bounds = array<i64: 1, 8, 32>}]} {
    %c0 = arith.constant 0 : index
    %c0_0 = arith.constant 0 : index
    %c0_1 = arith.constant 0 : index
    %0 = vector.load %arg1[%c0, %c0_0, %c0_1] : memref<1x8x32xf32, #tpu.memory_space<vmem>>, vector<1x8x32xf32>
    %1 = vector.shape_cast %0 : vector<1x8x32xf32> to vector<8x32xf32>
    %c0_2 = arith.constant 0 : index
    %c0_3 = arith.constant 0 : index
    %2 = vector.load %arg3[%c0_2, %c0_3] : memref<32x96xf32, #tpu.memory_space<vmem>>, vector<32x96xf32>
    %cst = arith.constant dense<0.000000e+00> : vector<8x96xf32>
    %3 = tpu.matmul %1, %2, %cst {dimension_numbers = #tpu.dot_dimension_numbers<[1], [0], [0], [1], [0, 0, 1, 1], [], []>} : vector<8x32xf32>, vector<32x96xf32>, vector<8x96xf32> -> vector<8x96xf32>
    %c0_4 = arith.constant 0 : index
    %c0_5 = arith.constant 0 : index
    %4 = vector.load %arg4[%c0_4, %c0_5] : memref<1x96xf32, #tpu.memory_space<vmem>>, vector<1x96xf32>
    %5 = vector.broadcast %4 : vector<1x96xf32> to vector<8x96xf32>
    %6 = arith.addf %3, %5 : vector<8x96xf32>
    %7 = vector.extract_strided_slice %6 {offsets = [0, 0], sizes = [8, 32], strides = [1, 1]} : vector<8x96xf32> to vector<8x32xf32>
    %8 = vector.shape_cast %7 : vector<8x32xf32> to vector<8x4x8xf32>
    %9 = tpu.transpose %8, [1, 0, 2] : vector<8x4x8xf32> -> vector<4x8x8xf32>
    %10 = vector.extract_strided_slice %6 {offsets = [0, 32], sizes = [8, 32], strides = [1, 1]} : vector<8x96xf32> to vector<8x32xf32>
    %11 = vector.shape_cast %10 : vector<8x32xf32> to vector<8x4x8xf32>
    %12 = tpu.transpose %11, [1, 0, 2] : vector<8x4x8xf32> -> vector<4x8x8xf32>
    %13 = vector.extract_strided_slice %6 {offsets = [0, 64], sizes = [8, 32], strides = [1, 1]} : vector<8x96xf32> to vector<8x32xf32>
    %14 = vector.shape_cast %13 : vector<8x32xf32> to vector<8x4x8xf32>
    %15 = tpu.transpose %14, [1, 0, 2] : vector<8x4x8xf32> -> vector<4x8x8xf32>
    "tpu.trace_start"() <{level = 10 : i32, message = "hqd,hkd->hqk"}> : () -> ()
    %cst_6 = arith.constant dense<0.000000e+00> : vector<4x8x8xf32>
    %16 = tpu.matmul %9, %12, %cst_6 {dimension_numbers = #tpu.dot_dimension_numbers<[2], [2], [1], [1], [0, 0, 0, 1, 1, 1], [0], [0]>} : vector<4x8x8xf32>, vector<4x8x8xf32>, vector<4x8x8xf32> -> vector<4x8x8xf32>
    "tpu.trace_stop"() : () -> ()
    %c0_7 = arith.constant 0 : index
    %c0_8 = arith.constant 0 : index
    %c0_9 = arith.constant 0 : index
    %17 = vector.load %arg2[%c0_7, %c0_8, %c0_9] : memref<1x1x8xf32, #tpu.memory_space<vmem>>, vector<1x1x8xf32>
    %18 = vector.shape_cast %17 : vector<1x1x8xf32> to vector<1x8xf32>
    %19 = vector.shape_cast %18 : vector<1x8xf32> to vector<1x1x8xf32>
    %20 = vector.broadcast %19 : vector<1x1x8xf32> to vector<4x8x8xf32>
    %21 = arith.addf %16, %20 : vector<4x8x8xf32>
    %cst_10 = arith.constant dense<0xFF800000> : vector<4x8xf32>
    %22 = vector.multi_reduction <maximumf>, %21, %cst_10 [2] : vector<4x8x8xf32> to vector<4x8xf32>
    %23 = vector.shape_cast %22 : vector<4x8xf32> to vector<4x8x1xf32>
    %24 = vector.broadcast %23 : vector<4x8x1xf32> to vector<4x8x8xf32>
    %25 = arith.subf %21, %24 : vector<4x8x8xf32>
    %26 = math.exp %25 : vector<4x8x8xf32>
    %cst_11 = arith.constant dense<0.000000e+00> : vector<4x8xf32>
    %27 = vector.multi_reduction <add>, %26, %cst_11 [2] : vector<4x8x8xf32> to vector<4x8xf32>
    %28 = vector.shape_cast %27 : vector<4x8xf32> to vector<4x8x1xf32>
    "tpu.trace_start"() <{level = 10 : i32, message = "hqk,hkd->hqd"}> : () -> ()
    %cst_12 = arith.constant dense<0.000000e+00> : vector<4x8x8xf32>
    %29 = tpu.matmul %26, %15, %cst_12 {dimension_numbers = #tpu.dot_dimension_numbers<[2], [1], [1], [2], [0, 0, 0, 1, 1, 2], [0], [0]>} : vector<4x8x8xf32>, vector<4x8x8xf32>, vector<4x8x8xf32> -> vector<4x8x8xf32>
    "tpu.trace_stop"() : () -> ()
    %30 = tpu.reciprocal %28 : vector<4x8x1xf32> -> vector<4x8x1xf32>
    %31 = vector.broadcast %30 : vector<4x8x1xf32> to vector<4x8x8xf32>
    %32 = arith.mulf %29, %31 : vector<4x8x8xf32>
    %33 = tpu.transpose %32, [1, 0, 2] : vector<4x8x8xf32> -> vector<8x4x8xf32>
    %34 = vector.shape_cast %33 : vector<8x4x8xf32> to vector<8x32xf32>
    %c0_13 = arith.constant 0 : index
    %c0_14 = arith.constant 0 : index
    %35 = vector.load %arg5[%c0_13, %c0_14] : memref<32x32xf32, #tpu.memory_space<vmem>>, vector<32x32xf32>
    %cst_15 = arith.constant dense<0.000000e+00> : vector<8x32xf32>
    %36 = tpu.matmul %34, %35, %cst_15 {dimension_numbers = #tpu.dot_dimension_numbers<[1], [0], [0], [1], [0, 0, 1, 1], [], []>} : vector<8x32xf32>, vector<32x32xf32>, vector<8x32xf32> -> vector<8x32xf32>
    %c0_16 = arith.constant 0 : index
    %c0_17 = arith.constant 0 : index
    %37 = vector.load %arg6[%c0_16, %c0_17] : memref<1x32xf32, #tpu.memory_space<vmem>>, vector<1x32xf32>
    %38 = vector.broadcast %37 : vector<1x32xf32> to vector<8x32xf32>
    %39 = arith.addf %36, %38 : vector<8x32xf32>
    %c0_18 = arith.constant 0 : index
    %c0_19 = arith.constant 0 : index
    %c0_20 = arith.constant 0 : index
    %40 = vector.load %arg7[%c0_18, %c0_19, %c0_20] : memref<1x8x32xf32, #tpu.memory_space<vmem>>, vector<1x8x32xf32>
    %41 = vector.shape_cast %40 : vector<1x8x32xf32> to vector<8x32xf32>
    %42 = vector.shape_cast %39 : vector<8x32xf32> to vector<1x8x32xf32>
    tpu.vector_store %arg7[%c0_18, %c0_19, %c0_20], %42 {strides = array<i32>} : memref<1x8x32xf32, #tpu.memory_space<vmem>>, vector<1x8x32xf32>,
    return
  }
  func.func @transform_0(%arg0: i32) -> (i32, i32, i32) {
    %c0_i32 = arith.constant 0 : i32
    %c0_i32_0 = arith.constant 0 : i32
    %c0_i32_1 = arith.constant 0 : i32
    return %arg0, %c0_i32, %c0_i32_0 : i32, i32, i32
  }
  func.func @transform_1(%arg0: i32) -> (i32, i32, i32) {
    %c0_i32 = arith.constant 0 : i32
    %c0_i32_0 = arith.constant 0 : i32
    %c0_i32_1 = arith.constant 0 : i32
    return %arg0, %c0_i32, %c0_i32_0 : i32, i32, i32
  }
  func.func @transform_2(%arg0: i32) -> (i32, i32) {
    %c0_i32 = arith.constant 0 : i32
    %c0_i32_0 = arith.constant 0 : i32
    %c0_i32_1 = arith.constant 0 : i32
    return %c0_i32, %c0_i32_0 : i32, i32
  }
  func.func @transform_3(%arg0: i32) -> (i32, i32) {
    %c0_i32 = arith.constant 0 : i32
    %c0_i32_0 = arith.constant 0 : i32
    %c0_i32_1 = arith.constant 0 : i32
    return %c0_i32, %c0_i32_0 : i32, i32
  }
  func.func @transform_4(%arg0: i32) -> (i32, i32) {
    %c0_i32 = arith.constant 0 : i32
    %c0_i32_0 = arith.constant 0 : i32
    %c0_i32_1 = arith.constant 0 : i32
    return %c0_i32, %c0_i32_0 : i32, i32
  }
  func.func @transform_5(%arg0: i32) -> (i32, i32) {
    %c0_i32 = arith.constant 0 : i32
    %c0_i32_0 = arith.constant 0 : i32
    %c0_i32_1 = arith.constant 0 : i32
    return %c0_i32, %c0_i32_0 : i32, i32
  }
  func.func @transform_6(%arg0: i32) -> (i32, i32, i32) {
    %c0_i32 = arith.constant 0 : i32
    %c0_i32_0 = arith.constant 0 : i32
    %c0_i32_1 = arith.constant 0 : i32
    return %arg0, %c0_i32, %c0_i32_0 : i32, i32, i32
  }
}

module attributes {stable_mosaic.version = 11 : i64} {
  func.func @mhsa_kernel(%arg0: i32, %arg1: memref<1x8x32xf32, #tpu.memory_space<vmem>>, %arg2: memref<1x1x8xf32, #tpu.memory_space<vmem>>, %arg3: memref<32x96xf32, #tpu.memory_space<vmem>>, %arg4: memref<1x96xf32, #tpu.memory_space<vmem>>, %arg5: memref<32x32xf32, #tpu.memory_space<vmem>>, %arg6: memref<1x32xf32, #tpu.memory_space<vmem>>, %arg7: memref<1x8x32xf32, #tpu.memory_space<vmem>>) attributes {dimension_semantics = [#tpu.dimension_semantics<parallel>], iteration_bounds = array<i64: 2>, scalar_prefetch = 0 : i64, scratch_operands = 0 : i64, tpu.core_type = #tpu.core_type<tc>, window_params = [{transform_indices = @transform_0, window_bounds = array<i64: 1, 8, 32>}, {transform_indices = @transform_1, window_bounds = array<i64: 1, 1, 8>}, {pipeline_mode = #tpu.pipeline_mode<synchronous>, transform_indices = @transform_2, window_bounds = array<i64: 32, 96>}, {pipeline_mode = #tpu.pipeline_mode<synchronous>, transform_indices = @transform_3, window_bounds = array<i64: 1, 96>}, {pipeline_mode = #tpu.pipeline_mode<synchronous>, transform_indices = @transform_4, window_bounds = array<i64: 32, 32>}, {pipeline_mode = #tpu.pipeline_mode<synchronous>, transform_indices = @transform_5, window_bounds = array<i64: 1, 32>}, {transform_indices = @transform_6, window_bounds = array<i64: 1, 8, 32>}]} {
    %c0 = arith.constant 0 : index
    %c0_0 = arith.constant 0 : index
    %c0_1 = arith.constant 0 : index
    %0 = vector.load %arg1[%c0, %c0_0, %c0_1] : memref<1x8x32xf32, #tpu.memory_space<vmem>>, vector<1x8x32xf32>
    %1 = vector.shape_cast %0 : vector<1x8x32xf32> to vector<8x32xf32>
    %c0_2 = arith.constant 0 : index
    %c0_3 = arith.constant 0 : index
    %2 = vector.load %arg3[%c0_2, %c0_3] : memref<32x96xf32, #tpu.memory_space<vmem>>, vector<32x96xf32>
    %cst = arith.constant dense<0.000000e+00> : vector<8x96xf32>
    %3 = tpu.matmul %1, %2, %cst {dimension_numbers = #tpu.dot_dimension_numbers<[1], [0], [0], [1], [0, 0, 1, 1], [], []>} : vector<8x32xf32>, vector<32x96xf32>, vector<8x96xf32> -> vector<8x96xf32>
    %c0_4 = arith.constant 0 : index
    %c0_5 = arith.constant 0 : index
    %4 = vector.load %arg4[%c0_4, %c0_5] : memref<1x96xf32, #tpu.memory_space<vmem>>, vector<1x96xf32>
    %5 = vector.broadcast %4 : vector<1x96xf32> to vector<8x96xf32>
    %6 = arith.addf %3, %5 : vector<8x96xf32>
    %7 = vector.extract_strided_slice %6 {offsets = [0, 0], sizes = [8, 32], strides = [1, 1]} : vector<8x96xf32> to vector<8x32xf32>
    %8 = vector.shape_cast %7 : vector<8x32xf32> to vector<8x4x8xf32>
    %9 = tpu.transpose %8, [1, 0, 2] : vector<8x4x8xf32> -> vector<4x8x8xf32>
    %10 = vector.extract_strided_slice %6 {offsets = [0, 32], sizes = [8, 32], strides = [1, 1]} : vector<8x96xf32> to vector<8x32xf32>
    %11 = vector.shape_cast %10 : vector<8x32xf32> to vector<8x4x8xf32>
    %12 = tpu.transpose %11, [1, 0, 2] : vector<8x4x8xf32> -> vector<4x8x8xf32>
    %13 = vector.extract_strided_slice %6 {offsets = [0, 64], sizes = [8, 32], strides = [1, 1]} : vector<8x96xf32> to vector<8x32xf32>
    %14 = vector.shape_cast %13 : vector<8x32xf32> to vector<8x4x8xf32>
    %15 = tpu.transpose %14, [1, 0, 2] : vector<8x4x8xf32> -> vector<4x8x8xf32>
    "tpu.trace_start"() <{level = 10 : i32, message = "hqd,hkd->hqk"}> : () -> ()
    %cst_6 = arith.constant dense<0.000000e+00> : vector<4x8x8xf32>
    %16 = tpu.matmul %9, %12, %cst_6 {dimension_numbers = #tpu.dot_dimension_numbers<[2], [2], [1], [1], [0, 0, 0, 1, 1, 1], [0], [0]>} : vector<4x8x8xf32>, vector<4x8x8xf32>, vector<4x8x8xf32> -> vector<4x8x8xf32>
    "tpu.trace_stop"() : () -> ()
    %c0_7 = arith.constant 0 : index
    %c0_8 = arith.constant 0 : index
    %c0_9 = arith.constant 0 : index
    %17 = vector.load %arg2[%c0_7, %c0_8, %c0_9] : memref<1x1x8xf32, #tpu.memory_space<vmem>>, vector<1x1x8xf32>
    %18 = vector.shape_cast %17 : vector<1x1x8xf32> to vector<1x8xf32>
    %19 = vector.shape_cast %18 : vector<1x8xf32> to vector<1x1x8xf32>
    %20 = vector.broadcast %19 : vector<1x1x8xf32> to vector<4x8x8xf32>
    %21 = arith.addf %16, %20 : vector<4x8x8xf32>
    %cst_10 = arith.constant dense<0xFF800000> : vector<4x8xf32>
    %22 = vector.multi_reduction <maximumf>, %21, %cst_10 [2] : vector<4x8x8xf32> to vector<4x8xf32>
    %23 = vector.shape_cast %22 : vector<4x8xf32> to vector<4x8x1xf32>
    %24 = vector.broadcast %23 : vector<4x8x1xf32> to vector<4x8x8xf32>
    %25 = arith.subf %21, %24 : vector<4x8x8xf32>
    %26 = math.exp %25 : vector<4x8x8xf32>
    %cst_11 = arith.constant dense<0.000000e+00> : vector<4x8xf32>
    %27 = vector.multi_reduction <add>, %26, %cst_11 [2] : vector<4x8x8xf32> to vector<4x8xf32>
    %28 = vector.shape_cast %27 : vector<4x8xf32> to vector<4x8x1xf32>
    "tpu.trace_start"() <{level = 10 : i32, message = "hqk,hkd->hqd"}> : () -> ()
    %cst_12 = arith.constant dense<0.000000e+00> : vector<4x8x8xf32>
    %29 = tpu.matmul %26, %15, %cst_12 {dimension_numbers = #tpu.dot_dimension_numbers<[2], [1], [1], [2], [0, 0, 0, 1, 1, 2], [0], [0]>} : vector<4x8x8xf32>, vector<4x8x8xf32>, vector<4x8x8xf32> -> vector<4x8x8xf32>
    "tpu.trace_stop"() : () -> ()
    %30 = tpu.reciprocal %28 : vector<4x8x1xf32> -> vector<4x8x1xf32>
    %31 = vector.broadcast %30 : vector<4x8x1xf32> to vector<4x8x8xf32>
    %32 = arith.mulf %29, %31 : vector<4x8x8xf32>
    %33 = tpu.transpose %32, [1, 0, 2] : vector<4x8x8xf32> -> vector<8x4x8xf32>
    %34 = vector.shape_cast %33 : vector<8x4x8xf32> to vector<8x32xf32>
    %c0_13 = arith.constant 0 : index
    %c0_14 = arith.constant 0 : index
    %35 = vector.load %arg5[%c0_13, %c0_14] : memref<32x32xf32, #tpu.memory_space<vmem>>, vector<32x32xf32>
    %cst_15 = arith.constant dense<0.000000e+00> : vector<8x32xf32>
    %36 = tpu.matmul %34, %35, %cst_15 {dimension_numbers = #tpu.dot_dimension_numbers<[1], [0], [0], [1], [0, 0, 1, 1], [], []>} : vector<8x32xf32>, vector<32x32xf32>, vector<8x32xf32> -> vector<8x32xf32>
    %c0_16 = arith.constant 0 : index
    %c0_17 = arith.constant 0 : index
    %37 = vector.load %arg6[%c0_16, %c0_17] : memref<1x32xf32, #tpu.memory_space<vmem>>, vector<1x32xf32>
    %38 = vector.broadcast %37 : vector<1x32xf32> to vector<8x32xf32>
    %39 = arith.addf %36, %38 : vector<8x32xf32>
    %c0_18 = arith.constant 0 : index
    %c0_19 = arith.constant 0 : index
    %c0_20 = arith.constant 0 : index
    %40 = vector.load %arg7[%c0_18, %c0_19, %c0_20] : memref<1x8x32xf32, #tpu.memory_space<vmem>>, vector<1x8x32xf32>
    %41 = vector.shape_cast %40 : vector<1x8x32xf32> to vector<8x32xf32>
    %42 = vector.shape_cast %39 : vector<8x32xf32> to vector<1x8x32xf32>
    tpu.vector_store %arg7[%c0_18, %c0_19, %c0_20], %42 {strides = array<i32>} : memref<1x8x32xf32, #tpu.memory_space<vmem>>, vector<1x8x32xf32>,
    return
  }
  func.func @transform_0(%arg0: i32) -> (i32, i32, i32) {
    %c0_i32 = arith.constant 0 : i32
    %c0_i32_0 = arith.constant 0 : i32
    %c0_i32_1 = arith.constant 0 : i32
    return %arg0, %c0_i32, %c0_i32_0 : i32, i32, i32
  }
  func.func @transform_1(%arg0: i32) -> (i32, i32, i32) {
    %c0_i32 = arith.constant 0 : i32
    %c0_i32_0 = arith.constant 0 : i32
    %c0_i32_1 = arith.constant 0 : i32
    return %arg0, %c0_i32, %c0_i32_0 : i32, i32, i32
  }
  func.func @transform_2(%arg0: i32) -> (i32, i32) {
    %c0_i32 = arith.constant 0 : i32
    %c0_i32_0 = arith.constant 0 : i32
    %c0_i32_1 = arith.constant 0 : i32
    return %c0_i32, %c0_i32_0 : i32, i32
  }
  func.func @transform_3(%arg0: i32) -> (i32, i32) {
    %c0_i32 = arith.constant 0 : i32
    %c0_i32_0 = arith.constant 0 : i32
    %c0_i32_1 = arith.constant 0 : i32
    return %c0_i32, %c0_i32_0 : i32, i32
  }
  func.func @transform_4(%arg0: i32) -> (i32, i32) {
    %c0_i32 = arith.constant 0 : i32
    %c0_i32_0 = arith.constant 0 : i32
    %c0_i32_1 = arith.constant 0 : i32
    return %c0_i32, %c0_i32_0 : i32, i32
  }
  func.func @transform_5(%arg0: i32) -> (i32, i32) {
    %c0_i32 = arith.constant 0 : i32
    %c0_i32_0 = arith.constant 0 : i32
    %c0_i32_1 = arith.constant 0 : i32
    return %c0_i32, %c0_i32_0 : i32, i32
  }
  func.func @transform_6(%arg0: i32) -> (i32, i32, i32) {
    %c0_i32 = arith.constant 0 : i32
    %c0_i32_0 = arith.constant 0 : i32
    %c0_i32_1 = arith.constant 0 : i32
    return %arg0, %c0_i32, %c0_i32_0 : i32, i32, i32
  }
}

</mosaic_0001>

<llo_original>
// kernel: tpu_custom_call.1
$region0: #{tpu_custom_call.1}
  #allocation0 [shape = 'u32[]', space=smem, size = 0x4, offset = 0x4, fixed_abs, tag = 'smem constant byte address 0x4 - core index']
  #allocation1 [shape = 'u32[144,128]{1,0:T(1,128)}', space=vmem, size = 0x12000, scoped, tag = 'internal scratch']
  %s0 = inlined_call_operand.hbm [shape: f32[2,8,32], index: 0, kind: input, shape index: {}]
  %s1 = inlined_call_operand.vmem [shape: f32[2,1,8], index: 1, kind: input, shape index: {}]
  %s2 = inlined_call_operand.hbm [shape: f32[32,96], index: 2, kind: input, shape index: {}]
  %s3 = inlined_call_operand.vmem [shape: f32[1,96], index: 3, kind: input, shape index: {}]
  %s4 = inlined_call_operand.hbm [shape: f32[32,32], index: 4, kind: input, shape index: {}]
  %s5 = inlined_call_operand.vmem [shape: f32[1,32], index: 5, kind: input, shape index: {}]
  %s6 = inlined_call_operand.hbm [shape: f32[2,8,32], index: 6, kind: output, shape index: {}]
  %s7 = sld [smem:[#allocation0]]
  $region69: #{tpu_custom_call.1} parent=0
    _
  %s9 = ssub.s32 1, %s7
  %s10 = scalar_select 0, %s9, %s7
  $region1: #{tpu_custom_call.1} parent=0
    #allocation2 [shape = 'u8[8192]{0}', space=vmem, size = 0x2000, scoped, tag = 'input window, operand 0']
    #allocation3 [shape = 's32[2]{0}', space=sflag, size = 0x8, scoped, tag = 'scoped memory for tpu_custom_call.1']
    #allocation4 [shape = 's32[2]{0}', space=sflag, size = 0x8, scoped, tag = 'scoped memory for tpu_custom_call.1']
    #allocation5 [shape = 'u8[16384]{0}', space=vmem, size = 0x4000, scoped, tag = 'input window, operand 2, single buffered']
    #allocation6 [shape = 's32[1]{0}', space=sflag, size = 0x4, scoped, tag = 'scoped memory for tpu_custom_call.1']
    #allocation7 [shape = 'u8[16384]{0}', space=vmem, size = 0x4000, scoped, tag = 'input window, operand 4, single buffered']
    #allocation8 [shape = 'u8[8192]{0}', space=vmem, size = 0x2000, scoped, tag = 'output window, operand 0']
    %11 = vsyncpa [#allocation3], 0
    %s12 = scalar_lea.sflag [#allocation3], 1
    %13 = vsyncpa %s12, 0
    %14 = vsyncpa [#allocation6], 0
    %15 = vsyncpa [#allocation4], 0
    %s16 = scalar_lea.sflag [#allocation4], 1
    %17 = vsyncpa %s16, 0
    loop: start=0, step=1, limit=4
    $region2: #{tpu_custom_call.1} parent=1 // loop_pre_header
      _
    $region3: #{tpu_custom_call.1} parent=1 // loop_header
      %s19 = sphi 0, %s23
      %p20 = scmp.ge.s32.totalorder %s19, 4
      %s29 = sphi 0, %s31
      %s32 = sphi 0, %s29
      %s33 = sphi 0, %s32
      %s49 = sphi 0, %s33
      %s55 = sphi 0, %s57
      %s58 = sphi 0, %s55
      %s59 = sphi 0, %s58
      %s75 = sphi 0, %s59
      %s79 = sphi 0, %s79
      %s81 = sphi 0, %s79
      %s82 = sphi 0, %s81
      %s96 = sphi 0, %s82
      %s100 = sphi 0, %s100
      %s102 = sphi 0, %s100
      %s103 = sphi 0, %s102
      %s117 = sphi 0, %s103
      %s121 = sphi 0, %s121
      %s123 = sphi 0, %s121
      %s124 = sphi 0, %s123
      %s138 = sphi 0, %s124
      %s142 = sphi 0, %s142
      %s144 = sphi 0, %s142
      %s145 = sphi 0, %s144
      %s159 = sphi 0, %s145
      %s165 = sphi 0, %s167
      %s168 = sphi 0, %s165
      %s169 = sphi 0, %s168
      %s185 = sphi 0, %s169
    $region4: #{tpu_custom_call.1} parent=1 // loop_header_branch
      %22 = sbr.rel (%p20) target = $region8
    $region5: #{tpu_custom_call.1} parent=1 // loop_body
      %s24 = ssub.s32 %s19, 1
      %s25 = ssub.s32 %s19, 2
      %s26 = sadd.s32 %s19, 1
      %s27 = ssub.s32 %s19, %s26
      %p28 = scmp.eq.s32.totalorder %s27, 0
      %s30 = sadd.s32 %s29, 1
      %s31 = scalar_select %p28, %s29, %s30
      %p34 = pneg %p28
      %p35 = scmp.eq.s32.totalorder %s19, 1
      %p36 = por %p34, %p35
      %p37 = scmp.ne.s32.totalorder %s29, %s32
      %p38 = scmp.eq.s32.totalorder %s19, 0
      %p39 = por %p37, %p38
      %p40 = scmp.ne.s32.totalorder %s29, %s32
      %p41 = scmp.eq.s32.totalorder %s24, 1
      %p42 = por %p40, %p41
      %p43 = scmp.ne.s32.totalorder %s32, %s33
      %p44 = scmp.eq.s32.totalorder %s24, 0
      %p45 = por %p43, %p44
      %p46 = scmp.ne.s32.totalorder %s32, %s33
      %p47 = scmp.eq.s32.totalorder %s25, 1
      %p48 = por %p46, %p47
      %p50 = scmp.ne.s32.totalorder %s33, %s49
      %p51 = scmp.eq.s32.totalorder %s25, 0
      %p52 = por %p50, %p51
      %s53 = ssub.s32 %s19, %s26
      %p54 = scmp.eq.s32.totalorder %s53, 0
      %s56 = sadd.s32 %s55, 1
      %s57 = scalar_select %p54, %s55, %s56
      %p60 = pneg %p54
      %p61 = scmp.eq.s32.totalorder %s19, 1
      %p62 = por %p60, %p61
      %p63 = scmp.ne.s32.totalorder %s55, %s58
      %p64 = scmp.eq.s32.totalorder %s19, 0
      %p65 = por %p63, %p64
      %p66 = scmp.ne.s32.totalorder %s55, %s58
      %p67 = scmp.eq.s32.totalorder %s24, 1
      %p68 = por %p66, %p67
      %p69 = scmp.ne.s32.totalorder %s58, %s59
      %p70 = scmp.eq.s32.totalorder %s24, 0
      %p71 = por %p69, %p70
      %p72 = scmp.ne.s32.totalorder %s58, %s59
      %p73 = scmp.eq.s32.totalorder %s25, 1
      %p74 = por %p72, %p73
      %p76 = scmp.ne.s32.totalorder %s59, %s75
      %p77 = scmp.eq.s32.totalorder %s25, 0
      %p78 = por %p76, %p77
      %s80 = sadd.s32 %s79, 1
      %p83 = scmp.eq.s32.totalorder %s19, 1
      %p84 = scmp.ne.s32.totalorder %s79, %s81
      %p85 = scmp.eq.s32.totalorder %s19, 0
      %p86 = por %p84, %p85
      %p87 = scmp.ne.s32.totalorder %s79, %s81
      %p88 = scmp.eq.s32.totalorder %s24, 1
      %p89 = por %p87, %p88
      %p90 = scmp.ne.s32.totalorder %s81, %s82
      %p91 = scmp.eq.s32.totalorder %s24, 0
      %p92 = por %p90, %p91
      %p93 = scmp.ne.s32.totalorder %s81, %s82
      %p94 = scmp.eq.s32.totalorder %s25, 1
      %p95 = por %p93, %p94
      %p97 = scmp.ne.s32.totalorder %s82, %s96
      %p98 = scmp.eq.s32.totalorder %s25, 0
      %p99 = por %p97, %p98
      %s101 = sadd.s32 %s100, 1
      %p104 = scmp.eq.s32.totalorder %s19, 1
      %p105 = scmp.ne.s32.totalorder %s100, %s102
      %p106 = scmp.eq.s32.totalorder %s19, 0
      %p107 = por %p105, %p106
      %p108 = scmp.ne.s32.totalorder %s100, %s102
      %p109 = scmp.eq.s32.totalorder %s24, 1
      %p110 = por %p108, %p109
      %p111 = scmp.ne.s32.totalorder %s102, %s103
      %p112 = scmp.eq.s32.totalorder %s24, 0
      %p113 = por %p111, %p112
      %p114 = scmp.ne.s32.totalorder %s102, %s103
      %p115 = scmp.eq.s32.totalorder %s25, 1
      %p116 = por %p114, %p115
      %p118 = scmp.ne.s32.totalorder %s103, %s117
      %p119 = scmp.eq.s32.totalorder %s25, 0
      %p120 = por %p118, %p119
      %s122 = sadd.s32 %s121, 1
      %p125 = scmp.eq.s32.totalorder %s19, 1
      %p126 = scmp.ne.s32.totalorder %s121, %s123
      %p127 = scmp.eq.s32.totalorder %s19, 0
      %p128 = por %p126, %p127
      %p129 = scmp.ne.s32.totalorder %s121, %s123
      %p130 = scmp.eq.s32.totalorder %s24, 1
      %p131 = por %p129, %p130
      %p132 = scmp.ne.s32.totalorder %s123, %s124
      %p133 = scmp.eq.s32.totalorder %s24, 0
      %p134 = por %p132, %p133
      %p135 = scmp.ne.s32.totalorder %s123, %s124
      %p136 = scmp.eq.s32.totalorder %s25, 1
      %p137 = por %p135, %p136
      %p139 = scmp.ne.s32.totalorder %s124, %s138
      %p140 = scmp.eq.s32.totalorder %s25, 0
      %p141 = por %p139, %p140
      %s143 = sadd.s32 %s142, 1
      %p146 = scmp.eq.s32.totalorder %s19, 1
      %p147 = scmp.ne.s32.totalorder %s142, %s144
      %p148 = scmp.eq.s32.totalorder %s19, 0
      %p149 = por %p147, %p148
      %p150 = scmp.ne.s32.totalorder %s142, %s144
      %p151 = scmp.eq.s32.totalorder %s24, 1
      %p152 = por %p150, %p151
      %p153 = scmp.ne.s32.totalorder %s144, %s145
      %p154 = scmp.eq.s32.totalorder %s24, 0
      %p155 = por %p153, %p154
      %p156 = scmp.ne.s32.totalorder %s144, %s145
      %p157 = scmp.eq.s32.totalorder %s25, 1
      %p158 = por %p156, %p157
      %p160 = scmp.ne.s32.totalorder %s145, %s159
      %p161 = scmp.eq.s32.totalorder %s25, 0
      %p162 = por %p160, %p161
      %s163 = ssub.s32 %s19, %s26
      %p164 = scmp.eq.s32.totalorder %s163, 0
      %s166 = sadd.s32 %s165, 1
      %s167 = scalar_select %p164, %s165, %s166
      %p170 = pneg %p164
      %p171 = scmp.eq.s32.totalorder %s19, 1
      %p172 = por %p170, %p171
      %p173 = scmp.ne.s32.totalorder %s165, %s168
      %p174 = scmp.eq.s32.totalorder %s19, 0
      %p175 = por %p173, %p174
      %p176 = scmp.ne.s32.totalorder %s165, %s168
      %p177 = scmp.eq.s32.totalorder %s24, 1
      %p178 = por %p176, %p177
      %p179 = scmp.ne.s32.totalorder %s168, %s169
      %p180 = scmp.eq.s32.totalorder %s24, 0
      %p181 = por %p179, %p180
      %p182 = scmp.ne.s32.totalorder %s168, %s169
      %p183 = scmp.eq.s32.totalorder %s25, 1
      %p184 = por %p182, %p183
      %p186 = scmp.ne.s32.totalorder %s169, %s185
      %p187 = scmp.eq.s32.totalorder %s25, 0
      %p188 = por %p186, %p187
      %p189 = scmp.le.s32.totalorder 1, %s19
      %p190 = scmp.lt.s32.totalorder %s19, 3
      %p191 = pnand %p189, %p190
      %p192 = pneg %p191
      // Predicated region
      $region9: #{tpu_custom_call.1} parent=5 // pred_check
        _
      $region10: #{tpu_custom_call.1} parent=5 // pred_check_branch
        %194 = sbr.rel (%p191) target = $region12
      $region11: #{tpu_custom_call.1} parent=5 // pred_region
        %s195 = ssub.s32 %s19, 1
        // Predicated region
        $region13: #{tpu_custom_call.1} parent=11 // pred_check
          %p196 = pneg %p92
        $region14: #{tpu_custom_call.1} parent=11 // pred_check_branch
          %198 = sbr.rel (%p196) target = $region16
        $region15: #{tpu_custom_call.1} parent=11 // pred_region
          %s200 = ssub.s32 512, 512
          %201 = vsyncadd [#allocation6], %s200
          %s202 = sshll.u32 [#allocation5], 4
          %s203 = int_to_ptr.vmem [resolvable:$true] %s202
          %208 = dma.hbm_to_vmem [thread:$0]  %s2, 512, %s203, [#allocation6], 128, 128, 8
        $region16: #{tpu_custom_call.1} parent=11 // pred_fallthru
          _
        // Predicated region
        $region17: #{tpu_custom_call.1} parent=11 // pred_check
          %p209 = pneg %p113
        $region18: #{tpu_custom_call.1} parent=11 // pred_check_branch
          %211 = sbr.rel (%p209) target = $region20
        $region19: #{tpu_custom_call.1} parent=11 // pred_region
          _
        $region20: #{tpu_custom_call.1} parent=11 // pred_fallthru
          _
        // Predicated region
        $region21: #{tpu_custom_call.1} parent=11 // pred_check
          %p212 = pneg %p134
        $region22: #{tpu_custom_call.1} parent=11 // pred_check_branch
          %214 = sbr.rel (%p212) target = $region24
        $region23: #{tpu_custom_call.1} parent=11 // pred_region
          %s216 = ssub.s32 512, 512
          %217 = vsyncadd [#allocation6], %s216
          %s218 = sshll.u32 [#allocation7], 4
          %s219 = int_to_ptr.vmem [resolvable:$true] %s218
          %224 = dma.hbm_to_vmem [thread:$0]  %s4, 512, %s219, [#allocation6], 128, 128, 8
        $region24: #{tpu_custom_call.1} parent=11 // pred_fallthru
          _
        // Predicated region
        $region25: #{tpu_custom_call.1} parent=11 // pred_check
          %p225 = pneg %p155
        $region26: #{tpu_custom_call.1} parent=11 // pred_check_branch
          %227 = sbr.rel (%p225) target = $region28
        $region27: #{tpu_custom_call.1} parent=11 // pred_region
          _
        $region28: #{tpu_custom_call.1} parent=11 // pred_fallthru
          _
      $region12: #{tpu_custom_call.1} parent=5 // pred_fallthru
        _
      %p228 = scmp.lt.s32.totalorder %s19, 2
      // Predicated region
      $region29: #{tpu_custom_call.1} parent=5 // pred_check
        %p229 = pneg %p228
      $region30: #{tpu_custom_call.1} parent=5 // pred_check_branch
        %231 = sbr.rel (%p229) target = $region32
      $region31: #{tpu_custom_call.1} parent=5 // pred_region
        // Predicated region
        $region33: #{tpu_custom_call.1} parent=31 // pred_check
          %p232 = pneg %p39
        $region34: #{tpu_custom_call.1} parent=31 // pred_check_branch
          %234 = sbr.rel (%p232) target = $region36
        $region35: #{tpu_custom_call.1} parent=31 // pred_region
          %s235 = sand.u32 %s29, 1
          %s236 = scalar_lea.sflag [#allocation3], %s235
          %s237 = sand.u32 %s29, 1
          %s238 = smul.addr %s237, 8
          %s239 = scalar_lea.vmem [#allocation2], %s238
          %s241 = ssub.s32 128, 128
          %242 = vsyncadd %s236, %s241
          %s243 = smul.addr %s19, 128
          %s244 = scalar_lea.hbm %s0, %s243
          %s246 = sshll.u32 %s239, 4
          %s247 = int_to_ptr.vmem [resolvable:$true] %s246
          %249 = dma.hbm_to_vmem [thread:$0]  %s244, 128, %s247, %s236
        $region36: #{tpu_custom_call.1} parent=31 // pred_fallthru
          _
        // Predicated region
        $region37: #{tpu_custom_call.1} parent=31 // pred_check
          %p250 = pneg %p65
        $region38: #{tpu_custom_call.1} parent=31 // pred_check_branch
          %252 = sbr.rel (%p250) target = $region40
        $region39: #{tpu_custom_call.1} parent=31 // pred_region
          %p253 = scmp.lt.s32.totalorder %s19, 1
          %s254 = scalar_select %p253, %s19, 1
          %s255 = scalar_lea.vmem %s1, %s254
        $region40: #{tpu_custom_call.1} parent=31 // pred_fallthru
          _
      $region32: #{tpu_custom_call.1} parent=5 // pred_fallthru
        _
      %p256 = scmp.le.s32.totalorder 1, %s19
      %p257 = scmp.lt.s32.totalorder %s19, 3
      %p258 = pnand %p256, %p257
      %p259 = pneg %p258
      // Predicated region
      $region41: #{tpu_custom_call.1} parent=5 // pred_check
        _
      $region42: #{tpu_custom_call.1} parent=5 // pred_check_branch
        %261 = sbr.rel (%p258) target = $region44
      $region43: #{tpu_custom_call.1} parent=5 // pred_region
        %s262 = ssub.s32 %s19, 1
        %s263 = sand.u32 %s32, 1
        %s264 = scalar_lea.sflag [#allocation3], %s263
        %s265 = sand.u32 %s32, 1
        %s266 = smul.addr %s265, 8
        %s267 = scalar_lea.vmem [#allocation2], %s266
        // Predicated region
        $region45: #{tpu_custom_call.1} parent=43 // pred_check
          %p268 = pneg %p45
        $region46: #{tpu_custom_call.1} parent=43 // pred_check_branch
          %270 = sbr.rel (%p268) target = $region48
        $region47: #{tpu_custom_call.1} parent=43 // pred_region
          %271 = dma.done %s264, 128
        $region48: #{tpu_custom_call.1} parent=43 // pred_fallthru
          _
        // Predicated region
        $region49: #{tpu_custom_call.1} parent=43 // pred_check
          %p272 = pneg %p92
        $region50: #{tpu_custom_call.1} parent=43 // pred_check_branch
          %274 = sbr.rel (%p272) target = $region52
        $region51: #{tpu_custom_call.1} parent=43 // pred_region
          %275 = dma.done [#allocation6], 512
        $region52: #{tpu_custom_call.1} parent=43 // pred_fallthru
          _
        // Predicated region
        $region53: #{tpu_custom_call.1} parent=43 // pred_check
          %p276 = pneg %p134
        $region54: #{tpu_custom_call.1} parent=43 // pred_check_branch
          %278 = sbr.rel (%p276) target = $region56
        $region55: #{tpu_custom_call.1} parent=43 // pred_region
          %279 = dma.done [#allocation6], 512
        $region56: #{tpu_custom_call.1} parent=43 // pred_fallthru
          _
        %s280 = sand.u32 %s32, 1
        %s281 = scalar_lea.sflag [#allocation3], %s280
        %s282 = sand.u32 %s32, 1
        %s283 = smul.addr %s282, 8
        %s284 = scalar_lea.vmem [#allocation2], %s283
        %p285 = pneg %p45
        %p286 = pneg %p42
        %p287 = scmp.lt.s32.totalorder %s24, 1
        %s288 = scalar_select %p287, %s24, 1
        %s289 = scalar_lea.vmem %s1, %s288
        %p290 = pneg %p71
        %p291 = pneg %p68
        %p292 = pneg %p92
        %p293 = pneg %p89
        %p294 = pneg %p113
        %p295 = pneg %p110
        %p296 = pneg %p134
        %p297 = pneg %p131
        %p298 = pneg %p155
        %p299 = pneg %p152
        %p300 = pneg %p181
        %p301 = pneg %p178
        %s302 = sand.u32 %s168, 1
        %s303 = scalar_lea.sflag [#allocation4], %s302
        %s304 = sand.u32 %s168, 1
        %s305 = smul.addr %s304, 8
        %s306 = scalar_lea.vmem [#allocation8], %s305
        %p307 = scmp.lt.s32.totalorder %s24, 1
        %s308 = scalar_select %p307, %s24, 1
        %s309 = scalar_lea.vmem %s1, %s308
        %v310 = vld [vmem:[%s267] sm:$0xff]
        %v311 = vld [vmem:[#allocation5] sm:$0xff]
        %v312 = vld [vmem:[#allocation5 + $0x8] sm:$0xff]
        %v313 = vld [vmem:[#allocation5 + $0x10] sm:$0xff]
        %v314 = vld [vmem:[#allocation5 + $0x18] sm:$0xff]
        %v315 = vld [vmem:[%s3] sm:$0x1]
        %v317 = vlaneseq
        %v318 = vshrl.u32 %v317, 7
        %v319 = vsub.s32 0, %v318
        %v320 = vrot.slane %v315, %v319
        %vm322 = vcmask 261120
        %v324 = vsel %vm322, %v310, 0
        %326 = vmatprep.subr.mxu0 0.0
        %327 = vmatpush1.msra.mxu0 %v311
        %328 = vmatprep.subr.mxu0 0.0
        %329 = vmatpush1.msra.mxu0 %v312
        %330 = vmatprep.subr.mxu0 0.0
        %331 = vmatpush1.msra.mxu0 %v313
        %332 = vmatprep.subr.mxu0 0.0
        %333 = vmatpush1.msra.mxu0 %v314
        %334 = vmatprep.subr.mxu0 0.0
        %335 = vmatpush1.msra.mxu0 0.0
        %336 = vmatprep.subr.mxu0 0.0
        %337 = vmatpush1.msra.mxu0 0.0
        %338 = vmatprep.subr.mxu0 0.0
        %339 = vmatpush1.msra.mxu0 0.0
        %340 = vmatprep.subr.mxu0 0.0
        %341 = vmatpush1.msra.mxu0 0.0
        %342 = vmatprep.subr.mxu0 0.0
        %343 = vmatpush1.msra.mxu0 0.0
        %344 = vmatprep.subr.mxu0 0.0
        %345 = vmatpush1.msra.mxu0 0.0
        %346 = vmatprep.subr.mxu0 0.0
        %347 = vmatpush1.msra.mxu0 0.0
        %348 = vmatprep.subr.mxu0 0.0
        %349 = vmatpush1.msra.mxu0 0.0
        %350 = vmatprep.subr.mxu0 0.0
        %351 = vmatpush1.msra.mxu0 0.0
        %352 = vmatprep.subr.mxu0 0.0
        %353 = vmatpush1.msra.mxu0 0.0
        %354 = vmatprep.subr.mxu0 0.0
        %355 = vmatpush1.msra.mxu0 0.0
        %356 = vmatprep.subr.mxu0 0.0
        %357 = vmatpush1.msra.mxu0 0.0
        %358 = vmatprep.subr.mxu0 0.0
        %359 = vmatpush1.msra.mxu0 0.0
        %360 = vmatprep.subr.mxu0 0.0
        %361 = vmatpush1.msra.mxu0 0.0
        %362 = vmatprep.subr.mxu0 0.0
        %363 = vmatpush1.msra.mxu0 0.0
        %364 = vmatprep.subr.mxu0 0.0
        %365 = vmatpush1.msra.mxu0 0.0
        %366 = vmatprep.subr.mxu0 0.0
        %367 = vmatpush1.msra.mxu0 0.0
        %368 = vmatprep.subr.mxu0 0.0
        %369 = vmatpush1.msra.mxu0 0.0
        %370 = vmatprep.subr.mxu0 0.0
        %371 = vmatpush1.msra.mxu0 0.0
        %372 = vmatprep.subr.mxu0 0.0
        %373 = vmatpush1.msra.mxu0 0.0
        %374 = vmatprep.subr.mxu0 0.0
        %375 = vmatpush1.msra.mxu0 0.0
        %376 = vmatprep.subr.mxu0 0.0
        %377 = vmatpush1.msra.mxu0 0.0
        %378 = vmatprep.subr.mxu0 0.0
        %379 = vmatpush1.msra.mxu0 0.0
        %380 = vmatprep.subr.mxu0 0.0
        %381 = vmatpush1.msra.mxu0 0.0
        %382 = vmatprep.subr.mxu0 0.0
        %383 = vmatpush1.msra.mxu0 0.0
        %384 = vmatprep.subr.mxu0 0.0
        %385 = vmatpush1.msra.mxu0 0.0
        %386 = vmatprep.subr.mxu0 0.0
        %387 = vmatpush1.msra.mxu0 0.0
        %388 = vmatprep.subr.mxu0 0.0
        %389 = vmatpush1.msra.mxu0 0.0
        %390 = vmatprep.mubr.f32.mxu0 0.0
        %391 = vmatmul.mubr.f32.gmra.mrb[0].mxu0 %v324
        %v392 = vpop.f32.mrb[0].mxu0
        %v393 = vadd.f32 %v320, %v392
        %v394 = vpop.f32.mrb[0].mxu0
        %395 = vdwg.mxu0
        %397 = vrot.lane.b32.xlu0 %v393, 120
        %v398 = vpop.permute.xlu0 %397
        %400 = vrot.lane.b32.xlu0 %v393, 112
        %v401 = vpop.permute.xlu0 %400
        %403 = vrot.lane.b32.xlu0 %v393, 104
        %v404 = vpop.permute.xlu0 %403
        %v406 = vcombine.low %v393, %v401
        %v407 = vcombine.high %v393, %v401
        %v409 = vunpack.c.l.s4 1983009808
        %v410 = vunpack.c.0.s8 %v409
        %v411 = vlaneseq
        %v412 = vshrl.u32 %v411, 7
        %v413 = vsub.s32 %v410, %v412
        %v414 = vrot.slane %v406, %v413
        %v416 = vunpack.c.l.s4 1983009808
        %v417 = vunpack.c.0.s8 %v416
        %v418 = vlaneseq
        %v419 = vshrl.u32 %v418, 7
        %v420 = vsub.s32 %v417, %v419
        %v421 = vrot.slane %v407, %v420
        %v422 = vcombine.low %v398, %v404
        %v423 = vcombine.high %v398, %v404
        %v425 = vunpack.c.l.s4 1983009808
        %v426 = vunpack.c.0.s8 %v425
        %v427 = vlaneseq
        %v428 = vshrl.u32 %v427, 7
        %v429 = vsub.s32 %v426, %v428
        %v430 = vrot.slane %v422, %v429
        %v432 = vunpack.c.l.s4 1983009808
        %v433 = vunpack.c.0.s8 %v432
        %v434 = vlaneseq
        %v435 = vshrl.u32 %v434, 7
        %v436 = vsub.s32 %v433, %v435
        %v437 = vrot.slane %v423, %v436
        %v438 = vcombine.low %v414, %v430
        %v439 = vcombine.high %v414, %v430
        %v441 = vunpack.c.l.s4 1934713408
        %v442 = vunpack.c.0.s8 %v441
        %v443 = vlaneseq
        %v444 = vshrl.u32 %v443, 7
        %v445 = vsub.s32 %v442, %v444
        %v446 = vrot.slane %v438, %v445
        %v448 = vunpack.c.l.s4 1934713408
        %v449 = vunpack.c.0.s8 %v448
        %v450 = vlaneseq
        %v451 = vshrl.u32 %v450, 7
        %v452 = vsub.s32 %v449, %v451
        %v453 = vrot.slane %v439, %v452
        %v454 = vcombine.low %v421, %v437
        %v455 = vcombine.high %v421, %v437
        %v457 = vunpack.c.l.s4 1934713408
        %v458 = vunpack.c.0.s8 %v457
        %v459 = vlaneseq
        %v460 = vshrl.u32 %v459, 7
        %v461 = vsub.s32 %v458, %v460
        %v462 = vrot.slane %v454, %v461
        %v464 = vunpack.c.l.s4 1934713408
        %v465 = vunpack.c.0.s8 %v464
        %v466 = vlaneseq
        %v467 = vshrl.u32 %v466, 7
        %v468 = vsub.s32 %v465, %v467
        %v469 = vrot.slane %v455, %v468
        %v470 = vcombine.high %v446, 0.0
        %v471 = vcombine.high %v453, 0.0
        %v472 = vcombine.high %v462, 0.0
        %v473 = vcombine.high %v469, 0.0
        %v474 = vcombine.low %v446, %v453
        %v476 = vunpack.c.l.s4 1983009808
        %v477 = vunpack.c.0.s8 %v476
        %v478 = vlaneseq
        %v479 = vshrl.u32 %v478, 7
        %v480 = vsub.s32 %v477, %v479
        %v481 = vrot.slane %v474, %v480
        %v482 = vcombine.low %v470, %v471
        %v484 = vunpack.c.l.s4 1983009808
        %v485 = vunpack.c.0.s8 %v484
        %v486 = vlaneseq
        %v487 = vshrl.u32 %v486, 7
        %v488 = vsub.s32 %v485, %v487
        %v489 = vrot.slane %v482, %v488
        %v490 = vcombine.low %v462, %v469
        %v492 = vunpack.c.l.s4 1983009808
        %v493 = vunpack.c.0.s8 %v492
        %v494 = vlaneseq
        %v495 = vshrl.u32 %v494, 7
        %v496 = vsub.s32 %v493, %v495
        %v497 = vrot.slane %v490, %v496
        %v498 = vcombine.low %v472, %v473
        %v500 = vunpack.c.l.s4 1983009808
        %v501 = vunpack.c.0.s8 %v500
        %v502 = vlaneseq
        %v503 = vshrl.u32 %v502, 7
        %v504 = vsub.s32 %v501, %v503
        %v505 = vrot.slane %v498, %v504
        %v506 = vcombine.low %v481, %v489
        %v507 = vcombine.high %v481, %v489
        %v509 = vunpack.c.l.s4 1934713408
        %v510 = vunpack.c.0.s8 %v509
        %v511 = vlaneseq
        %v512 = vshrl.u32 %v511, 7
        %v513 = vsub.s32 %v510, %v512
        %v514 = vrot.slane %v506, %v513
        %v516 = vunpack.c.l.s4 1934713408
        %v517 = vunpack.c.0.s8 %v516
        %v518 = vlaneseq
        %v519 = vshrl.u32 %v518, 7
        %v520 = vsub.s32 %v517, %v519
        %v521 = vrot.slane %v507, %v520
        %v522 = vcombine.low %v497, %v505
        %v523 = vcombine.high %v497, %v505
        %v525 = vunpack.c.l.s4 1934713408
        %v526 = vunpack.c.0.s8 %v525
        %v527 = vlaneseq
        %v528 = vshrl.u32 %v527, 7
        %v529 = vsub.s32 %v526, %v528
        %v530 = vrot.slane %v522, %v529
        %v532 = vunpack.c.l.s4 1934713408
        %v533 = vunpack.c.0.s8 %v532
        %v534 = vlaneseq
        %v535 = vshrl.u32 %v534, 7
        %v536 = vsub.s32 %v533, %v535
        %v537 = vrot.slane %v523, %v536
        %v538 = vcombine.low %v514, %v530
        %v539 = vcombine.high %v514, %v530
        %v540 = vcombine.low %v521, %v537
        %v541 = vcombine.high %v521, %v537
        %542 = vrot.lane.b32.xlu0 %v393, 96
        %v543 = vpop.permute.xlu0 %542
        %544 = vrot.lane.b32.xlu0 %v398, 96
        %v545 = vpop.permute.xlu0 %544
        %546 = vrot.lane.b32.xlu0 %v401, 96
        %v547 = vpop.permute.xlu0 %546
        %548 = vrot.lane.b32.xlu0 %v404, 96
        %v549 = vpop.permute.xlu0 %548
        %v554 = vcombine.low %v543, %v547
        %v555 = vcombine.high %v543, %v547
        %v557 = vunpack.c.l.s4 1983009808
        %v558 = vunpack.c.0.s8 %v557
        %v559 = vlaneseq
        %v560 = vshrl.u32 %v559, 7
        %v561 = vsub.s32 %v558, %v560
        %v562 = vrot.slane %v554, %v561
        %v564 = vunpack.c.l.s4 1983009808
        %v565 = vunpack.c.0.s8 %v564
        %v566 = vlaneseq
        %v567 = vshrl.u32 %v566, 7
        %v568 = vsub.s32 %v565, %v567
        %v569 = vrot.slane %v555, %v568
        %v570 = vcombine.low %v545, %v549
        %v571 = vcombine.high %v545, %v549
        %v573 = vunpack.c.l.s4 1983009808
        %v574 = vunpack.c.0.s8 %v573
        %v575 = vlaneseq
        %v576 = vshrl.u32 %v575, 7
        %v577 = vsub.s32 %v574, %v576
        %v578 = vrot.slane %v570, %v577
        %v580 = vunpack.c.l.s4 1983009808
        %v581 = vunpack.c.0.s8 %v580
        %v582 = vlaneseq
        %v583 = vshrl.u32 %v582, 7
        %v584 = vsub.s32 %v581, %v583
        %v585 = vrot.slane %v571, %v584
        %v586 = vcombine.low %v562, %v578
        %v587 = vcombine.high %v562, %v578
        %v589 = vunpack.c.l.s4 1934713408
        %v590 = vunpack.c.0.s8 %v589
        %v591 = vlaneseq
        %v592 = vshrl.u32 %v591, 7
        %v593 = vsub.s32 %v590, %v592
        %v594 = vrot.slane %v586, %v593
        %v596 = vunpack.c.l.s4 1934713408
        %v597 = vunpack.c.0.s8 %v596
        %v598 = vlaneseq
        %v599 = vshrl.u32 %v598, 7
        %v600 = vsub.s32 %v597, %v599
        %v601 = vrot.slane %v587, %v600
        %v602 = vcombine.low %v569, %v585
        %v603 = vcombine.high %v569, %v585
        %v605 = vunpack.c.l.s4 1934713408
        %v606 = vunpack.c.0.s8 %v605
        %v607 = vlaneseq
        %v608 = vshrl.u32 %v607, 7
        %v609 = vsub.s32 %v606, %v608
        %v610 = vrot.slane %v602, %v609
        %v612 = vunpack.c.l.s4 1934713408
        %v613 = vunpack.c.0.s8 %v612
        %v614 = vlaneseq
        %v615 = vshrl.u32 %v614, 7
        %v616 = vsub.s32 %v613, %v615
        %v617 = vrot.slane %v603, %v616
        %v618 = vcombine.high %v594, 0.0
        %v619 = vcombine.high %v601, 0.0
        %v620 = vcombine.high %v610, 0.0
        %v621 = vcombine.high %v617, 0.0
        %v622 = vcombine.low %v594, %v601
        %v624 = vunpack.c.l.s4 1983009808
        %v625 = vunpack.c.0.s8 %v624
        %v626 = vlaneseq
        %v627 = vshrl.u32 %v626, 7
        %v628 = vsub.s32 %v625, %v627
        %v629 = vrot.slane %v622, %v628
        %v630 = vcombine.low %v618, %v619
        %v632 = vunpack.c.l.s4 1983009808
        %v633 = vunpack.c.0.s8 %v632
        %v634 = vlaneseq
        %v635 = vshrl.u32 %v634, 7
        %v636 = vsub.s32 %v633, %v635
        %v637 = vrot.slane %v630, %v636
        %v638 = vcombine.low %v610, %v617
        %v640 = vunpack.c.l.s4 1983009808
        %v641 = vunpack.c.0.s8 %v640
        %v642 = vlaneseq
        %v643 = vshrl.u32 %v642, 7
        %v644 = vsub.s32 %v641, %v643
        %v645 = vrot.slane %v638, %v644
        %v646 = vcombine.low %v620, %v621
        %v648 = vunpack.c.l.s4 1983009808
        %v649 = vunpack.c.0.s8 %v648
        %v650 = vlaneseq
        %v651 = vshrl.u32 %v650, 7
        %v652 = vsub.s32 %v649, %v651
        %v653 = vrot.slane %v646, %v652
        %v654 = vcombine.low %v629, %v637
        %v655 = vcombine.high %v629, %v637
        %v657 = vunpack.c.l.s4 1934713408
        %v658 = vunpack.c.0.s8 %v657
        %v659 = vlaneseq
        %v660 = vshrl.u32 %v659, 7
        %v661 = vsub.s32 %v658, %v660
        %v662 = vrot.slane %v654, %v661
        %v664 = vunpack.c.l.s4 1934713408
        %v665 = vunpack.c.0.s8 %v664
        %v666 = vlaneseq
        %v667 = vshrl.u32 %v666, 7
        %v668 = vsub.s32 %v665, %v667
        %v669 = vrot.slane %v655, %v668
        %v670 = vcombine.low %v645, %v653
        %v671 = vcombine.high %v645, %v653
        %v673 = vunpack.c.l.s4 1934713408
        %v674 = vunpack.c.0.s8 %v673
        %v675 = vlaneseq
        %v676 = vshrl.u32 %v675, 7
        %v677 = vsub.s32 %v674, %v676
        %v678 = vrot.slane %v670, %v677
        %v680 = vunpack.c.l.s4 1934713408
        %v681 = vunpack.c.0.s8 %v680
        %v682 = vlaneseq
        %v683 = vshrl.u32 %v682, 7
        %v684 = vsub.s32 %v681, %v683
        %v685 = vrot.slane %v671, %v684
        %v686 = vcombine.low %v662, %v678
        %v687 = vcombine.high %v662, %v678
        %v688 = vcombine.low %v669, %v685
        %v689 = vcombine.high %v669, %v685
        %690 = vrot.lane.b32.xlu0 %v393, 64
        %v691 = vpop.permute.xlu0 %690
        %692 = vrot.lane.b32.xlu0 %v398, 64
        %v693 = vpop.permute.xlu0 %692
        %694 = vrot.lane.b32.xlu0 %v401, 64
        %v695 = vpop.permute.xlu0 %694
        %696 = vrot.lane.b32.xlu0 %v404, 64
        %v697 = vpop.permute.xlu0 %696
        %v702 = vcombine.low %v691, %v695
        %v703 = vcombine.high %v691, %v695
        %v705 = vunpack.c.l.s4 1983009808
        %v706 = vunpack.c.0.s8 %v705
        %v707 = vlaneseq
        %v708 = vshrl.u32 %v707, 7
        %v709 = vsub.s32 %v706, %v708
        %v710 = vrot.slane %v702, %v709
        %v712 = vunpack.c.l.s4 1983009808
        %v713 = vunpack.c.0.s8 %v712
        %v714 = vlaneseq
        %v715 = vshrl.u32 %v714, 7
        %v716 = vsub.s32 %v713, %v715
        %v717 = vrot.slane %v703, %v716
        %v718 = vcombine.low %v693, %v697
        %v719 = vcombine.high %v693, %v697
        %v721 = vunpack.c.l.s4 1983009808
        %v722 = vunpack.c.0.s8 %v721
        %v723 = vlaneseq
        %v724 = vshrl.u32 %v723, 7
        %v725 = vsub.s32 %v722, %v724
        %v726 = vrot.slane %v718, %v725
        %v728 = vunpack.c.l.s4 1983009808
        %v729 = vunpack.c.0.s8 %v728
        %v730 = vlaneseq
        %v731 = vshrl.u32 %v730, 7
        %v732 = vsub.s32 %v729, %v731
        %v733 = vrot.slane %v719, %v732
        %v734 = vcombine.low %v710, %v726
        %v735 = vcombine.high %v710, %v726
        %v737 = vunpack.c.l.s4 1934713408
        %v738 = vunpack.c.0.s8 %v737
        %v739 = vlaneseq
        %v740 = vshrl.u32 %v739, 7
        %v741 = vsub.s32 %v738, %v740
        %v742 = vrot.slane %v734, %v741
        %v744 = vunpack.c.l.s4 1934713408
        %v745 = vunpack.c.0.s8 %v744
        %v746 = vlaneseq
        %v747 = vshrl.u32 %v746, 7
        %v748 = vsub.s32 %v745, %v747
        %v749 = vrot.slane %v735, %v748
        %v750 = vcombine.low %v717, %v733
        %v751 = vcombine.high %v717, %v733
        %v753 = vunpack.c.l.s4 1934713408
        %v754 = vunpack.c.0.s8 %v753
        %v755 = vlaneseq
        %v756 = vshrl.u32 %v755, 7
        %v757 = vsub.s32 %v754, %v756
        %v758 = vrot.slane %v750, %v757
        %v760 = vunpack.c.l.s4 1934713408
        %v761 = vunpack.c.0.s8 %v760
        %v762 = vlaneseq
        %v763 = vshrl.u32 %v762, 7
        %v764 = vsub.s32 %v761, %v763
        %v765 = vrot.slane %v751, %v764
        %v766 = vcombine.high %v742, 0.0
        %v767 = vcombine.high %v749, 0.0
        %v768 = vcombine.high %v758, 0.0
        %v769 = vcombine.high %v765, 0.0
        %v770 = vcombine.low %v742, %v749
        %v772 = vunpack.c.l.s4 1983009808
        %v773 = vunpack.c.0.s8 %v772
        %v774 = vlaneseq
        %v775 = vshrl.u32 %v774, 7
        %v776 = vsub.s32 %v773, %v775
        %v777 = vrot.slane %v770, %v776
        %v778 = vcombine.low %v766, %v767
        %v780 = vunpack.c.l.s4 1983009808
        %v781 = vunpack.c.0.s8 %v780
        %v782 = vlaneseq
        %v783 = vshrl.u32 %v782, 7
        %v784 = vsub.s32 %v781, %v783
        %v785 = vrot.slane %v778, %v784
        %v786 = vcombine.low %v758, %v765
        %v788 = vunpack.c.l.s4 1983009808
        %v789 = vunpack.c.0.s8 %v788
        %v790 = vlaneseq
        %v791 = vshrl.u32 %v790, 7
        %v792 = vsub.s32 %v789, %v791
        %v793 = vrot.slane %v786, %v792
        %v794 = vcombine.low %v768, %v769
        %v796 = vunpack.c.l.s4 1983009808
        %v797 = vunpack.c.0.s8 %v796
        %v798 = vlaneseq
        %v799 = vshrl.u32 %v798, 7
        %v800 = vsub.s32 %v797, %v799
        %v801 = vrot.slane %v794, %v800
        %v802 = vcombine.low %v777, %v785
        %v803 = vcombine.high %v777, %v785
        %v805 = vunpack.c.l.s4 1934713408
        %v806 = vunpack.c.0.s8 %v805
        %v807 = vlaneseq
        %v808 = vshrl.u32 %v807, 7
        %v809 = vsub.s32 %v806, %v808
        %v810 = vrot.slane %v802, %v809
        %v812 = vunpack.c.l.s4 1934713408
        %v813 = vunpack.c.0.s8 %v812
        %v814 = vlaneseq
        %v815 = vshrl.u32 %v814, 7
        %v816 = vsub.s32 %v813, %v815
        %v817 = vrot.slane %v803, %v816
        %v818 = vcombine.low %v793, %v801
        %v819 = vcombine.high %v793, %v801
        %v821 = vunpack.c.l.s4 1934713408
        %v822 = vunpack.c.0.s8 %v821
        %v823 = vlaneseq
        %v824 = vshrl.u32 %v823, 7
        %v825 = vsub.s32 %v822, %v824
        %v826 = vrot.slane %v818, %v825
        %v828 = vunpack.c.l.s4 1934713408
        %v829 = vunpack.c.0.s8 %v828
        %v830 = vlaneseq
        %v831 = vshrl.u32 %v830, 7
        %v832 = vsub.s32 %v829, %v831
        %v833 = vrot.slane %v819, %v832
        %v834 = vcombine.low %v810, %v826
        %v835 = vcombine.high %v810, %v826
        %v836 = vcombine.low %v817, %v833
        %v837 = vcombine.high %v817, %v833
        %v838 = vld [vmem:[%s309] sm:$0x1]
        %v840 = vlaneseq
        %v841 = vshrl.u32 %v840, 7
        %v842 = vsub.s32 0, %v841
        %v843 = vrot.slane %v838, %v842
        %vm845 = vcmask 64512
        %v847 = vsel %vm845, %v538, 0
        %v850 = vsel %vm845, %v686, 0
        %852 = vmatprep.subr.mxu0 0.0
        %853 = vmatpush1.xpose.msra.mxu0 %v850
        %854 = vmatprep.subr.mxu0 0.0
        %855 = vmatpush1.xpose.msra.mxu0 0.0
        %856 = vmatprep.subr.mxu0 0.0
        %857 = vmatpush1.xpose.msra.mxu0 0.0
        %858 = vmatprep.subr.mxu0 0.0
        %859 = vmatpush1.xpose.msra.mxu0 0.0
        %860 = vmatprep.subr.mxu0 0.0
        %861 = vmatpush1.xpose.msra.mxu0 0.0
        %862 = vmatprep.subr.mxu0 0.0
        %863 = vmatpush1.xpose.msra.mxu0 0.0
        %864 = vmatprep.subr.mxu0 0.0
        %865 = vmatpush1.xpose.msra.mxu0 0.0
        %866 = vmatprep.subr.mxu0 0.0
        %867 = vmatpush1.xpose.msra.mxu0 0.0
        %868 = vmatprep.subr.mxu0 0.0
        %869 = vmatpush1.xpose.msra.mxu0 0.0
        %870 = vmatprep.subr.mxu0 0.0
        %871 = vmatpush1.xpose.msra.mxu0 0.0
        %872 = vmatprep.subr.mxu0 0.0
        %873 = vmatpush1.xpose.msra.mxu0 0.0
        %874 = vmatprep.subr.mxu0 0.0
        %875 = vmatpush1.xpose.msra.mxu0 0.0
        %876 = vmatprep.subr.mxu0 0.0
        %877 = vmatpush1.xpose.msra.mxu0 0.0
        %878 = vmatprep.subr.mxu0 0.0
        %879 = vmatpush1.xpose.msra.mxu0 0.0
        %880 = vmatprep.subr.mxu0 0.0
        %881 = vmatpush1.xpose.msra.mxu0 0.0
        %882 = vmatprep.subr.mxu0 0.0
        %883 = vmatpush1.xpose.msra.mxu0 0.0
        %884 = vmatprep.subr.mxu0 0.0
        %885 = vmatpush1.xpose.msra.mxu0 0.0
        %886 = vmatprep.subr.mxu0 0.0
        %887 = vmatpush1.xpose.msra.mxu0 0.0
        %888 = vmatprep.subr.mxu0 0.0
        %889 = vmatpush1.xpose.msra.mxu0 0.0
        %890 = vmatprep.subr.mxu0 0.0
        %891 = vmatpush1.xpose.msra.mxu0 0.0
        %892 = vmatprep.subr.mxu0 0.0
        %893 = vmatpush1.xpose.msra.mxu0 0.0
        %894 = vmatprep.subr.mxu0 0.0
        %895 = vmatpush1.xpose.msra.mxu0 0.0
        %896 = vmatprep.subr.mxu0 0.0
        %897 = vmatpush1.xpose.msra.mxu0 0.0
        %898 = vmatprep.subr.mxu0 0.0
        %899 = vmatpush1.xpose.msra.mxu0 0.0
        %900 = vmatprep.subr.mxu0 0.0
        %901 = vmatpush1.xpose.msra.mxu0 0.0
        %902 = vmatprep.subr.mxu0 0.0
        %903 = vmatpush1.xpose.msra.mxu0 0.0
        %904 = vmatprep.subr.mxu0 0.0
        %905 = vmatpush1.xpose.msra.mxu0 0.0
        %906 = vmatprep.subr.mxu0 0.0
        %907 = vmatpush1.xpose.msra.mxu0 0.0
        %908 = vmatprep.subr.mxu0 0.0
        %909 = vmatpush1.xpose.msra.mxu0 0.0
        %910 = vmatprep.subr.mxu0 0.0
        %911 = vmatpush1.xpose.msra.mxu0 0.0
        %912 = vmatprep.subr.mxu0 0.0
        %913 = vmatpush1.xpose.msra.mxu0 0.0
        %914 = vmatprep.subr.mxu0 0.0
        %915 = vmatpush1.xpose.msra.mxu0 0.0
        %916 = vmatprep.mubr.f32.mxu0 0.0
        %917 = vmatmul.mubr.f32.gmra.mrb[0].mxu0 %v847
        %v918 = vpop.f32.mrb[0].mxu0
        %v919 = vadd.f32 %v843, %v918
        %v920 = vpop.f32.mrb[0].mxu0
        %921 = vdwg.mxu0
        %v923 = vsel %vm845, %v539, 0
        %v926 = vsel %vm845, %v687, 0
        %928 = vmatprep.subr.mxu0 0.0
        %929 = vmatpush1.xpose.msra.mxu0 %v926
        %930 = vmatprep.subr.mxu0 0.0
        %931 = vmatpush1.xpose.msra.mxu0 0.0
        %932 = vmatprep.subr.mxu0 0.0
        %933 = vmatpush1.xpose.msra.mxu0 0.0
        %934 = vmatprep.subr.mxu0 0.0
        %935 = vmatpush1.xpose.msra.mxu0 0.0
        %936 = vmatprep.subr.mxu0 0.0
        %937 = vmatpush1.xpose.msra.mxu0 0.0
        %938 = vmatprep.subr.mxu0 0.0
        %939 = vmatpush1.xpose.msra.mxu0 0.0
        %940 = vmatprep.subr.mxu0 0.0
        %941 = vmatpush1.xpose.msra.mxu0 0.0
        %942 = vmatprep.subr.mxu0 0.0
        %943 = vmatpush1.xpose.msra.mxu0 0.0
        %944 = vmatprep.subr.mxu0 0.0
        %945 = vmatpush1.xpose.msra.mxu0 0.0
        %946 = vmatprep.subr.mxu0 0.0
        %947 = vmatpush1.xpose.msra.mxu0 0.0
        %948 = vmatprep.subr.mxu0 0.0
        %949 = vmatpush1.xpose.msra.mxu0 0.0
        %950 = vmatprep.subr.mxu0 0.0
        %951 = vmatpush1.xpose.msra.mxu0 0.0
        %952 = vmatprep.subr.mxu0 0.0
        %953 = vmatpush1.xpose.msra.mxu0 0.0
        %954 = vmatprep.subr.mxu0 0.0
        %955 = vmatpush1.xpose.msra.mxu0 0.0
        %956 = vmatprep.subr.mxu0 0.0
        %957 = vmatpush1.xpose.msra.mxu0 0.0
        %958 = vmatprep.subr.mxu0 0.0
        %959 = vmatpush1.xpose.msra.mxu0 0.0
        %960 = vmatprep.subr.mxu0 0.0
        %961 = vmatpush1.xpose.msra.mxu0 0.0
        %962 = vmatprep.subr.mxu0 0.0
        %963 = vmatpush1.xpose.msra.mxu0 0.0
        %964 = vmatprep.subr.mxu0 0.0
        %965 = vmatpush1.xpose.msra.mxu0 0.0
        %966 = vmatprep.subr.mxu0 0.0
        %967 = vmatpush1.xpose.msra.mxu0 0.0
        %968 = vmatprep.subr.mxu0 0.0
        %969 = vmatpush1.xpose.msra.mxu0 0.0
        %970 = vmatprep.subr.mxu0 0.0
        %971 = vmatpush1.xpose.msra.mxu0 0.0
        %972 = vmatprep.subr.mxu0 0.0
        %973 = vmatpush1.xpose.msra.mxu0 0.0
        %974 = vmatprep.subr.mxu0 0.0
        %975 = vmatpush1.xpose.msra.mxu0 0.0
        %976 = vmatprep.subr.mxu0 0.0
        %977 = vmatpush1.xpose.msra.mxu0 0.0
        %978 = vmatprep.subr.mxu0 0.0
        %979 = vmatpush1.xpose.msra.mxu0 0.0
        %980 = vmatprep.subr.mxu0 0.0
        %981 = vmatpush1.xpose.msra.mxu0 0.0
        %982 = vmatprep.subr.mxu0 0.0
        %983 = vmatpush1.xpose.msra.mxu0 0.0
        %984 = vmatprep.subr.mxu0 0.0
        %985 = vmatpush1.xpose.msra.mxu0 0.0
        %986 = vmatprep.subr.mxu0 0.0
        %987 = vmatpush1.xpose.msra.mxu0 0.0
        %988 = vmatprep.subr.mxu0 0.0
        %989 = vmatpush1.xpose.msra.mxu0 0.0
        %990 = vmatprep.subr.mxu0 0.0
        %991 = vmatpush1.xpose.msra.mxu0 0.0
        %992 = vmatprep.mubr.f32.mxu0 0.0
        %993 = vmatmul.mubr.f32.gmra.mrb[0].mxu0 %v923
        %v994 = vpop.f32.mrb[0].mxu0
        %v995 = vadd.f32 %v843, %v994
        %v996 = vpop.f32.mrb[0].mxu0
        %997 = vdwg.mxu0
        %v999 = vsel %vm845, %v540, 0
        %v1002 = vsel %vm845, %v688, 0
        %1004 = vmatprep.subr.mxu0 0.0
        %1005 = vmatpush1.xpose.msra.mxu0 %v1002
        %1006 = vmatprep.subr.mxu0 0.0
        %1007 = vmatpush1.xpose.msra.mxu0 0.0
        %1008 = vmatprep.subr.mxu0 0.0
        %1009 = vmatpush1.xpose.msra.mxu0 0.0
        %1010 = vmatprep.subr.mxu0 0.0
        %1011 = vmatpush1.xpose.msra.mxu0 0.0
        %1012 = vmatprep.subr.mxu0 0.0
        %1013 = vmatpush1.xpose.msra.mxu0 0.0
        %1014 = vmatprep.subr.mxu0 0.0
        %1015 = vmatpush1.xpose.msra.mxu0 0.0
        %1016 = vmatprep.subr.mxu0 0.0
        %1017 = vmatpush1.xpose.msra.mxu0 0.0
        %1018 = vmatprep.subr.mxu0 0.0
        %1019 = vmatpush1.xpose.msra.mxu0 0.0
        %1020 = vmatprep.subr.mxu0 0.0
        %1021 = vmatpush1.xpose.msra.mxu0 0.0
        %1022 = vmatprep.subr.mxu0 0.0
        %1023 = vmatpush1.xpose.msra.mxu0 0.0
        %1024 = vmatprep.subr.mxu0 0.0
        %1025 = vmatpush1.xpose.msra.mxu0 0.0
        %1026 = vmatprep.subr.mxu0 0.0
        %1027 = vmatpush1.xpose.msra.mxu0 0.0
        %1028 = vmatprep.subr.mxu0 0.0
        %1029 = vmatpush1.xpose.msra.mxu0 0.0
        %1030 = vmatprep.subr.mxu0 0.0
        %1031 = vmatpush1.xpose.msra.mxu0 0.0
        %1032 = vmatprep.subr.mxu0 0.0
        %1033 = vmatpush1.xpose.msra.mxu0 0.0
        %1034 = vmatprep.subr.mxu0 0.0
        %1035 = vmatpush1.xpose.msra.mxu0 0.0
        %1036 = vmatprep.subr.mxu0 0.0
        %1037 = vmatpush1.xpose.msra.mxu0 0.0
        %1038 = vmatprep.subr.mxu0 0.0
        %1039 = vmatpush1.xpose.msra.mxu0 0.0
        %1040 = vmatprep.subr.mxu0 0.0
        %1041 = vmatpush1.xpose.msra.mxu0 0.0
        %1042 = vmatprep.subr.mxu0 0.0
        %1043 = vmatpush1.xpose.msra.mxu0 0.0
        %1044 = vmatprep.subr.mxu0 0.0
        %1045 = vmatpush1.xpose.msra.mxu0 0.0
        %1046 = vmatprep.subr.mxu0 0.0
        %1047 = vmatpush1.xpose.msra.mxu0 0.0
        %1048 = vmatprep.subr.mxu0 0.0
        %1049 = vmatpush1.xpose.msra.mxu0 0.0
        %1050 = vmatprep.subr.mxu0 0.0
        %1051 = vmatpush1.xpose.msra.mxu0 0.0
        %1052 = vmatprep.subr.mxu0 0.0
        %1053 = vmatpush1.xpose.msra.mxu0 0.0
        %1054 = vmatprep.subr.mxu0 0.0
        %1055 = vmatpush1.xpose.msra.mxu0 0.0
        %1056 = vmatprep.subr.mxu0 0.0
        %1057 = vmatpush1.xpose.msra.mxu0 0.0
        %1058 = vmatprep.subr.mxu0 0.0
        %1059 = vmatpush1.xpose.msra.mxu0 0.0
        %1060 = vmatprep.subr.mxu0 0.0
        %1061 = vmatpush1.xpose.msra.mxu0 0.0
        %1062 = vmatprep.subr.mxu0 0.0
        %1063 = vmatpush1.xpose.msra.mxu0 0.0
        %1064 = vmatprep.subr.mxu0 0.0
        %1065 = vmatpush1.xpose.msra.mxu0 0.0
        %1066 = vmatprep.subr.mxu0 0.0
        %1067 = vmatpush1.xpose.msra.mxu0 0.0
        %1068 = vmatprep.mubr.f32.mxu0 0.0
        %1069 = vmatmul.mubr.f32.gmra.mrb[0].mxu0 %v999
        %v1070 = vpop.f32.mrb[0].mxu0
        %v1071 = vadd.f32 %v843, %v1070
        %v1072 = vpop.f32.mrb[0].mxu0
        %1073 = vdwg.mxu0
        %v1075 = vsel %vm845, %v541, 0
        %v1078 = vsel %vm845, %v689, 0
        %1080 = vmatprep.subr.mxu0 0.0
        %1081 = vmatpush1.xpose.msra.mxu0 %v1078
        %1082 = vmatprep.subr.mxu0 0.0
        %1083 = vmatpush1.xpose.msra.mxu0 0.0
        %1084 = vmatprep.subr.mxu0 0.0
        %1085 = vmatpush1.xpose.msra.mxu0 0.0
        %1086 = vmatprep.subr.mxu0 0.0
        %1087 = vmatpush1.xpose.msra.mxu0 0.0
        %1088 = vmatprep.subr.mxu0 0.0
        %1089 = vmatpush1.xpose.msra.mxu0 0.0
        %1090 = vmatprep.subr.mxu0 0.0
        %1091 = vmatpush1.xpose.msra.mxu0 0.0
        %1092 = vmatprep.subr.mxu0 0.0
        %1093 = vmatpush1.xpose.msra.mxu0 0.0
        %1094 = vmatprep.subr.mxu0 0.0
        %1095 = vmatpush1.xpose.msra.mxu0 0.0
        %1096 = vmatprep.subr.mxu0 0.0
        %1097 = vmatpush1.xpose.msra.mxu0 0.0
        %1098 = vmatprep.subr.mxu0 0.0
        %1099 = vmatpush1.xpose.msra.mxu0 0.0
        %1100 = vmatprep.subr.mxu0 0.0
        %1101 = vmatpush1.xpose.msra.mxu0 0.0
        %1102 = vmatprep.subr.mxu0 0.0
        %1103 = vmatpush1.xpose.msra.mxu0 0.0
        %1104 = vmatprep.subr.mxu0 0.0
        %1105 = vmatpush1.xpose.msra.mxu0 0.0
        %1106 = vmatprep.subr.mxu0 0.0
        %1107 = vmatpush1.xpose.msra.mxu0 0.0
        %1108 = vmatprep.subr.mxu0 0.0
        %1109 = vmatpush1.xpose.msra.mxu0 0.0
        %1110 = vmatprep.subr.mxu0 0.0
        %1111 = vmatpush1.xpose.msra.mxu0 0.0
        %1112 = vmatprep.subr.mxu0 0.0
        %1113 = vmatpush1.xpose.msra.mxu0 0.0
        %1114 = vmatprep.subr.mxu0 0.0
        %1115 = vmatpush1.xpose.msra.mxu0 0.0
        %1116 = vmatprep.subr.mxu0 0.0
        %1117 = vmatpush1.xpose.msra.mxu0 0.0
        %1118 = vmatprep.subr.mxu0 0.0
        %1119 = vmatpush1.xpose.msra.mxu0 0.0
        %1120 = vmatprep.subr.mxu0 0.0
        %1121 = vmatpush1.xpose.msra.mxu0 0.0
        %1122 = vmatprep.subr.mxu0 0.0
        %1123 = vmatpush1.xpose.msra.mxu0 0.0
        %1124 = vmatprep.subr.mxu0 0.0
        %1125 = vmatpush1.xpose.msra.mxu0 0.0
        %1126 = vmatprep.subr.mxu0 0.0
        %1127 = vmatpush1.xpose.msra.mxu0 0.0
        %1128 = vmatprep.subr.mxu0 0.0
        %1129 = vmatpush1.xpose.msra.mxu0 0.0
        %1130 = vmatprep.subr.mxu0 0.0
        %1131 = vmatpush1.xpose.msra.mxu0 0.0
        %1132 = vmatprep.subr.mxu0 0.0
        %1133 = vmatpush1.xpose.msra.mxu0 0.0
        %1134 = vmatprep.subr.mxu0 0.0
        %1135 = vmatpush1.xpose.msra.mxu0 0.0
        %1136 = vmatprep.subr.mxu0 0.0
        %1137 = vmatpush1.xpose.msra.mxu0 0.0
        %1138 = vmatprep.subr.mxu0 0.0
        %1139 = vmatpush1.xpose.msra.mxu0 0.0
        %1140 = vmatprep.subr.mxu0 0.0
        %1141 = vmatpush1.xpose.msra.mxu0 0.0
        %1142 = vmatprep.subr.mxu0 0.0
        %1143 = vmatpush1.xpose.msra.mxu0 0.0
        %1144 = vmatprep.mubr.f32.mxu0 0.0
        %1145 = vmatmul.mubr.f32.gmra.mrb[0].mxu0 %v1075
        %v1146 = vpop.f32.mrb[0].mxu0
        %v1147 = vadd.f32 %v843, %v1146
        %v1148 = vpop.f32.mrb[0].mxu0
        %1149 = vdwg.mxu0
        %v1150 = vsel %vm845, %v919, -inf
        %1151 = vmax.xlane.f32.xlu0 %v1150
        %v1152 = vpop.xlane.xlu0 %1151
        %v1153 = vsel %vm845, %v995, -inf
        %1154 = vmax.xlane.f32.xlu0 %v1153
        %v1155 = vpop.xlane.xlu0 %1154
        %v1156 = vsel %vm845, %v1071, -inf
        %1157 = vmax.xlane.f32.xlu0 %v1156
        %v1158 = vpop.xlane.xlu0 %1157
        %v1159 = vsel %vm845, %v1147, -inf
        %1160 = vmax.xlane.f32.xlu0 %v1159
        %v1161 = vpop.xlane.xlu0 %1160
        %v1162 = vsub.f32 %v919, %v1152
        %v1163 = vsub.f32 %v995, %v1155
        %v1164 = vsub.f32 %v1071, %v1158
        %v1165 = vsub.f32 %v1147, %v1161
        %v1166 = vmul.f32 %v1162, 1.442695
        %v1167 = vpow.pop %v1166
        %v1168 = vmul.f32 %v1163, 1.442695
        %v1169 = vpow.pop %v1168
        %v1170 = vmul.f32 %v1164, 1.442695
        %v1171 = vpow.pop %v1170
        %v1172 = vmul.f32 %v1165, 1.442695
        %v1173 = vpow.pop %v1172
        %v1174 = vsel %vm845, %v1167, 0.0
        %1175 = vadd.xlane.f32.xlu0 %v1174
        %v1176 = vpop.xlane.xlu0 %1175
        %v1177 = vsel %vm845, %v1169, 0.0
        %1178 = vadd.xlane.f32.xlu0 %v1177
        %v1179 = vpop.xlane.xlu0 %1178
        %v1180 = vsel %vm845, %v1171, 0.0
        %1181 = vadd.xlane.f32.xlu0 %v1180
        %v1182 = vpop.xlane.xlu0 %1181
        %v1183 = vsel %vm845, %v1173, 0.0
        %1184 = vadd.xlane.f32.xlu0 %v1183
        %v1185 = vpop.xlane.xlu0 %1184
        %v1187 = vsel %vm845, %v1167, 0
        %1189 = vmatprep.subr.mxu0 0.0
        %1190 = vmatpush1.msra.mxu0 %v834
        %1191 = vmatprep.subr.mxu0 0.0
        %1192 = vmatpush1.msra.mxu0 0.0
        %1193 = vmatprep.subr.mxu0 0.0
        %1194 = vmatpush1.msra.mxu0 0.0
        %1195 = vmatprep.subr.mxu0 0.0
        %1196 = vmatpush1.msra.mxu0 0.0
        %1197 = vmatprep.subr.mxu0 0.0
        %1198 = vmatpush1.msra.mxu0 0.0
        %1199 = vmatprep.subr.mxu0 0.0
        %1200 = vmatpush1.msra.mxu0 0.0
        %1201 = vmatprep.subr.mxu0 0.0
        %1202 = vmatpush1.msra.mxu0 0.0
        %1203 = vmatprep.subr.mxu0 0.0
        %1204 = vmatpush1.msra.mxu0 0.0
        %1205 = vmatprep.subr.mxu0 0.0
        %1206 = vmatpush1.msra.mxu0 0.0
        %1207 = vmatprep.subr.mxu0 0.0
        %1208 = vmatpush1.msra.mxu0 0.0
        %1209 = vmatprep.subr.mxu0 0.0
        %1210 = vmatpush1.msra.mxu0 0.0
        %1211 = vmatprep.subr.mxu0 0.0
        %1212 = vmatpush1.msra.mxu0 0.0
        %1213 = vmatprep.subr.mxu0 0.0
        %1214 = vmatpush1.msra.mxu0 0.0
        %1215 = vmatprep.subr.mxu0 0.0
        %1216 = vmatpush1.msra.mxu0 0.0
        %1217 = vmatprep.subr.mxu0 0.0
        %1218 = vmatpush1.msra.mxu0 0.0
        %1219 = vmatprep.subr.mxu0 0.0
        %1220 = vmatpush1.msra.mxu0 0.0
        %1221 = vmatprep.subr.mxu0 0.0
        %1222 = vmatpush1.msra.mxu0 0.0
        %1223 = vmatprep.subr.mxu0 0.0
        %1224 = vmatpush1.msra.mxu0 0.0
        %1225 = vmatprep.subr.mxu0 0.0
        %1226 = vmatpush1.msra.mxu0 0.0
        %1227 = vmatprep.subr.mxu0 0.0
        %1228 = vmatpush1.msra.mxu0 0.0
        %1229 = vmatprep.subr.mxu0 0.0
        %1230 = vmatpush1.msra.mxu0 0.0
        %1231 = vmatprep.subr.mxu0 0.0
        %1232 = vmatpush1.msra.mxu0 0.0
        %1233 = vmatprep.subr.mxu0 0.0
        %1234 = vmatpush1.msra.mxu0 0.0
        %1235 = vmatprep.subr.mxu0 0.0
        %1236 = vmatpush1.msra.mxu0 0.0
        %1237 = vmatprep.subr.mxu0 0.0
        %1238 = vmatpush1.msra.mxu0 0.0
        %1239 = vmatprep.subr.mxu0 0.0
        %1240 = vmatpush1.msra.mxu0 0.0
        %1241 = vmatprep.subr.mxu0 0.0
        %1242 = vmatpush1.msra.mxu0 0.0
        %1243 = vmatprep.subr.mxu0 0.0
        %1244 = vmatpush1.msra.mxu0 0.0
        %1245 = vmatprep.subr.mxu0 0.0
        %1246 = vmatpush1.msra.mxu0 0.0
        %1247 = vmatprep.subr.mxu0 0.0
        %1248 = vmatpush1.msra.mxu0 0.0
        %1249 = vmatprep.subr.mxu0 0.0
        %1250 = vmatpush1.msra.mxu0 0.0
        %1251 = vmatprep.subr.mxu0 0.0
        %1252 = vmatpush1.msra.mxu0 0.0
        %1253 = vmatprep.mubr.f32.mxu0 0.0
        %1254 = vmatmul.mubr.f32.gmra.mrb[0].mxu0 %v1187
        %v1255 = vpop.f32.mrb[0].mxu0
        %v1256 = vadd.f32 0.0, %v1255
        %v1257 = vpop.f32.mrb[0].mxu0
        %1258 = vdwg.mxu0
        %v1260 = vsel %vm845, %v1169, 0
        %1262 = vmatprep.subr.mxu0 0.0
        %1263 = vmatpush1.msra.mxu0 %v835
        %1264 = vmatprep.subr.mxu0 0.0
        %1265 = vmatpush1.msra.mxu0 0.0
        %1266 = vmatprep.subr.mxu0 0.0
        %1267 = vmatpush1.msra.mxu0 0.0
        %1268 = vmatprep.subr.mxu0 0.0
        %1269 = vmatpush1.msra.mxu0 0.0
        %1270 = vmatprep.subr.mxu0 0.0
        %1271 = vmatpush1.msra.mxu0 0.0
        %1272 = vmatprep.subr.mxu0 0.0
        %1273 = vmatpush1.msra.mxu0 0.0
        %1274 = vmatprep.subr.mxu0 0.0
        %1275 = vmatpush1.msra.mxu0 0.0
        %1276 = vmatprep.subr.mxu0 0.0
        %1277 = vmatpush1.msra.mxu0 0.0
        %1278 = vmatprep.subr.mxu0 0.0
        %1279 = vmatpush1.msra.mxu0 0.0
        %1280 = vmatprep.subr.mxu0 0.0
        %1281 = vmatpush1.msra.mxu0 0.0
        %1282 = vmatprep.subr.mxu0 0.0
        %1283 = vmatpush1.msra.mxu0 0.0
        %1284 = vmatprep.subr.mxu0 0.0
        %1285 = vmatpush1.msra.mxu0 0.0
        %1286 = vmatprep.subr.mxu0 0.0
        %1287 = vmatpush1.msra.mxu0 0.0
        %1288 = vmatprep.subr.mxu0 0.0
        %1289 = vmatpush1.msra.mxu0 0.0
        %1290 = vmatprep.subr.mxu0 0.0
        %1291 = vmatpush1.msra.mxu0 0.0
        %1292 = vmatprep.subr.mxu0 0.0
        %1293 = vmatpush1.msra.mxu0 0.0
        %1294 = vmatprep.subr.mxu0 0.0
        %1295 = vmatpush1.msra.mxu0 0.0
        %1296 = vmatprep.subr.mxu0 0.0
        %1297 = vmatpush1.msra.mxu0 0.0
        %1298 = vmatprep.subr.mxu0 0.0
        %1299 = vmatpush1.msra.mxu0 0.0
        %1300 = vmatprep.subr.mxu0 0.0
        %1301 = vmatpush1.msra.mxu0 0.0
        %1302 = vmatprep.subr.mxu0 0.0
        %1303 = vmatpush1.msra.mxu0 0.0
        %1304 = vmatprep.subr.mxu0 0.0
        %1305 = vmatpush1.msra.mxu0 0.0
        %1306 = vmatprep.subr.mxu0 0.0
        %1307 = vmatpush1.msra.mxu0 0.0
        %1308 = vmatprep.subr.mxu0 0.0
        %1309 = vmatpush1.msra.mxu0 0.0
        %1310 = vmatprep.subr.mxu0 0.0
        %1311 = vmatpush1.msra.mxu0 0.0
        %1312 = vmatprep.subr.mxu0 0.0
        %1313 = vmatpush1.msra.mxu0 0.0
        %1314 = vmatprep.subr.mxu0 0.0
        %1315 = vmatpush1.msra.mxu0 0.0
        %1316 = vmatprep.subr.mxu0 0.0
        %1317 = vmatpush1.msra.mxu0 0.0
        %1318 = vmatprep.subr.mxu0 0.0
        %1319 = vmatpush1.msra.mxu0 0.0
        %1320 = vmatprep.subr.mxu0 0.0
        %1321 = vmatpush1.msra.mxu0 0.0
        %1322 = vmatprep.subr.mxu0 0.0
        %1323 = vmatpush1.msra.mxu0 0.0
        %1324 = vmatprep.subr.mxu0 0.0
        %1325 = vmatpush1.msra.mxu0 0.0
        %1326 = vmatprep.mubr.f32.mxu0 0.0
        %1327 = vmatmul.mubr.f32.gmra.mrb[0].mxu0 %v1260
        %v1328 = vpop.f32.mrb[0].mxu0
        %v1329 = vadd.f32 0.0, %v1328
        %v1330 = vpop.f32.mrb[0].mxu0
        %1331 = vdwg.mxu0
        %v1333 = vsel %vm845, %v1171, 0
        %1335 = vmatprep.subr.mxu0 0.0
        %1336 = vmatpush1.msra.mxu0 %v836
        %1337 = vmatprep.subr.mxu0 0.0
        %1338 = vmatpush1.msra.mxu0 0.0
        %1339 = vmatprep.subr.mxu0 0.0
        %1340 = vmatpush1.msra.mxu0 0.0
        %1341 = vmatprep.subr.mxu0 0.0
        %1342 = vmatpush1.msra.mxu0 0.0
        %1343 = vmatprep.subr.mxu0 0.0
        %1344 = vmatpush1.msra.mxu0 0.0
        %1345 = vmatprep.subr.mxu0 0.0
        %1346 = vmatpush1.msra.mxu0 0.0
        %1347 = vmatprep.subr.mxu0 0.0
        %1348 = vmatpush1.msra.mxu0 0.0
        %1349 = vmatprep.subr.mxu0 0.0
        %1350 = vmatpush1.msra.mxu0 0.0
        %1351 = vmatprep.subr.mxu0 0.0
        %1352 = vmatpush1.msra.mxu0 0.0
        %1353 = vmatprep.subr.mxu0 0.0
        %1354 = vmatpush1.msra.mxu0 0.0
        %1355 = vmatprep.subr.mxu0 0.0
        %1356 = vmatpush1.msra.mxu0 0.0
        %1357 = vmatprep.subr.mxu0 0.0
        %1358 = vmatpush1.msra.mxu0 0.0
        %1359 = vmatprep.subr.mxu0 0.0
        %1360 = vmatpush1.msra.mxu0 0.0
        %1361 = vmatprep.subr.mxu0 0.0
        %1362 = vmatpush1.msra.mxu0 0.0
        %1363 = vmatprep.subr.mxu0 0.0
        %1364 = vmatpush1.msra.mxu0 0.0
        %1365 = vmatprep.subr.mxu0 0.0
        %1366 = vmatpush1.msra.mxu0 0.0
        %1367 = vmatprep.subr.mxu0 0.0
        %1368 = vmatpush1.msra.mxu0 0.0
        %1369 = vmatprep.subr.mxu0 0.0
        %1370 = vmatpush1.msra.mxu0 0.0
        %1371 = vmatprep.subr.mxu0 0.0
        %1372 = vmatpush1.msra.mxu0 0.0
        %1373 = vmatprep.subr.mxu0 0.0
        %1374 = vmatpush1.msra.mxu0 0.0
        %1375 = vmatprep.subr.mxu0 0.0
        %1376 = vmatpush1.msra.mxu0 0.0
        %1377 = vmatprep.subr.mxu0 0.0
        %1378 = vmatpush1.msra.mxu0 0.0
        %1379 = vmatprep.subr.mxu0 0.0
        %1380 = vmatpush1.msra.mxu0 0.0
        %1381 = vmatprep.subr.mxu0 0.0
        %1382 = vmatpush1.msra.mxu0 0.0
        %1383 = vmatprep.subr.mxu0 0.0
        %1384 = vmatpush1.msra.mxu0 0.0
        %1385 = vmatprep.subr.mxu0 0.0
        %1386 = vmatpush1.msra.mxu0 0.0
        %1387 = vmatprep.subr.mxu0 0.0
        %1388 = vmatpush1.msra.mxu0 0.0
        %1389 = vmatprep.subr.mxu0 0.0
        %1390 = vmatpush1.msra.mxu0 0.0
        %1391 = vmatprep.subr.mxu0 0.0
        %1392 = vmatpush1.msra.mxu0 0.0
        %1393 = vmatprep.subr.mxu0 0.0
        %1394 = vmatpush1.msra.mxu0 0.0
        %1395 = vmatprep.subr.mxu0 0.0
        %1396 = vmatpush1.msra.mxu0 0.0
        %1397 = vmatprep.subr.mxu0 0.0
        %1398 = vmatpush1.msra.mxu0 0.0
        %1399 = vmatprep.mubr.f32.mxu0 0.0
        %1400 = vmatmul.mubr.f32.gmra.mrb[0].mxu0 %v1333
        %v1401 = vpop.f32.mrb[0].mxu0
        %v1402 = vadd.f32 0.0, %v1401
        %v1403 = vpop.f32.mrb[0].mxu0
        %1404 = vdwg.mxu0
        %v1406 = vsel %vm845, %v1173, 0
        %1408 = vmatprep.subr.mxu0 0.0
        %1409 = vmatpush1.msra.mxu0 %v837
        %1410 = vmatprep.subr.mxu0 0.0
        %1411 = vmatpush1.msra.mxu0 0.0
        %1412 = vmatprep.subr.mxu0 0.0
        %1413 = vmatpush1.msra.mxu0 0.0
        %1414 = vmatprep.subr.mxu0 0.0
        %1415 = vmatpush1.msra.mxu0 0.0
        %1416 = vmatprep.subr.mxu0 0.0
        %1417 = vmatpush1.msra.mxu0 0.0
        %1418 = vmatprep.subr.mxu0 0.0
        %1419 = vmatpush1.msra.mxu0 0.0
        %1420 = vmatprep.subr.mxu0 0.0
        %1421 = vmatpush1.msra.mxu0 0.0
        %1422 = vmatprep.subr.mxu0 0.0
        %1423 = vmatpush1.msra.mxu0 0.0
        %1424 = vmatprep.subr.mxu0 0.0
        %1425 = vmatpush1.msra.mxu0 0.0
        %1426 = vmatprep.subr.mxu0 0.0
        %1427 = vmatpush1.msra.mxu0 0.0
        %1428 = vmatprep.subr.mxu0 0.0
        %1429 = vmatpush1.msra.mxu0 0.0
        %1430 = vmatprep.subr.mxu0 0.0
        %1431 = vmatpush1.msra.mxu0 0.0
        %1432 = vmatprep.subr.mxu0 0.0
        %1433 = vmatpush1.msra.mxu0 0.0
        %1434 = vmatprep.subr.mxu0 0.0
        %1435 = vmatpush1.msra.mxu0 0.0
        %1436 = vmatprep.subr.mxu0 0.0
        %1437 = vmatpush1.msra.mxu0 0.0
        %1438 = vmatprep.subr.mxu0 0.0
        %1439 = vmatpush1.msra.mxu0 0.0
        %1440 = vmatprep.subr.mxu0 0.0
        %1441 = vmatpush1.msra.mxu0 0.0
        %1442 = vmatprep.subr.mxu0 0.0
        %1443 = vmatpush1.msra.mxu0 0.0
        %1444 = vmatprep.subr.mxu0 0.0
        %1445 = vmatpush1.msra.mxu0 0.0
        %1446 = vmatprep.subr.mxu0 0.0
        %1447 = vmatpush1.msra.mxu0 0.0
        %1448 = vmatprep.subr.mxu0 0.0
        %1449 = vmatpush1.msra.mxu0 0.0
        %1450 = vmatprep.subr.mxu0 0.0
        %1451 = vmatpush1.msra.mxu0 0.0
        %1452 = vmatprep.subr.mxu0 0.0
        %1453 = vmatpush1.msra.mxu0 0.0
        %1454 = vmatprep.subr.mxu0 0.0
        %1455 = vmatpush1.msra.mxu0 0.0
        %1456 = vmatprep.subr.mxu0 0.0
        %1457 = vmatpush1.msra.mxu0 0.0
        %1458 = vmatprep.subr.mxu0 0.0
        %1459 = vmatpush1.msra.mxu0 0.0
        %1460 = vmatprep.subr.mxu0 0.0
        %1461 = vmatpush1.msra.mxu0 0.0
        %1462 = vmatprep.subr.mxu0 0.0
        %1463 = vmatpush1.msra.mxu0 0.0
        %1464 = vmatprep.subr.mxu0 0.0
        %1465 = vmatpush1.msra.mxu0 0.0
        %1466 = vmatprep.subr.mxu0 0.0
        %1467 = vmatpush1.msra.mxu0 0.0
        %1468 = vmatprep.subr.mxu0 0.0
        %1469 = vmatpush1.msra.mxu0 0.0
        %1470 = vmatprep.subr.mxu0 0.0
        %1471 = vmatpush1.msra.mxu0 0.0
        %1472 = vmatprep.mubr.f32.mxu0 0.0
        %1473 = vmatmul.mubr.f32.gmra.mrb[0].mxu0 %v1406
        %v1474 = vpop.f32.mrb[0].mxu0
        %v1475 = vadd.f32 0.0, %v1474
        %v1476 = vpop.f32.mrb[0].mxu0
        %1477 = vdwg.mxu0
        %v1478 = vrcp.pop %v1176
        %v1479 = vrcp.pop %v1179
        %v1480 = vrcp.pop %v1182
        %v1481 = vrcp.pop %v1185
        %v1482 = vmul.f32 %v1256, %v1478
        %v1483 = vmul.f32 %v1329, %v1479
        %v1484 = vmul.f32 %v1402, %v1480
        %v1485 = vmul.f32 %v1475, %v1481
        %v1486 = vcombine.low %v1482, %v1484
        %v1487 = vcombine.high %v1482, %v1484
        %v1489 = vunpack.c.l.s4 1983009808
        %v1490 = vunpack.c.0.s8 %v1489
        %v1491 = vlaneseq
        %v1492 = vshrl.u32 %v1491, 7
        %v1493 = vsub.s32 %v1490, %v1492
        %v1494 = vrot.slane %v1486, %v1493
        %v1496 = vunpack.c.l.s4 1983009808
        %v1497 = vunpack.c.0.s8 %v1496
        %v1498 = vlaneseq
        %v1499 = vshrl.u32 %v1498, 7
        %v1500 = vsub.s32 %v1497, %v1499
        %v1501 = vrot.slane %v1487, %v1500
        %v1502 = vcombine.low %v1483, %v1485
        %v1503 = vcombine.high %v1483, %v1485
        %v1505 = vunpack.c.l.s4 1983009808
        %v1506 = vunpack.c.0.s8 %v1505
        %v1507 = vlaneseq
        %v1508 = vshrl.u32 %v1507, 7
        %v1509 = vsub.s32 %v1506, %v1508
        %v1510 = vrot.slane %v1502, %v1509
        %v1512 = vunpack.c.l.s4 1983009808
        %v1513 = vunpack.c.0.s8 %v1512
        %v1514 = vlaneseq
        %v1515 = vshrl.u32 %v1514, 7
        %v1516 = vsub.s32 %v1513, %v1515
        %v1517 = vrot.slane %v1503, %v1516
        %v1518 = vcombine.low %v1494, %v1510
        %v1519 = vcombine.high %v1494, %v1510
        %v1521 = vunpack.c.l.s4 1934713408
        %v1522 = vunpack.c.0.s8 %v1521
        %v1523 = vlaneseq
        %v1524 = vshrl.u32 %v1523, 7
        %v1525 = vsub.s32 %v1522, %v1524
        %v1526 = vrot.slane %v1518, %v1525
        %v1528 = vunpack.c.l.s4 1934713408
        %v1529 = vunpack.c.0.s8 %v1528
        %v1530 = vlaneseq
        %v1531 = vshrl.u32 %v1530, 7
        %v1532 = vsub.s32 %v1529, %v1531
        %v1533 = vrot.slane %v1519, %v1532
        %v1534 = vcombine.low %v1501, %v1517
        %v1535 = vcombine.high %v1501, %v1517
        %v1537 = vunpack.c.l.s4 1934713408
        %v1538 = vunpack.c.0.s8 %v1537
        %v1539 = vlaneseq
        %v1540 = vshrl.u32 %v1539, 7
        %v1541 = vsub.s32 %v1538, %v1540
        %v1542 = vrot.slane %v1534, %v1541
        %v1544 = vunpack.c.l.s4 1934713408
        %v1545 = vunpack.c.0.s8 %v1544
        %v1546 = vlaneseq
        %v1547 = vshrl.u32 %v1546, 7
        %v1548 = vsub.s32 %v1545, %v1547
        %v1549 = vrot.slane %v1535, %v1548
        %v1550 = vcombine.high %v1526, 0.0
        %v1551 = vcombine.high %v1533, 0.0
        %v1552 = vcombine.high %v1542, 0.0
        %v1553 = vcombine.high %v1549, 0.0
        %v1554 = vcombine.low %v1526, %v1533
        %v1556 = vunpack.c.l.s4 1983009808
        %v1557 = vunpack.c.0.s8 %v1556
        %v1558 = vlaneseq
        %v1559 = vshrl.u32 %v1558, 7
        %v1560 = vsub.s32 %v1557, %v1559
        %v1561 = vrot.slane %v1554, %v1560
        %v1562 = vcombine.low %v1550, %v1551
        %v1564 = vunpack.c.l.s4 1983009808
        %v1565 = vunpack.c.0.s8 %v1564
        %v1566 = vlaneseq
        %v1567 = vshrl.u32 %v1566, 7
        %v1568 = vsub.s32 %v1565, %v1567
        %v1569 = vrot.slane %v1562, %v1568
        %v1570 = vcombine.low %v1542, %v1549
        %v1572 = vunpack.c.l.s4 1983009808
        %v1573 = vunpack.c.0.s8 %v1572
        %v1574 = vlaneseq
        %v1575 = vshrl.u32 %v1574, 7
        %v1576 = vsub.s32 %v1573, %v1575
        %v1577 = vrot.slane %v1570, %v1576
        %v1578 = vcombine.low %v1552, %v1553
        %v1580 = vunpack.c.l.s4 1983009808
        %v1581 = vunpack.c.0.s8 %v1580
        %v1582 = vlaneseq
        %v1583 = vshrl.u32 %v1582, 7
        %v1584 = vsub.s32 %v1581, %v1583
        %v1585 = vrot.slane %v1578, %v1584
        %v1586 = vcombine.low %v1561, %v1569
        %v1587 = vcombine.high %v1561, %v1569
        %v1589 = vunpack.c.l.s4 1934713408
        %v1590 = vunpack.c.0.s8 %v1589
        %v1591 = vlaneseq
        %v1592 = vshrl.u32 %v1591, 7
        %v1593 = vsub.s32 %v1590, %v1592
        %v1594 = vrot.slane %v1586, %v1593
        %v1596 = vunpack.c.l.s4 1934713408
        %v1597 = vunpack.c.0.s8 %v1596
        %v1598 = vlaneseq
        %v1599 = vshrl.u32 %v1598, 7
        %v1600 = vsub.s32 %v1597, %v1599
        %v1601 = vrot.slane %v1587, %v1600
        %v1602 = vcombine.low %v1577, %v1585
        %v1603 = vcombine.high %v1577, %v1585
        %v1605 = vunpack.c.l.s4 1934713408
        %v1606 = vunpack.c.0.s8 %v1605
        %v1607 = vlaneseq
        %v1608 = vshrl.u32 %v1607, 7
        %v1609 = vsub.s32 %v1606, %v1608
        %v1610 = vrot.slane %v1602, %v1609
        %v1612 = vunpack.c.l.s4 1934713408
        %v1613 = vunpack.c.0.s8 %v1612
        %v1614 = vlaneseq
        %v1615 = vshrl.u32 %v1614, 7
        %v1616 = vsub.s32 %v1613, %v1615
        %v1617 = vrot.slane %v1603, %v1616
        %v1618 = vcombine.low %v1594, %v1610
        %v1619 = vcombine.high %v1594, %v1610
        %v1620 = vcombine.low %v1601, %v1617
        %v1621 = vcombine.high %v1601, %v1617
        %1623 = vrot.lane.b32.xlu0 %v1619, 8
        %v1624 = vpop.permute.xlu0 %1623
        %1627 = vrot.lane.b32.xlu0 %v1620, 16
        %v1628 = vpop.permute.xlu0 %1627
        %1631 = vrot.lane.b32.xlu0 %v1621, 24
        %v1632 = vpop.permute.xlu0 %1631
        %v1634 = vsel %vm845, %v1618, %v1624
        %vm1635 = vcmask 130048
        %v1636 = vsel %vm1635, %v1634, %v1628
        %vm1637 = vcmask 195584
        %v1638 = vsel %vm1637, %v1636, %v1632
        %v1639 = vld [vmem:[#allocation7] sm:$0xff]
        %v1640 = vld [vmem:[#allocation7 + $0x8] sm:$0xff]
        %v1641 = vld [vmem:[#allocation7 + $0x10] sm:$0xff]
        %v1642 = vld [vmem:[#allocation7 + $0x18] sm:$0xff]
        %v1643 = vld [vmem:[%s5] sm:$0x1]
        %v1645 = vlaneseq
        %v1646 = vshrl.u32 %v1645, 7
        %v1647 = vsub.s32 0, %v1646
        %v1648 = vrot.slane %v1643, %v1647
        %v1651 = vsel %vm322, %v1638, 0
        %1653 = vmatprep.subr.mxu0 0.0
        %1654 = vmatpush1.msra.mxu0 %v1639
        %1655 = vmatprep.subr.mxu0 0.0
        %1656 = vmatpush1.msra.mxu0 %v1640
        %1657 = vmatprep.subr.mxu0 0.0
        %1658 = vmatpush1.msra.mxu0 %v1641
        %1659 = vmatprep.subr.mxu0 0.0
        %1660 = vmatpush1.msra.mxu0 %v1642
        %1661 = vmatprep.subr.mxu0 0.0
        %1662 = vmatpush1.msra.mxu0 0.0
        %1663 = vmatprep.subr.mxu0 0.0
        %1664 = vmatpush1.msra.mxu0 0.0
        %1665 = vmatprep.subr.mxu0 0.0
        %1666 = vmatpush1.msra.mxu0 0.0
        %1667 = vmatprep.subr.mxu0 0.0
        %1668 = vmatpush1.msra.mxu0 0.0
        %1669 = vmatprep.subr.mxu0 0.0
        %1670 = vmatpush1.msra.mxu0 0.0
        %1671 = vmatprep.subr.mxu0 0.0
        %1672 = vmatpush1.msra.mxu0 0.0
        %1673 = vmatprep.subr.mxu0 0.0
        %1674 = vmatpush1.msra.mxu0 0.0
        %1675 = vmatprep.subr.mxu0 0.0
        %1676 = vmatpush1.msra.mxu0 0.0
        %1677 = vmatprep.subr.mxu0 0.0
        %1678 = vmatpush1.msra.mxu0 0.0
        %1679 = vmatprep.subr.mxu0 0.0
        %1680 = vmatpush1.msra.mxu0 0.0
        %1681 = vmatprep.subr.mxu0 0.0
        %1682 = vmatpush1.msra.mxu0 0.0
        %1683 = vmatprep.subr.mxu0 0.0
        %1684 = vmatpush1.msra.mxu0 0.0
        %1685 = vmatprep.subr.mxu0 0.0
        %1686 = vmatpush1.msra.mxu0 0.0
        %1687 = vmatprep.subr.mxu0 0.0
        %1688 = vmatpush1.msra.mxu0 0.0
        %1689 = vmatprep.subr.mxu0 0.0
        %1690 = vmatpush1.msra.mxu0 0.0
        %1691 = vmatprep.subr.mxu0 0.0
        %1692 = vmatpush1.msra.mxu0 0.0
        %1693 = vmatprep.subr.mxu0 0.0
        %1694 = vmatpush1.msra.mxu0 0.0
        %1695 = vmatprep.subr.mxu0 0.0
        %1696 = vmatpush1.msra.mxu0 0.0
        %1697 = vmatprep.subr.mxu0 0.0
        %1698 = vmatpush1.msra.mxu0 0.0
        %1699 = vmatprep.subr.mxu0 0.0
        %1700 = vmatpush1.msra.mxu0 0.0
        %1701 = vmatprep.subr.mxu0 0.0
        %1702 = vmatpush1.msra.mxu0 0.0
        %1703 = vmatprep.subr.mxu0 0.0
        %1704 = vmatpush1.msra.mxu0 0.0
        %1705 = vmatprep.subr.mxu0 0.0
        %1706 = vmatpush1.msra.mxu0 0.0
        %1707 = vmatprep.subr.mxu0 0.0
        %1708 = vmatpush1.msra.mxu0 0.0
        %1709 = vmatprep.subr.mxu0 0.0
        %1710 = vmatpush1.msra.mxu0 0.0
        %1711 = vmatprep.subr.mxu0 0.0
        %1712 = vmatpush1.msra.mxu0 0.0
        %1713 = vmatprep.subr.mxu0 0.0
        %1714 = vmatpush1.msra.mxu0 0.0
        %1715 = vmatprep.subr.mxu0 0.0
        %1716 = vmatpush1.msra.mxu0 0.0
        %1717 = vmatprep.mubr.f32.mxu0 0.0
        %1718 = vmatmul.mubr.f32.gmra.mrb[0].mxu0 %v1651
        %v1719 = vpop.f32.mrb[0].mxu0
        %v1720 = vadd.f32 %v1648, %v1719
        %v1721 = vpop.f32.mrb[0].mxu0
        %1722 = vdwg.mxu0
        %1723 = vst.msk [vmem:[%s306] sm:$0xff] %vm322, %v1720
        %s1724 = sand.u32 %s168, 1
        %s1725 = scalar_lea.sflag [#allocation4], %s1724
        %s1726 = sand.u32 %s168, 1
        %s1727 = smul.addr %s1726, 8
        %s1728 = scalar_lea.vmem [#allocation8], %s1727
        // Predicated region
        $region57: #{tpu_custom_call.1} parent=43 // pred_check
          %p1729 = pneg %p178
        $region58: #{tpu_custom_call.1} parent=43 // pred_check_branch
          %1731 = sbr.rel (%p1729) target = $region60
        $region59: #{tpu_custom_call.1} parent=43 // pred_region
          %s1733 = ssub.s32 128, 128
          %1734 = vsyncadd %s1725, %s1733
          %s1735 = smul.addr %s24, 128
          %s1736 = scalar_lea.hbm %s6, %s1735
          %s1738 = sshll.u32 %s1728, 4
          %s1739 = int_to_ptr.vmem [resolvable:$true] %s1738
          %1741 = dma.vmem_to_hbm [thread:$0]  %s1739, 128, %s1736, %s1725
        $region60: #{tpu_custom_call.1} parent=43 // pred_fallthru
          _
      $region44: #{tpu_custom_call.1} parent=5 // pred_fallthru
        _
      %p1742 = scmp.le.s32.totalorder 2, %s19
      // Predicated region
      $region61: #{tpu_custom_call.1} parent=5 // pred_check
        %p1743 = pneg %p1742
      $region62: #{tpu_custom_call.1} parent=5 // pred_check_branch
        %1745 = sbr.rel (%p1743) target = $region64
      $region63: #{tpu_custom_call.1} parent=5 // pred_region
        %s1746 = ssub.s32 %s19, 2
        // Predicated region
        $region65: #{tpu_custom_call.1} parent=63 // pred_check
          %p1747 = pneg %p184
        $region66: #{tpu_custom_call.1} parent=63 // pred_check_branch
          %1749 = sbr.rel (%p1747) target = $region68
        $region67: #{tpu_custom_call.1} parent=63 // pred_region
          %s1750 = sand.u32 %s169, 1
          %s1751 = scalar_lea.sflag [#allocation4], %s1750
          %s1752 = sand.u32 %s169, 1
          %s1753 = smul.addr %s1752, 8
          %s1754 = scalar_lea.vmem [#allocation8], %s1753
          %1755 = dma.done %s1751, 128
        $region68: #{tpu_custom_call.1} parent=63 // pred_fallthru
          _
      $region64: #{tpu_custom_call.1} parent=5 // pred_fallthru
        _
    $region6: #{tpu_custom_call.1} parent=1 // loop_footer
      %s23 = sadd.s32 1, %s19
    $region7: #{tpu_custom_call.1} parent=1 // loop_footer_branch
      %18 = sbr.rel target = $region3
    $region8: #{tpu_custom_call.1} parent=1 // loop_exit
      _
    %1756 = vsyncpa [#allocation3], 1
    %s1757 = scalar_lea.sflag [#allocation3], 1
    %1758 = vsyncpa %s1757, 1
    %1759 = vsyncpa [#allocation6], 1
    %1760 = vsyncpa [#allocation4], 1
    %s1761 = scalar_lea.sflag [#allocation4], 1
    %1762 = vsyncpa %s1761, 1

// kernel: tpu_custom_call.1
$region0: #{tpu_custom_call.1}
  #allocation0 [shape = 'u32[]', space=smem, size = 0x4, offset = 0x4, fixed_abs, tag = 'smem constant byte address 0x4 - core index']
  #allocation1 [shape = 'u32[144,128]{1,0:T(1,128)}', space=vmem, size = 0x12000, scoped, tag = 'internal scratch']
  %s0 = inlined_call_operand.hbm [shape: f32[2,8,32], index: 0, kind: input, shape index: {}]
  %s1 = inlined_call_operand.vmem [shape: f32[2,1,8], index: 1, kind: input, shape index: {}]
  %s2 = inlined_call_operand.hbm [shape: f32[32,96], index: 2, kind: input, shape index: {}]
  %s3 = inlined_call_operand.vmem [shape: f32[1,96], index: 3, kind: input, shape index: {}]
  %s4 = inlined_call_operand.hbm [shape: f32[32,32], index: 4, kind: input, shape index: {}]
  %s5 = inlined_call_operand.vmem [shape: f32[1,32], index: 5, kind: input, shape index: {}]
  %s6 = inlined_call_operand.hbm [shape: f32[2,8,32], index: 6, kind: output, shape index: {}]
  %s7 = sld [smem:[#allocation0]]
  $region69: #{tpu_custom_call.1} parent=0
    _
  %s9 = ssub.s32 1, %s7
  %s10 = scalar_select 0, %s9, %s7
  $region1: #{tpu_custom_call.1} parent=0
    #allocation2 [shape = 'u8[8192]{0}', space=vmem, size = 0x2000, scoped, tag = 'input window, operand 0']
    #allocation3 [shape = 's32[2]{0}', space=sflag, size = 0x8, scoped, tag = 'scoped memory for tpu_custom_call.1']
    #allocation4 [shape = 's32[2]{0}', space=sflag, size = 0x8, scoped, tag = 'scoped memory for tpu_custom_call.1']
    #allocation5 [shape = 'u8[16384]{0}', space=vmem, size = 0x4000, scoped, tag = 'input window, operand 2, single buffered']
    #allocation6 [shape = 's32[1]{0}', space=sflag, size = 0x4, scoped, tag = 'scoped memory for tpu_custom_call.1']
    #allocation7 [shape = 'u8[16384]{0}', space=vmem, size = 0x4000, scoped, tag = 'input window, operand 4, single buffered']
    #allocation8 [shape = 'u8[8192]{0}', space=vmem, size = 0x2000, scoped, tag = 'output window, operand 0']
    %11 = vsyncpa [#allocation3], 0
    %s12 = scalar_lea.sflag [#allocation3], 1
    %13 = vsyncpa %s12, 0
    %14 = vsyncpa [#allocation6], 0
    %15 = vsyncpa [#allocation4], 0
    %s16 = scalar_lea.sflag [#allocation4], 1
    %17 = vsyncpa %s16, 0
    loop: start=0, step=1, limit=4
    $region2: #{tpu_custom_call.1} parent=1 // loop_pre_header
      _
    $region3: #{tpu_custom_call.1} parent=1 // loop_header
      %s19 = sphi 0, %s23
      %p20 = scmp.ge.s32.totalorder %s19, 4
      %s29 = sphi 0, %s31
      %s32 = sphi 0, %s29
      %s33 = sphi 0, %s32
      %s49 = sphi 0, %s33
      %s55 = sphi 0, %s57
      %s58 = sphi 0, %s55
      %s59 = sphi 0, %s58
      %s75 = sphi 0, %s59
      %s79 = sphi 0, %s79
      %s81 = sphi 0, %s79
      %s82 = sphi 0, %s81
      %s96 = sphi 0, %s82
      %s100 = sphi 0, %s100
      %s102 = sphi 0, %s100
      %s103 = sphi 0, %s102
      %s117 = sphi 0, %s103
      %s121 = sphi 0, %s121
      %s123 = sphi 0, %s121
      %s124 = sphi 0, %s123
      %s138 = sphi 0, %s124
      %s142 = sphi 0, %s142
      %s144 = sphi 0, %s142
      %s145 = sphi 0, %s144
      %s159 = sphi 0, %s145
      %s165 = sphi 0, %s167
      %s168 = sphi 0, %s165
      %s169 = sphi 0, %s168
      %s185 = sphi 0, %s169
    $region4: #{tpu_custom_call.1} parent=1 // loop_header_branch
      %22 = sbr.rel (%p20) target = $region8
    $region5: #{tpu_custom_call.1} parent=1 // loop_body
      %s24 = ssub.s32 %s19, 1
      %s25 = ssub.s32 %s19, 2
      %s26 = sadd.s32 %s19, 1
      %s27 = ssub.s32 %s19, %s26
      %p28 = scmp.eq.s32.totalorder %s27, 0
      %s30 = sadd.s32 %s29, 1
      %s31 = scalar_select %p28, %s29, %s30
      %p34 = pneg %p28
      %p35 = scmp.eq.s32.totalorder %s19, 1
      %p36 = por %p34, %p35
      %p37 = scmp.ne.s32.totalorder %s29, %s32
      %p38 = scmp.eq.s32.totalorder %s19, 0
      %p39 = por %p37, %p38
      %p40 = scmp.ne.s32.totalorder %s29, %s32
      %p41 = scmp.eq.s32.totalorder %s24, 1
      %p42 = por %p40, %p41
      %p43 = scmp.ne.s32.totalorder %s32, %s33
      %p44 = scmp.eq.s32.totalorder %s24, 0
      %p45 = por %p43, %p44
      %p46 = scmp.ne.s32.totalorder %s32, %s33
      %p47 = scmp.eq.s32.totalorder %s25, 1
      %p48 = por %p46, %p47
      %p50 = scmp.ne.s32.totalorder %s33, %s49
      %p51 = scmp.eq.s32.totalorder %s25, 0
      %p52 = por %p50, %p51
      %s53 = ssub.s32 %s19, %s26
      %p54 = scmp.eq.s32.totalorder %s53, 0
      %s56 = sadd.s32 %s55, 1
      %s57 = scalar_select %p54, %s55, %s56
      %p60 = pneg %p54
      %p61 = scmp.eq.s32.totalorder %s19, 1
      %p62 = por %p60, %p61
      %p63 = scmp.ne.s32.totalorder %s55, %s58
      %p64 = scmp.eq.s32.totalorder %s19, 0
      %p65 = por %p63, %p64
      %p66 = scmp.ne.s32.totalorder %s55, %s58
      %p67 = scmp.eq.s32.totalorder %s24, 1
      %p68 = por %p66, %p67
      %p69 = scmp.ne.s32.totalorder %s58, %s59
      %p70 = scmp.eq.s32.totalorder %s24, 0
      %p71 = por %p69, %p70
      %p72 = scmp.ne.s32.totalorder %s58, %s59
      %p73 = scmp.eq.s32.totalorder %s25, 1
      %p74 = por %p72, %p73
      %p76 = scmp.ne.s32.totalorder %s59, %s75
      %p77 = scmp.eq.s32.totalorder %s25, 0
      %p78 = por %p76, %p77
      %s80 = sadd.s32 %s79, 1
      %p83 = scmp.eq.s32.totalorder %s19, 1
      %p84 = scmp.ne.s32.totalorder %s79, %s81
      %p85 = scmp.eq.s32.totalorder %s19, 0
      %p86 = por %p84, %p85
      %p87 = scmp.ne.s32.totalorder %s79, %s81
      %p88 = scmp.eq.s32.totalorder %s24, 1
      %p89 = por %p87, %p88
      %p90 = scmp.ne.s32.totalorder %s81, %s82
      %p91 = scmp.eq.s32.totalorder %s24, 0
      %p92 = por %p90, %p91
      %p93 = scmp.ne.s32.totalorder %s81, %s82
      %p94 = scmp.eq.s32.totalorder %s25, 1
      %p95 = por %p93, %p94
      %p97 = scmp.ne.s32.totalorder %s82, %s96
      %p98 = scmp.eq.s32.totalorder %s25, 0
      %p99 = por %p97, %p98
      %s101 = sadd.s32 %s100, 1
      %p104 = scmp.eq.s32.totalorder %s19, 1
      %p105 = scmp.ne.s32.totalorder %s100, %s102
      %p106 = scmp.eq.s32.totalorder %s19, 0
      %p107 = por %p105, %p106
      %p108 = scmp.ne.s32.totalorder %s100, %s102
      %p109 = scmp.eq.s32.totalorder %s24, 1
      %p110 = por %p108, %p109
      %p111 = scmp.ne.s32.totalorder %s102, %s103
      %p112 = scmp.eq.s32.totalorder %s24, 0
      %p113 = por %p111, %p112
      %p114 = scmp.ne.s32.totalorder %s102, %s103
      %p115 = scmp.eq.s32.totalorder %s25, 1
      %p116 = por %p114, %p115
      %p118 = scmp.ne.s32.totalorder %s103, %s117
      %p119 = scmp.eq.s32.totalorder %s25, 0
      %p120 = por %p118, %p119
      %s122 = sadd.s32 %s121, 1
      %p125 = scmp.eq.s32.totalorder %s19, 1
      %p126 = scmp.ne.s32.totalorder %s121, %s123
      %p127 = scmp.eq.s32.totalorder %s19, 0
      %p128 = por %p126, %p127
      %p129 = scmp.ne.s32.totalorder %s121, %s123
      %p130 = scmp.eq.s32.totalorder %s24, 1
      %p131 = por %p129, %p130
      %p132 = scmp.ne.s32.totalorder %s123, %s124
      %p133 = scmp.eq.s32.totalorder %s24, 0
      %p134 = por %p132, %p133
      %p135 = scmp.ne.s32.totalorder %s123, %s124
      %p136 = scmp.eq.s32.totalorder %s25, 1
      %p137 = por %p135, %p136
      %p139 = scmp.ne.s32.totalorder %s124, %s138
      %p140 = scmp.eq.s32.totalorder %s25, 0
      %p141 = por %p139, %p140
      %s143 = sadd.s32 %s142, 1
      %p146 = scmp.eq.s32.totalorder %s19, 1
      %p147 = scmp.ne.s32.totalorder %s142, %s144
      %p148 = scmp.eq.s32.totalorder %s19, 0
      %p149 = por %p147, %p148
      %p150 = scmp.ne.s32.totalorder %s142, %s144
      %p151 = scmp.eq.s32.totalorder %s24, 1
      %p152 = por %p150, %p151
      %p153 = scmp.ne.s32.totalorder %s144, %s145
      %p154 = scmp.eq.s32.totalorder %s24, 0
      %p155 = por %p153, %p154
      %p156 = scmp.ne.s32.totalorder %s144, %s145
      %p157 = scmp.eq.s32.totalorder %s25, 1
      %p158 = por %p156, %p157
      %p160 = scmp.ne.s32.totalorder %s145, %s159
      %p161 = scmp.eq.s32.totalorder %s25, 0
      %p162 = por %p160, %p161
      %s163 = ssub.s32 %s19, %s26
      %p164 = scmp.eq.s32.totalorder %s163, 0
      %s166 = sadd.s32 %s165, 1
      %s167 = scalar_select %p164, %s165, %s166
      %p170 = pneg %p164
      %p171 = scmp.eq.s32.totalorder %s19, 1
      %p172 = por %p170, %p171
      %p173 = scmp.ne.s32.totalorder %s165, %s168
      %p174 = scmp.eq.s32.totalorder %s19, 0
      %p175 = por %p173, %p174
      %p176 = scmp.ne.s32.totalorder %s165, %s168
      %p177 = scmp.eq.s32.totalorder %s24, 1
      %p178 = por %p176, %p177
      %p179 = scmp.ne.s32.totalorder %s168, %s169
      %p180 = scmp.eq.s32.totalorder %s24, 0
      %p181 = por %p179, %p180
      %p182 = scmp.ne.s32.totalorder %s168, %s169
      %p183 = scmp.eq.s32.totalorder %s25, 1
      %p184 = por %p182, %p183
      %p186 = scmp.ne.s32.totalorder %s169, %s185
      %p187 = scmp.eq.s32.totalorder %s25, 0
      %p188 = por %p186, %p187
      %p189 = scmp.le.s32.totalorder 1, %s19
      %p190 = scmp.lt.s32.totalorder %s19, 3
      %p191 = pnand %p189, %p190
      %p192 = pneg %p191
      // Predicated region
      $region9: #{tpu_custom_call.1} parent=5 // pred_check
        _
      $region10: #{tpu_custom_call.1} parent=5 // pred_check_branch
        %194 = sbr.rel (%p191) target = $region12
      $region11: #{tpu_custom_call.1} parent=5 // pred_region
        %s195 = ssub.s32 %s19, 1
        // Predicated region
        $region13: #{tpu_custom_call.1} parent=11 // pred_check
          %p196 = pneg %p92
        $region14: #{tpu_custom_call.1} parent=11 // pred_check_branch
          %198 = sbr.rel (%p196) target = $region16
        $region15: #{tpu_custom_call.1} parent=11 // pred_region
          %s200 = ssub.s32 512, 512
          %201 = vsyncadd [#allocation6], %s200
          %s202 = sshll.u32 [#allocation5], 4
          %s203 = int_to_ptr.vmem [resolvable:$true] %s202
          %208 = dma.hbm_to_vmem [thread:$0]  %s2, 512, %s203, [#allocation6], 128, 128, 8
        $region16: #{tpu_custom_call.1} parent=11 // pred_fallthru
          _
        // Predicated region
        $region17: #{tpu_custom_call.1} parent=11 // pred_check
          %p209 = pneg %p113
        $region18: #{tpu_custom_call.1} parent=11 // pred_check_branch
          %211 = sbr.rel (%p209) target = $region20
        $region19: #{tpu_custom_call.1} parent=11 // pred_region
          _
        $region20: #{tpu_custom_call.1} parent=11 // pred_fallthru
          _
        // Predicated region
        $region21: #{tpu_custom_call.1} parent=11 // pred_check
          %p212 = pneg %p134
        $region22: #{tpu_custom_call.1} parent=11 // pred_check_branch
          %214 = sbr.rel (%p212) target = $region24
        $region23: #{tpu_custom_call.1} parent=11 // pred_region
          %s216 = ssub.s32 512, 512
          %217 = vsyncadd [#allocation6], %s216
          %s218 = sshll.u32 [#allocation7], 4
          %s219 = int_to_ptr.vmem [resolvable:$true] %s218
          %224 = dma.hbm_to_vmem [thread:$0]  %s4, 512, %s219, [#allocation6], 128, 128, 8
        $region24: #{tpu_custom_call.1} parent=11 // pred_fallthru
          _
        // Predicated region
        $region25: #{tpu_custom_call.1} parent=11 // pred_check
          %p225 = pneg %p155
        $region26: #{tpu_custom_call.1} parent=11 // pred_check_branch
          %227 = sbr.rel (%p225) target = $region28
        $region27: #{tpu_custom_call.1} parent=11 // pred_region
          _
        $region28: #{tpu_custom_call.1} parent=11 // pred_fallthru
          _
      $region12: #{tpu_custom_call.1} parent=5 // pred_fallthru
        _
      %p228 = scmp.lt.s32.totalorder %s19, 2
      // Predicated region
      $region29: #{tpu_custom_call.1} parent=5 // pred_check
        %p229 = pneg %p228
      $region30: #{tpu_custom_call.1} parent=5 // pred_check_branch
        %231 = sbr.rel (%p229) target = $region32
      $region31: #{tpu_custom_call.1} parent=5 // pred_region
        // Predicated region
        $region33: #{tpu_custom_call.1} parent=31 // pred_check
          %p232 = pneg %p39
        $region34: #{tpu_custom_call.1} parent=31 // pred_check_branch
          %234 = sbr.rel (%p232) target = $region36
        $region35: #{tpu_custom_call.1} parent=31 // pred_region
          %s235 = sand.u32 %s29, 1
          %s236 = scalar_lea.sflag [#allocation3], %s235
          %s237 = sand.u32 %s29, 1
          %s238 = smul.addr %s237, 8
          %s239 = scalar_lea.vmem [#allocation2], %s238
          %s241 = ssub.s32 128, 128
          %242 = vsyncadd %s236, %s241
          %s243 = smul.addr %s19, 128
          %s244 = scalar_lea.hbm %s0, %s243
          %s246 = sshll.u32 %s239, 4
          %s247 = int_to_ptr.vmem [resolvable:$true] %s246
          %249 = dma.hbm_to_vmem [thread:$0]  %s244, 128, %s247, %s236
        $region36: #{tpu_custom_call.1} parent=31 // pred_fallthru
          _
        // Predicated region
        $region37: #{tpu_custom_call.1} parent=31 // pred_check
          %p250 = pneg %p65
        $region38: #{tpu_custom_call.1} parent=31 // pred_check_branch
          %252 = sbr.rel (%p250) target = $region40
        $region39: #{tpu_custom_call.1} parent=31 // pred_region
          %p253 = scmp.lt.s32.totalorder %s19, 1
          %s254 = scalar_select %p253, %s19, 1
          %s255 = scalar_lea.vmem %s1, %s254
        $region40: #{tpu_custom_call.1} parent=31 // pred_fallthru
          _
      $region32: #{tpu_custom_call.1} parent=5 // pred_fallthru
        _
      %p256 = scmp.le.s32.totalorder 1, %s19
      %p257 = scmp.lt.s32.totalorder %s19, 3
      %p258 = pnand %p256, %p257
      %p259 = pneg %p258
      // Predicated region
      $region41: #{tpu_custom_call.1} parent=5 // pred_check
        _
      $region42: #{tpu_custom_call.1} parent=5 // pred_check_branch
        %261 = sbr.rel (%p258) target = $region44
      $region43: #{tpu_custom_call.1} parent=5 // pred_region
        %s262 = ssub.s32 %s19, 1
        %s263 = sand.u32 %s32, 1
        %s264 = scalar_lea.sflag [#allocation3], %s263
        %s265 = sand.u32 %s32, 1
        %s266 = smul.addr %s265, 8
        %s267 = scalar_lea.vmem [#allocation2], %s266
        // Predicated region
        $region45: #{tpu_custom_call.1} parent=43 // pred_check
          %p268 = pneg %p45
        $region46: #{tpu_custom_call.1} parent=43 // pred_check_branch
          %270 = sbr.rel (%p268) target = $region48
        $region47: #{tpu_custom_call.1} parent=43 // pred_region
          %271 = dma.done %s264, 128
        $region48: #{tpu_custom_call.1} parent=43 // pred_fallthru
          _
        // Predicated region
        $region49: #{tpu_custom_call.1} parent=43 // pred_check
          %p272 = pneg %p92
        $region50: #{tpu_custom_call.1} parent=43 // pred_check_branch
          %274 = sbr.rel (%p272) target = $region52
        $region51: #{tpu_custom_call.1} parent=43 // pred_region
          %275 = dma.done [#allocation6], 512
        $region52: #{tpu_custom_call.1} parent=43 // pred_fallthru
          _
        // Predicated region
        $region53: #{tpu_custom_call.1} parent=43 // pred_check
          %p276 = pneg %p134
        $region54: #{tpu_custom_call.1} parent=43 // pred_check_branch
          %278 = sbr.rel (%p276) target = $region56
        $region55: #{tpu_custom_call.1} parent=43 // pred_region
          %279 = dma.done [#allocation6], 512
        $region56: #{tpu_custom_call.1} parent=43 // pred_fallthru
          _
        %s280 = sand.u32 %s32, 1
        %s281 = scalar_lea.sflag [#allocation3], %s280
        %s282 = sand.u32 %s32, 1
        %s283 = smul.addr %s282, 8
        %s284 = scalar_lea.vmem [#allocation2], %s283
        %p285 = pneg %p45
        %p286 = pneg %p42
        %p287 = scmp.lt.s32.totalorder %s24, 1
        %s288 = scalar_select %p287, %s24, 1
        %s289 = scalar_lea.vmem %s1, %s288
        %p290 = pneg %p71
        %p291 = pneg %p68
        %p292 = pneg %p92
        %p293 = pneg %p89
        %p294 = pneg %p113
        %p295 = pneg %p110
        %p296 = pneg %p134
        %p297 = pneg %p131
        %p298 = pneg %p155
        %p299 = pneg %p152
        %p300 = pneg %p181
        %p301 = pneg %p178
        %s302 = sand.u32 %s168, 1
        %s303 = scalar_lea.sflag [#allocation4], %s302
        %s304 = sand.u32 %s168, 1
        %s305 = smul.addr %s304, 8
        %s306 = scalar_lea.vmem [#allocation8], %s305
        %p307 = scmp.lt.s32.totalorder %s24, 1
        %s308 = scalar_select %p307, %s24, 1
        %s309 = scalar_lea.vmem %s1, %s308
        %v310 = vld [vmem:[%s267] sm:$0xff]
        %v311 = vld [vmem:[#allocation5] sm:$0xff]
        %v312 = vld [vmem:[#allocation5 + $0x8] sm:$0xff]
        %v313 = vld [vmem:[#allocation5 + $0x10] sm:$0xff]
        %v314 = vld [vmem:[#allocation5 + $0x18] sm:$0xff]
        %v315 = vld [vmem:[%s3] sm:$0x1]
        %v317 = vlaneseq
        %v318 = vshrl.u32 %v317, 7
        %v319 = vsub.s32 0, %v318
        %v320 = vrot.slane %v315, %v319
        %vm322 = vcmask 261120
        %v324 = vsel %vm322, %v310, 0
        %326 = vmatprep.subr.mxu0 0.0
        %327 = vmatpush1.msra.mxu0 %v311
        %328 = vmatprep.subr.mxu0 0.0
        %329 = vmatpush1.msra.mxu0 %v312
        %330 = vmatprep.subr.mxu0 0.0
        %331 = vmatpush1.msra.mxu0 %v313
        %332 = vmatprep.subr.mxu0 0.0
        %333 = vmatpush1.msra.mxu0 %v314
        %334 = vmatprep.subr.mxu0 0.0
        %335 = vmatpush1.msra.mxu0 0.0
        %336 = vmatprep.subr.mxu0 0.0
        %337 = vmatpush1.msra.mxu0 0.0
        %338 = vmatprep.subr.mxu0 0.0
        %339 = vmatpush1.msra.mxu0 0.0
        %340 = vmatprep.subr.mxu0 0.0
        %341 = vmatpush1.msra.mxu0 0.0
        %342 = vmatprep.subr.mxu0 0.0
        %343 = vmatpush1.msra.mxu0 0.0
        %344 = vmatprep.subr.mxu0 0.0
        %345 = vmatpush1.msra.mxu0 0.0
        %346 = vmatprep.subr.mxu0 0.0
        %347 = vmatpush1.msra.mxu0 0.0
        %348 = vmatprep.subr.mxu0 0.0
        %349 = vmatpush1.msra.mxu0 0.0
        %350 = vmatprep.subr.mxu0 0.0
        %351 = vmatpush1.msra.mxu0 0.0
        %352 = vmatprep.subr.mxu0 0.0
        %353 = vmatpush1.msra.mxu0 0.0
        %354 = vmatprep.subr.mxu0 0.0
        %355 = vmatpush1.msra.mxu0 0.0
        %356 = vmatprep.subr.mxu0 0.0
        %357 = vmatpush1.msra.mxu0 0.0
        %358 = vmatprep.subr.mxu0 0.0
        %359 = vmatpush1.msra.mxu0 0.0
        %360 = vmatprep.subr.mxu0 0.0
        %361 = vmatpush1.msra.mxu0 0.0
        %362 = vmatprep.subr.mxu0 0.0
        %363 = vmatpush1.msra.mxu0 0.0
        %364 = vmatprep.subr.mxu0 0.0
        %365 = vmatpush1.msra.mxu0 0.0
        %366 = vmatprep.subr.mxu0 0.0
        %367 = vmatpush1.msra.mxu0 0.0
        %368 = vmatprep.subr.mxu0 0.0
        %369 = vmatpush1.msra.mxu0 0.0
        %370 = vmatprep.subr.mxu0 0.0
        %371 = vmatpush1.msra.mxu0 0.0
        %372 = vmatprep.subr.mxu0 0.0
        %373 = vmatpush1.msra.mxu0 0.0
        %374 = vmatprep.subr.mxu0 0.0
        %375 = vmatpush1.msra.mxu0 0.0
        %376 = vmatprep.subr.mxu0 0.0
        %377 = vmatpush1.msra.mxu0 0.0
        %378 = vmatprep.subr.mxu0 0.0
        %379 = vmatpush1.msra.mxu0 0.0
        %380 = vmatprep.subr.mxu0 0.0
        %381 = vmatpush1.msra.mxu0 0.0
        %382 = vmatprep.subr.mxu0 0.0
        %383 = vmatpush1.msra.mxu0 0.0
        %384 = vmatprep.subr.mxu0 0.0
        %385 = vmatpush1.msra.mxu0 0.0
        %386 = vmatprep.subr.mxu0 0.0
        %387 = vmatpush1.msra.mxu0 0.0
        %388 = vmatprep.subr.mxu0 0.0
        %389 = vmatpush1.msra.mxu0 0.0
        %390 = vmatprep.mubr.f32.mxu0 0.0
        %391 = vmatmul.mubr.f32.gmra.mrb[0].mxu0 %v324
        %v392 = vpop.f32.mrb[0].mxu0
        %v393 = vadd.f32 %v320, %v392
        %v394 = vpop.f32.mrb[0].mxu0
        %395 = vdwg.mxu0
        %397 = vrot.lane.b32.xlu0 %v393, 120
        %v398 = vpop.permute.xlu0 %397
        %400 = vrot.lane.b32.xlu0 %v393, 112
        %v401 = vpop.permute.xlu0 %400
        %403 = vrot.lane.b32.xlu0 %v393, 104
        %v404 = vpop.permute.xlu0 %403
        %v406 = vcombine.low %v393, %v401
        %v407 = vcombine.high %v393, %v401
        %v409 = vunpack.c.l.s4 1983009808
        %v410 = vunpack.c.0.s8 %v409
        %v411 = vlaneseq
        %v412 = vshrl.u32 %v411, 7
        %v413 = vsub.s32 %v410, %v412
        %v414 = vrot.slane %v406, %v413
        %v416 = vunpack.c.l.s4 1983009808
        %v417 = vunpack.c.0.s8 %v416
        %v418 = vlaneseq
        %v419 = vshrl.u32 %v418, 7
        %v420 = vsub.s32 %v417, %v419
        %v421 = vrot.slane %v407, %v420
        %v422 = vcombine.low %v398, %v404
        %v423 = vcombine.high %v398, %v404
        %v425 = vunpack.c.l.s4 1983009808
        %v426 = vunpack.c.0.s8 %v425
        %v427 = vlaneseq
        %v428 = vshrl.u32 %v427, 7
        %v429 = vsub.s32 %v426, %v428
        %v430 = vrot.slane %v422, %v429
        %v432 = vunpack.c.l.s4 1983009808
        %v433 = vunpack.c.0.s8 %v432
        %v434 = vlaneseq
        %v435 = vshrl.u32 %v434, 7
        %v436 = vsub.s32 %v433, %v435
        %v437 = vrot.slane %v423, %v436
        %v438 = vcombine.low %v414, %v430
        %v439 = vcombine.high %v414, %v430
        %v441 = vunpack.c.l.s4 1934713408
        %v442 = vunpack.c.0.s8 %v441
        %v443 = vlaneseq
        %v444 = vshrl.u32 %v443, 7
        %v445 = vsub.s32 %v442, %v444
        %v446 = vrot.slane %v438, %v445
        %v448 = vunpack.c.l.s4 1934713408
        %v449 = vunpack.c.0.s8 %v448
        %v450 = vlaneseq
        %v451 = vshrl.u32 %v450, 7
        %v452 = vsub.s32 %v449, %v451
        %v453 = vrot.slane %v439, %v452
        %v454 = vcombine.low %v421, %v437
        %v455 = vcombine.high %v421, %v437
        %v457 = vunpack.c.l.s4 1934713408
        %v458 = vunpack.c.0.s8 %v457
        %v459 = vlaneseq
        %v460 = vshrl.u32 %v459, 7
        %v461 = vsub.s32 %v458, %v460
        %v462 = vrot.slane %v454, %v461
        %v464 = vunpack.c.l.s4 1934713408
        %v465 = vunpack.c.0.s8 %v464
        %v466 = vlaneseq
        %v467 = vshrl.u32 %v466, 7
        %v468 = vsub.s32 %v465, %v467
        %v469 = vrot.slane %v455, %v468
        %v470 = vcombine.high %v446, 0.0
        %v471 = vcombine.high %v453, 0.0
        %v472 = vcombine.high %v462, 0.0
        %v473 = vcombine.high %v469, 0.0
        %v474 = vcombine.low %v446, %v453
        %v476 = vunpack.c.l.s4 1983009808
        %v477 = vunpack.c.0.s8 %v476
        %v478 = vlaneseq
        %v479 = vshrl.u32 %v478, 7
        %v480 = vsub.s32 %v477, %v479
        %v481 = vrot.slane %v474, %v480
        %v482 = vcombine.low %v470, %v471
        %v484 = vunpack.c.l.s4 1983009808
        %v485 = vunpack.c.0.s8 %v484
        %v486 = vlaneseq
        %v487 = vshrl.u32 %v486, 7
        %v488 = vsub.s32 %v485, %v487
        %v489 = vrot.slane %v482, %v488
        %v490 = vcombine.low %v462, %v469
        %v492 = vunpack.c.l.s4 1983009808
        %v493 = vunpack.c.0.s8 %v492
        %v494 = vlaneseq
        %v495 = vshrl.u32 %v494, 7
        %v496 = vsub.s32 %v493, %v495
        %v497 = vrot.slane %v490, %v496
        %v498 = vcombine.low %v472, %v473
        %v500 = vunpack.c.l.s4 1983009808
        %v501 = vunpack.c.0.s8 %v500
        %v502 = vlaneseq
        %v503 = vshrl.u32 %v502, 7
        %v504 = vsub.s32 %v501, %v503
        %v505 = vrot.slane %v498, %v504
        %v506 = vcombine.low %v481, %v489
        %v507 = vcombine.high %v481, %v489
        %v509 = vunpack.c.l.s4 1934713408
        %v510 = vunpack.c.0.s8 %v509
        %v511 = vlaneseq
        %v512 = vshrl.u32 %v511, 7
        %v513 = vsub.s32 %v510, %v512
        %v514 = vrot.slane %v506, %v513
        %v516 = vunpack.c.l.s4 1934713408
        %v517 = vunpack.c.0.s8 %v516
        %v518 = vlaneseq
        %v519 = vshrl.u32 %v518, 7
        %v520 = vsub.s32 %v517, %v519
        %v521 = vrot.slane %v507, %v520
        %v522 = vcombine.low %v497, %v505
        %v523 = vcombine.high %v497, %v505
        %v525 = vunpack.c.l.s4 1934713408
        %v526 = vunpack.c.0.s8 %v525
        %v527 = vlaneseq
        %v528 = vshrl.u32 %v527, 7
        %v529 = vsub.s32 %v526, %v528
        %v530 = vrot.slane %v522, %v529
        %v532 = vunpack.c.l.s4 1934713408
        %v533 = vunpack.c.0.s8 %v532
        %v534 = vlaneseq
        %v535 = vshrl.u32 %v534, 7
        %v536 = vsub.s32 %v533, %v535
        %v537 = vrot.slane %v523, %v536
        %v538 = vcombine.low %v514, %v530
        %v539 = vcombine.high %v514, %v530
        %v540 = vcombine.low %v521, %v537
        %v541 = vcombine.high %v521, %v537
        %542 = vrot.lane.b32.xlu0 %v393, 96
        %v543 = vpop.permute.xlu0 %542
        %544 = vrot.lane.b32.xlu0 %v398, 96
        %v545 = vpop.permute.xlu0 %544
        %546 = vrot.lane.b32.xlu0 %v401, 96
        %v547 = vpop.permute.xlu0 %546
        %548 = vrot.lane.b32.xlu0 %v404, 96
        %v549 = vpop.permute.xlu0 %548
        %v554 = vcombine.low %v543, %v547
        %v555 = vcombine.high %v543, %v547
        %v557 = vunpack.c.l.s4 1983009808
        %v558 = vunpack.c.0.s8 %v557
        %v559 = vlaneseq
        %v560 = vshrl.u32 %v559, 7
        %v561 = vsub.s32 %v558, %v560
        %v562 = vrot.slane %v554, %v561
        %v564 = vunpack.c.l.s4 1983009808
        %v565 = vunpack.c.0.s8 %v564
        %v566 = vlaneseq
        %v567 = vshrl.u32 %v566, 7
        %v568 = vsub.s32 %v565, %v567
        %v569 = vrot.slane %v555, %v568
        %v570 = vcombine.low %v545, %v549
        %v571 = vcombine.high %v545, %v549
        %v573 = vunpack.c.l.s4 1983009808
        %v574 = vunpack.c.0.s8 %v573
        %v575 = vlaneseq
        %v576 = vshrl.u32 %v575, 7
        %v577 = vsub.s32 %v574, %v576
        %v578 = vrot.slane %v570, %v577
        %v580 = vunpack.c.l.s4 1983009808
        %v581 = vunpack.c.0.s8 %v580
        %v582 = vlaneseq
        %v583 = vshrl.u32 %v582, 7
        %v584 = vsub.s32 %v581, %v583
        %v585 = vrot.slane %v571, %v584
        %v586 = vcombine.low %v562, %v578
        %v587 = vcombine.high %v562, %v578
        %v589 = vunpack.c.l.s4 1934713408
        %v590 = vunpack.c.0.s8 %v589
        %v591 = vlaneseq
        %v592 = vshrl.u32 %v591, 7
        %v593 = vsub.s32 %v590, %v592
        %v594 = vrot.slane %v586, %v593
        %v596 = vunpack.c.l.s4 1934713408
        %v597 = vunpack.c.0.s8 %v596
        %v598 = vlaneseq
        %v599 = vshrl.u32 %v598, 7
        %v600 = vsub.s32 %v597, %v599
        %v601 = vrot.slane %v587, %v600
        %v602 = vcombine.low %v569, %v585
        %v603 = vcombine.high %v569, %v585
        %v605 = vunpack.c.l.s4 1934713408
        %v606 = vunpack.c.0.s8 %v605
        %v607 = vlaneseq
        %v608 = vshrl.u32 %v607, 7
        %v609 = vsub.s32 %v606, %v608
        %v610 = vrot.slane %v602, %v609
        %v612 = vunpack.c.l.s4 1934713408
        %v613 = vunpack.c.0.s8 %v612
        %v614 = vlaneseq
        %v615 = vshrl.u32 %v614, 7
        %v616 = vsub.s32 %v613, %v615
        %v617 = vrot.slane %v603, %v616
        %v618 = vcombine.high %v594, 0.0
        %v619 = vcombine.high %v601, 0.0
        %v620 = vcombine.high %v610, 0.0
        %v621 = vcombine.high %v617, 0.0
        %v622 = vcombine.low %v594, %v601
        %v624 = vunpack.c.l.s4 1983009808
        %v625 = vunpack.c.0.s8 %v624
        %v626 = vlaneseq
        %v627 = vshrl.u32 %v626, 7
        %v628 = vsub.s32 %v625, %v627
        %v629 = vrot.slane %v622, %v628
        %v630 = vcombine.low %v618, %v619
        %v632 = vunpack.c.l.s4 1983009808
        %v633 = vunpack.c.0.s8 %v632
        %v634 = vlaneseq
        %v635 = vshrl.u32 %v634, 7
        %v636 = vsub.s32 %v633, %v635
        %v637 = vrot.slane %v630, %v636
        %v638 = vcombine.low %v610, %v617
        %v640 = vunpack.c.l.s4 1983009808
        %v641 = vunpack.c.0.s8 %v640
        %v642 = vlaneseq
        %v643 = vshrl.u32 %v642, 7
        %v644 = vsub.s32 %v641, %v643
        %v645 = vrot.slane %v638, %v644
        %v646 = vcombine.low %v620, %v621
        %v648 = vunpack.c.l.s4 1983009808
        %v649 = vunpack.c.0.s8 %v648
        %v650 = vlaneseq
        %v651 = vshrl.u32 %v650, 7
        %v652 = vsub.s32 %v649, %v651
        %v653 = vrot.slane %v646, %v652
        %v654 = vcombine.low %v629, %v637
        %v655 = vcombine.high %v629, %v637
        %v657 = vunpack.c.l.s4 1934713408
        %v658 = vunpack.c.0.s8 %v657
        %v659 = vlaneseq
        %v660 = vshrl.u32 %v659, 7
        %v661 = vsub.s32 %v658, %v660
        %v662 = vrot.slane %v654, %v661
        %v664 = vunpack.c.l.s4 1934713408
        %v665 = vunpack.c.0.s8 %v664
        %v666 = vlaneseq
        %v667 = vshrl.u32 %v666, 7
        %v668 = vsub.s32 %v665, %v667
        %v669 = vrot.slane %v655, %v668
        %v670 = vcombine.low %v645, %v653
        %v671 = vcombine.high %v645, %v653
        %v673 = vunpack.c.l.s4 1934713408
        %v674 = vunpack.c.0.s8 %v673
        %v675 = vlaneseq
        %v676 = vshrl.u32 %v675, 7
        %v677 = vsub.s32 %v674, %v676
        %v678 = vrot.slane %v670, %v677
        %v680 = vunpack.c.l.s4 1934713408
        %v681 = vunpack.c.0.s8 %v680
        %v682 = vlaneseq
        %v683 = vshrl.u32 %v682, 7
        %v684 = vsub.s32 %v681, %v683
        %v685 = vrot.slane %v671, %v684
        %v686 = vcombine.low %v662, %v678
        %v687 = vcombine.high %v662, %v678
        %v688 = vcombine.low %v669, %v685
        %v689 = vcombine.high %v669, %v685
        %690 = vrot.lane.b32.xlu0 %v393, 64
        %v691 = vpop.permute.xlu0 %690
        %692 = vrot.lane.b32.xlu0 %v398, 64
        %v693 = vpop.permute.xlu0 %692
        %694 = vrot.lane.b32.xlu0 %v401, 64
        %v695 = vpop.permute.xlu0 %694
        %696 = vrot.lane.b32.xlu0 %v404, 64
        %v697 = vpop.permute.xlu0 %696
        %v702 = vcombine.low %v691, %v695
        %v703 = vcombine.high %v691, %v695
        %v705 = vunpack.c.l.s4 1983009808
        %v706 = vunpack.c.0.s8 %v705
        %v707 = vlaneseq
        %v708 = vshrl.u32 %v707, 7
        %v709 = vsub.s32 %v706, %v708
        %v710 = vrot.slane %v702, %v709
        %v712 = vunpack.c.l.s4 1983009808
        %v713 = vunpack.c.0.s8 %v712
        %v714 = vlaneseq
        %v715 = vshrl.u32 %v714, 7
        %v716 = vsub.s32 %v713, %v715
        %v717 = vrot.slane %v703, %v716
        %v718 = vcombine.low %v693, %v697
        %v719 = vcombine.high %v693, %v697
        %v721 = vunpack.c.l.s4 1983009808
        %v722 = vunpack.c.0.s8 %v721
        %v723 = vlaneseq
        %v724 = vshrl.u32 %v723, 7
        %v725 = vsub.s32 %v722, %v724
        %v726 = vrot.slane %v718, %v725
        %v728 = vunpack.c.l.s4 1983009808
        %v729 = vunpack.c.0.s8 %v728
        %v730 = vlaneseq
        %v731 = vshrl.u32 %v730, 7
        %v732 = vsub.s32 %v729, %v731
        %v733 = vrot.slane %v719, %v732
        %v734 = vcombine.low %v710, %v726
        %v735 = vcombine.high %v710, %v726
        %v737 = vunpack.c.l.s4 1934713408
        %v738 = vunpack.c.0.s8 %v737
        %v739 = vlaneseq
        %v740 = vshrl.u32 %v739, 7
        %v741 = vsub.s32 %v738, %v740
        %v742 = vrot.slane %v734, %v741
        %v744 = vunpack.c.l.s4 1934713408
        %v745 = vunpack.c.0.s8 %v744
        %v746 = vlaneseq
        %v747 = vshrl.u32 %v746, 7
        %v748 = vsub.s32 %v745, %v747
        %v749 = vrot.slane %v735, %v748
        %v750 = vcombine.low %v717, %v733
        %v751 = vcombine.high %v717, %v733
        %v753 = vunpack.c.l.s4 1934713408
        %v754 = vunpack.c.0.s8 %v753
        %v755 = vlaneseq
        %v756 = vshrl.u32 %v755, 7
        %v757 = vsub.s32 %v754, %v756
        %v758 = vrot.slane %v750, %v757
        %v760 = vunpack.c.l.s4 1934713408
        %v761 = vunpack.c.0.s8 %v760
        %v762 = vlaneseq
        %v763 = vshrl.u32 %v762, 7
        %v764 = vsub.s32 %v761, %v763
        %v765 = vrot.slane %v751, %v764
        %v766 = vcombine.high %v742, 0.0
        %v767 = vcombine.high %v749, 0.0
        %v768 = vcombine.high %v758, 0.0
        %v769 = vcombine.high %v765, 0.0
        %v770 = vcombine.low %v742, %v749
        %v772 = vunpack.c.l.s4 1983009808
        %v773 = vunpack.c.0.s8 %v772
        %v774 = vlaneseq
        %v775 = vshrl.u32 %v774, 7
        %v776 = vsub.s32 %v773, %v775
        %v777 = vrot.slane %v770, %v776
        %v778 = vcombine.low %v766, %v767
        %v780 = vunpack.c.l.s4 1983009808
        %v781 = vunpack.c.0.s8 %v780
        %v782 = vlaneseq
        %v783 = vshrl.u32 %v782, 7
        %v784 = vsub.s32 %v781, %v783
        %v785 = vrot.slane %v778, %v784
        %v786 = vcombine.low %v758, %v765
        %v788 = vunpack.c.l.s4 1983009808
        %v789 = vunpack.c.0.s8 %v788
        %v790 = vlaneseq
        %v791 = vshrl.u32 %v790, 7
        %v792 = vsub.s32 %v789, %v791
        %v793 = vrot.slane %v786, %v792
        %v794 = vcombine.low %v768, %v769
        %v796 = vunpack.c.l.s4 1983009808
        %v797 = vunpack.c.0.s8 %v796
        %v798 = vlaneseq
        %v799 = vshrl.u32 %v798, 7
        %v800 = vsub.s32 %v797, %v799
        %v801 = vrot.slane %v794, %v800
        %v802 = vcombine.low %v777, %v785
        %v803 = vcombine.high %v777, %v785
        %v805 = vunpack.c.l.s4 1934713408
        %v806 = vunpack.c.0.s8 %v805
        %v807 = vlaneseq
        %v808 = vshrl.u32 %v807, 7
        %v809 = vsub.s32 %v806, %v808
        %v810 = vrot.slane %v802, %v809
        %v812 = vunpack.c.l.s4 1934713408
        %v813 = vunpack.c.0.s8 %v812
        %v814 = vlaneseq
        %v815 = vshrl.u32 %v814, 7
        %v816 = vsub.s32 %v813, %v815
        %v817 = vrot.slane %v803, %v816
        %v818 = vcombine.low %v793, %v801
        %v819 = vcombine.high %v793, %v801
        %v821 = vunpack.c.l.s4 1934713408
        %v822 = vunpack.c.0.s8 %v821
        %v823 = vlaneseq
        %v824 = vshrl.u32 %v823, 7
        %v825 = vsub.s32 %v822, %v824
        %v826 = vrot.slane %v818, %v825
        %v828 = vunpack.c.l.s4 1934713408
        %v829 = vunpack.c.0.s8 %v828
        %v830 = vlaneseq
        %v831 = vshrl.u32 %v830, 7
        %v832 = vsub.s32 %v829, %v831
        %v833 = vrot.slane %v819, %v832
        %v834 = vcombine.low %v810, %v826
        %v835 = vcombine.high %v810, %v826
        %v836 = vcombine.low %v817, %v833
        %v837 = vcombine.high %v817, %v833
        %v838 = vld [vmem:[%s309] sm:$0x1]
        %v840 = vlaneseq
        %v841 = vshrl.u32 %v840, 7
        %v842 = vsub.s32 0, %v841
        %v843 = vrot.slane %v838, %v842
        %vm845 = vcmask 64512
        %v847 = vsel %vm845, %v538, 0
        %v850 = vsel %vm845, %v686, 0
        %852 = vmatprep.subr.mxu0 0.0
        %853 = vmatpush1.xpose.msra.mxu0 %v850
        %854 = vmatprep.subr.mxu0 0.0
        %855 = vmatpush1.xpose.msra.mxu0 0.0
        %856 = vmatprep.subr.mxu0 0.0
        %857 = vmatpush1.xpose.msra.mxu0 0.0
        %858 = vmatprep.subr.mxu0 0.0
        %859 = vmatpush1.xpose.msra.mxu0 0.0
        %860 = vmatprep.subr.mxu0 0.0
        %861 = vmatpush1.xpose.msra.mxu0 0.0
        %862 = vmatprep.subr.mxu0 0.0
        %863 = vmatpush1.xpose.msra.mxu0 0.0
        %864 = vmatprep.subr.mxu0 0.0
        %865 = vmatpush1.xpose.msra.mxu0 0.0
        %866 = vmatprep.subr.mxu0 0.0
        %867 = vmatpush1.xpose.msra.mxu0 0.0
        %868 = vmatprep.subr.mxu0 0.0
        %869 = vmatpush1.xpose.msra.mxu0 0.0
        %870 = vmatprep.subr.mxu0 0.0
        %871 = vmatpush1.xpose.msra.mxu0 0.0
        %872 = vmatprep.subr.mxu0 0.0
        %873 = vmatpush1.xpose.msra.mxu0 0.0
        %874 = vmatprep.subr.mxu0 0.0
        %875 = vmatpush1.xpose.msra.mxu0 0.0
        %876 = vmatprep.subr.mxu0 0.0
        %877 = vmatpush1.xpose.msra.mxu0 0.0
        %878 = vmatprep.subr.mxu0 0.0
        %879 = vmatpush1.xpose.msra.mxu0 0.0
        %880 = vmatprep.subr.mxu0 0.0
        %881 = vmatpush1.xpose.msra.mxu0 0.0
        %882 = vmatprep.subr.mxu0 0.0
        %883 = vmatpush1.xpose.msra.mxu0 0.0
        %884 = vmatprep.subr.mxu0 0.0
        %885 = vmatpush1.xpose.msra.mxu0 0.0
        %886 = vmatprep.subr.mxu0 0.0
        %887 = vmatpush1.xpose.msra.mxu0 0.0
        %888 = vmatprep.subr.mxu0 0.0
        %889 = vmatpush1.xpose.msra.mxu0 0.0
        %890 = vmatprep.subr.mxu0 0.0
        %891 = vmatpush1.xpose.msra.mxu0 0.0
        %892 = vmatprep.subr.mxu0 0.0
        %893 = vmatpush1.xpose.msra.mxu0 0.0
        %894 = vmatprep.subr.mxu0 0.0
        %895 = vmatpush1.xpose.msra.mxu0 0.0
        %896 = vmatprep.subr.mxu0 0.0
        %897 = vmatpush1.xpose.msra.mxu0 0.0
        %898 = vmatprep.subr.mxu0 0.0
        %899 = vmatpush1.xpose.msra.mxu0 0.0
        %900 = vmatprep.subr.mxu0 0.0
        %901 = vmatpush1.xpose.msra.mxu0 0.0
        %902 = vmatprep.subr.mxu0 0.0
        %903 = vmatpush1.xpose.msra.mxu0 0.0
        %904 = vmatprep.subr.mxu0 0.0
        %905 = vmatpush1.xpose.msra.mxu0 0.0
        %906 = vmatprep.subr.mxu0 0.0
        %907 = vmatpush1.xpose.msra.mxu0 0.0
        %908 = vmatprep.subr.mxu0 0.0
        %909 = vmatpush1.xpose.msra.mxu0 0.0
        %910 = vmatprep.subr.mxu0 0.0
        %911 = vmatpush1.xpose.msra.mxu0 0.0
        %912 = vmatprep.subr.mxu0 0.0
        %913 = vmatpush1.xpose.msra.mxu0 0.0
        %914 = vmatprep.subr.mxu0 0.0
        %915 = vmatpush1.xpose.msra.mxu0 0.0
        %916 = vmatprep.mubr.f32.mxu0 0.0
        %917 = vmatmul.mubr.f32.gmra.mrb[0].mxu0 %v847
        %v918 = vpop.f32.mrb[0].mxu0
        %v919 = vadd.f32 %v843, %v918
        %v920 = vpop.f32.mrb[0].mxu0
        %921 = vdwg.mxu0
        %v923 = vsel %vm845, %v539, 0
        %v926 = vsel %vm845, %v687, 0
        %928 = vmatprep.subr.mxu0 0.0
        %929 = vmatpush1.xpose.msra.mxu0 %v926
        %930 = vmatprep.subr.mxu0 0.0
        %931 = vmatpush1.xpose.msra.mxu0 0.0
        %932 = vmatprep.subr.mxu0 0.0
        %933 = vmatpush1.xpose.msra.mxu0 0.0
        %934 = vmatprep.subr.mxu0 0.0
        %935 = vmatpush1.xpose.msra.mxu0 0.0
        %936 = vmatprep.subr.mxu0 0.0
        %937 = vmatpush1.xpose.msra.mxu0 0.0
        %938 = vmatprep.subr.mxu0 0.0
        %939 = vmatpush1.xpose.msra.mxu0 0.0
        %940 = vmatprep.subr.mxu0 0.0
        %941 = vmatpush1.xpose.msra.mxu0 0.0
        %942 = vmatprep.subr.mxu0 0.0
        %943 = vmatpush1.xpose.msra.mxu0 0.0
        %944 = vmatprep.subr.mxu0 0.0
        %945 = vmatpush1.xpose.msra.mxu0 0.0
        %946 = vmatprep.subr.mxu0 0.0
        %947 = vmatpush1.xpose.msra.mxu0 0.0
        %948 = vmatprep.subr.mxu0 0.0
        %949 = vmatpush1.xpose.msra.mxu0 0.0
        %950 = vmatprep.subr.mxu0 0.0
        %951 = vmatpush1.xpose.msra.mxu0 0.0
        %952 = vmatprep.subr.mxu0 0.0
        %953 = vmatpush1.xpose.msra.mxu0 0.0
        %954 = vmatprep.subr.mxu0 0.0
        %955 = vmatpush1.xpose.msra.mxu0 0.0
        %956 = vmatprep.subr.mxu0 0.0
        %957 = vmatpush1.xpose.msra.mxu0 0.0
        %958 = vmatprep.subr.mxu0 0.0
        %959 = vmatpush1.xpose.msra.mxu0 0.0
        %960 = vmatprep.subr.mxu0 0.0
        %961 = vmatpush1.xpose.msra.mxu0 0.0
        %962 = vmatprep.subr.mxu0 0.0
        %963 = vmatpush1.xpose.msra.mxu0 0.0
        %964 = vmatprep.subr.mxu0 0.0
        %965 = vmatpush1.xpose.msra.mxu0 0.0
        %966 = vmatprep.subr.mxu0 0.0
        %967 = vmatpush1.xpose.msra.mxu0 0.0
        %968 = vmatprep.subr.mxu0 0.0
        %969 = vmatpush1.xpose.msra.mxu0 0.0
        %970 = vmatprep.subr.mxu0 0.0
        %971 = vmatpush1.xpose.msra.mxu0 0.0
        %972 = vmatprep.subr.mxu0 0.0
        %973 = vmatpush1.xpose.msra.mxu0 0.0
        %974 = vmatprep.subr.mxu0 0.0
        %975 = vmatpush1.xpose.msra.mxu0 0.0
        %976 = vmatprep.subr.mxu0 0.0
        %977 = vmatpush1.xpose.msra.mxu0 0.0
        %978 = vmatprep.subr.mxu0 0.0
        %979 = vmatpush1.xpose.msra.mxu0 0.0
        %980 = vmatprep.subr.mxu0 0.0
        %981 = vmatpush1.xpose.msra.mxu0 0.0
        %982 = vmatprep.subr.mxu0 0.0
        %983 = vmatpush1.xpose.msra.mxu0 0.0
        %984 = vmatprep.subr.mxu0 0.0
        %985 = vmatpush1.xpose.msra.mxu0 0.0
        %986 = vmatprep.subr.mxu0 0.0
        %987 = vmatpush1.xpose.msra.mxu0 0.0
        %988 = vmatprep.subr.mxu0 0.0
        %989 = vmatpush1.xpose.msra.mxu0 0.0
        %990 = vmatprep.subr.mxu0 0.0
        %991 = vmatpush1.xpose.msra.mxu0 0.0
        %992 = vmatprep.mubr.f32.mxu0 0.0
        %993 = vmatmul.mubr.f32.gmra.mrb[0].mxu0 %v923
        %v994 = vpop.f32.mrb[0].mxu0
        %v995 = vadd.f32 %v843, %v994
        %v996 = vpop.f32.mrb[0].mxu0
        %997 = vdwg.mxu0
        %v999 = vsel %vm845, %v540, 0
        %v1002 = vsel %vm845, %v688, 0
        %1004 = vmatprep.subr.mxu0 0.0
        %1005 = vmatpush1.xpose.msra.mxu0 %v1002
        %1006 = vmatprep.subr.mxu0 0.0
        %1007 = vmatpush1.xpose.msra.mxu0 0.0
        %1008 = vmatprep.subr.mxu0 0.0
        %1009 = vmatpush1.xpose.msra.mxu0 0.0
        %1010 = vmatprep.subr.mxu0 0.0
        %1011 = vmatpush1.xpose.msra.mxu0 0.0
        %1012 = vmatprep.subr.mxu0 0.0
        %1013 = vmatpush1.xpose.msra.mxu0 0.0
        %1014 = vmatprep.subr.mxu0 0.0
        %1015 = vmatpush1.xpose.msra.mxu0 0.0
        %1016 = vmatprep.subr.mxu0 0.0
        %1017 = vmatpush1.xpose.msra.mxu0 0.0
        %1018 = vmatprep.subr.mxu0 0.0
        %1019 = vmatpush1.xpose.msra.mxu0 0.0
        %1020 = vmatprep.subr.mxu0 0.0
        %1021 = vmatpush1.xpose.msra.mxu0 0.0
        %1022 = vmatprep.subr.mxu0 0.0
        %1023 = vmatpush1.xpose.msra.mxu0 0.0
        %1024 = vmatprep.subr.mxu0 0.0
        %1025 = vmatpush1.xpose.msra.mxu0 0.0
        %1026 = vmatprep.subr.mxu0 0.0
        %1027 = vmatpush1.xpose.msra.mxu0 0.0
        %1028 = vmatprep.subr.mxu0 0.0
        %1029 = vmatpush1.xpose.msra.mxu0 0.0
        %1030 = vmatprep.subr.mxu0 0.0
        %1031 = vmatpush1.xpose.msra.mxu0 0.0
        %1032 = vmatprep.subr.mxu0 0.0
        %1033 = vmatpush1.xpose.msra.mxu0 0.0
        %1034 = vmatprep.subr.mxu0 0.0
        %1035 = vmatpush1.xpose.msra.mxu0 0.0
        %1036 = vmatprep.subr.mxu0 0.0
        %1037 = vmatpush1.xpose.msra.mxu0 0.0
        %1038 = vmatprep.subr.mxu0 0.0
        %1039 = vmatpush1.xpose.msra.mxu0 0.0
        %1040 = vmatprep.subr.mxu0 0.0
        %1041 = vmatpush1.xpose.msra.mxu0 0.0
        %1042 = vmatprep.subr.mxu0 0.0
        %1043 = vmatpush1.xpose.msra.mxu0 0.0
        %1044 = vmatprep.subr.mxu0 0.0
        %1045 = vmatpush1.xpose.msra.mxu0 0.0
        %1046 = vmatprep.subr.mxu0 0.0
        %1047 = vmatpush1.xpose.msra.mxu0 0.0
        %1048 = vmatprep.subr.mxu0 0.0
        %1049 = vmatpush1.xpose.msra.mxu0 0.0
        %1050 = vmatprep.subr.mxu0 0.0
        %1051 = vmatpush1.xpose.msra.mxu0 0.0
        %1052 = vmatprep.subr.mxu0 0.0
        %1053 = vmatpush1.xpose.msra.mxu0 0.0
        %1054 = vmatprep.subr.mxu0 0.0
        %1055 = vmatpush1.xpose.msra.mxu0 0.0
        %1056 = vmatprep.subr.mxu0 0.0
        %1057 = vmatpush1.xpose.msra.mxu0 0.0
        %1058 = vmatprep.subr.mxu0 0.0
        %1059 = vmatpush1.xpose.msra.mxu0 0.0
        %1060 = vmatprep.subr.mxu0 0.0
        %1061 = vmatpush1.xpose.msra.mxu0 0.0
        %1062 = vmatprep.subr.mxu0 0.0
        %1063 = vmatpush1.xpose.msra.mxu0 0.0
        %1064 = vmatprep.subr.mxu0 0.0
        %1065 = vmatpush1.xpose.msra.mxu0 0.0
        %1066 = vmatprep.subr.mxu0 0.0
        %1067 = vmatpush1.xpose.msra.mxu0 0.0
        %1068 = vmatprep.mubr.f32.mxu0 0.0
        %1069 = vmatmul.mubr.f32.gmra.mrb[0].mxu0 %v999
        %v1070 = vpop.f32.mrb[0].mxu0
        %v1071 = vadd.f32 %v843, %v1070
        %v1072 = vpop.f32.mrb[0].mxu0
        %1073 = vdwg.mxu0
        %v1075 = vsel %vm845, %v541, 0
        %v1078 = vsel %vm845, %v689, 0
        %1080 = vmatprep.subr.mxu0 0.0
        %1081 = vmatpush1.xpose.msra.mxu0 %v1078
        %1082 = vmatprep.subr.mxu0 0.0
        %1083 = vmatpush1.xpose.msra.mxu0 0.0
        %1084 = vmatprep.subr.mxu0 0.0
        %1085 = vmatpush1.xpose.msra.mxu0 0.0
        %1086 = vmatprep.subr.mxu0 0.0
        %1087 = vmatpush1.xpose.msra.mxu0 0.0
        %1088 = vmatprep.subr.mxu0 0.0
        %1089 = vmatpush1.xpose.msra.mxu0 0.0
        %1090 = vmatprep.subr.mxu0 0.0
        %1091 = vmatpush1.xpose.msra.mxu0 0.0
        %1092 = vmatprep.subr.mxu0 0.0
        %1093 = vmatpush1.xpose.msra.mxu0 0.0
        %1094 = vmatprep.subr.mxu0 0.0
        %1095 = vmatpush1.xpose.msra.mxu0 0.0
        %1096 = vmatprep.subr.mxu0 0.0
        %1097 = vmatpush1.xpose.msra.mxu0 0.0
        %1098 = vmatprep.subr.mxu0 0.0
        %1099 = vmatpush1.xpose.msra.mxu0 0.0
        %1100 = vmatprep.subr.mxu0 0.0
        %1101 = vmatpush1.xpose.msra.mxu0 0.0
        %1102 = vmatprep.subr.mxu0 0.0
        %1103 = vmatpush1.xpose.msra.mxu0 0.0
        %1104 = vmatprep.subr.mxu0 0.0
        %1105 = vmatpush1.xpose.msra.mxu0 0.0
        %1106 = vmatprep.subr.mxu0 0.0
        %1107 = vmatpush1.xpose.msra.mxu0 0.0
        %1108 = vmatprep.subr.mxu0 0.0
        %1109 = vmatpush1.xpose.msra.mxu0 0.0
        %1110 = vmatprep.subr.mxu0 0.0
        %1111 = vmatpush1.xpose.msra.mxu0 0.0
        %1112 = vmatprep.subr.mxu0 0.0
        %1113 = vmatpush1.xpose.msra.mxu0 0.0
        %1114 = vmatprep.subr.mxu0 0.0
        %1115 = vmatpush1.xpose.msra.mxu0 0.0
        %1116 = vmatprep.subr.mxu0 0.0
        %1117 = vmatpush1.xpose.msra.mxu0 0.0
        %1118 = vmatprep.subr.mxu0 0.0
        %1119 = vmatpush1.xpose.msra.mxu0 0.0
        %1120 = vmatprep.subr.mxu0 0.0
        %1121 = vmatpush1.xpose.msra.mxu0 0.0
        %1122 = vmatprep.subr.mxu0 0.0
        %1123 = vmatpush1.xpose.msra.mxu0 0.0
        %1124 = vmatprep.subr.mxu0 0.0
        %1125 = vmatpush1.xpose.msra.mxu0 0.0
        %1126 = vmatprep.subr.mxu0 0.0
        %1127 = vmatpush1.xpose.msra.mxu0 0.0
        %1128 = vmatprep.subr.mxu0 0.0
        %1129 = vmatpush1.xpose.msra.mxu0 0.0
        %1130 = vmatprep.subr.mxu0 0.0
        %1131 = vmatpush1.xpose.msra.mxu0 0.0
        %1132 = vmatprep.subr.mxu0 0.0
        %1133 = vmatpush1.xpose.msra.mxu0 0.0
        %1134 = vmatprep.subr.mxu0 0.0
        %1135 = vmatpush1.xpose.msra.mxu0 0.0
        %1136 = vmatprep.subr.mxu0 0.0
        %1137 = vmatpush1.xpose.msra.mxu0 0.0
        %1138 = vmatprep.subr.mxu0 0.0
        %1139 = vmatpush1.xpose.msra.mxu0 0.0
        %1140 = vmatprep.subr.mxu0 0.0
        %1141 = vmatpush1.xpose.msra.mxu0 0.0
        %1142 = vmatprep.subr.mxu0 0.0
        %1143 = vmatpush1.xpose.msra.mxu0 0.0
        %1144 = vmatprep.mubr.f32.mxu0 0.0
        %1145 = vmatmul.mubr.f32.gmra.mrb[0].mxu0 %v1075
        %v1146 = vpop.f32.mrb[0].mxu0
        %v1147 = vadd.f32 %v843, %v1146
        %v1148 = vpop.f32.mrb[0].mxu0
        %1149 = vdwg.mxu0
        %v1150 = vsel %vm845, %v919, -inf
        %1151 = vmax.xlane.f32.xlu0 %v1150
        %v1152 = vpop.xlane.xlu0 %1151
        %v1153 = vsel %vm845, %v995, -inf
        %1154 = vmax.xlane.f32.xlu0 %v1153
        %v1155 = vpop.xlane.xlu0 %1154
        %v1156 = vsel %vm845, %v1071, -inf
        %1157 = vmax.xlane.f32.xlu0 %v1156
        %v1158 = vpop.xlane.xlu0 %1157
        %v1159 = vsel %vm845, %v1147, -inf
        %1160 = vmax.xlane.f32.xlu0 %v1159
        %v1161 = vpop.xlane.xlu0 %1160
        %v1162 = vsub.f32 %v919, %v1152
        %v1163 = vsub.f32 %v995, %v1155
        %v1164 = vsub.f32 %v1071, %v1158
        %v1165 = vsub.f32 %v1147, %v1161
        %v1166 = vmul.f32 %v1162, 1.442695
        %v1167 = vpow.pop %v1166
        %v1168 = vmul.f32 %v1163, 1.442695
        %v1169 = vpow.pop %v1168
        %v1170 = vmul.f32 %v1164, 1.442695
        %v1171 = vpow.pop %v1170
        %v1172 = vmul.f32 %v1165, 1.442695
        %v1173 = vpow.pop %v1172
        %v1174 = vsel %vm845, %v1167, 0.0
        %1175 = vadd.xlane.f32.xlu0 %v1174
        %v1176 = vpop.xlane.xlu0 %1175
        %v1177 = vsel %vm845, %v1169, 0.0
        %1178 = vadd.xlane.f32.xlu0 %v1177
        %v1179 = vpop.xlane.xlu0 %1178
        %v1180 = vsel %vm845, %v1171, 0.0
        %1181 = vadd.xlane.f32.xlu0 %v1180
        %v1182 = vpop.xlane.xlu0 %1181
        %v1183 = vsel %vm845, %v1173, 0.0
        %1184 = vadd.xlane.f32.xlu0 %v1183
        %v1185 = vpop.xlane.xlu0 %1184
        %v1187 = vsel %vm845, %v1167, 0
        %1189 = vmatprep.subr.mxu0 0.0
        %1190 = vmatpush1.msra.mxu0 %v834
        %1191 = vmatprep.subr.mxu0 0.0
        %1192 = vmatpush1.msra.mxu0 0.0
        %1193 = vmatprep.subr.mxu0 0.0
        %1194 = vmatpush1.msra.mxu0 0.0
        %1195 = vmatprep.subr.mxu0 0.0
        %1196 = vmatpush1.msra.mxu0 0.0
        %1197 = vmatprep.subr.mxu0 0.0
        %1198 = vmatpush1.msra.mxu0 0.0
        %1199 = vmatprep.subr.mxu0 0.0
        %1200 = vmatpush1.msra.mxu0 0.0
        %1201 = vmatprep.subr.mxu0 0.0
        %1202 = vmatpush1.msra.mxu0 0.0
        %1203 = vmatprep.subr.mxu0 0.0
        %1204 = vmatpush1.msra.mxu0 0.0
        %1205 = vmatprep.subr.mxu0 0.0
        %1206 = vmatpush1.msra.mxu0 0.0
        %1207 = vmatprep.subr.mxu0 0.0
        %1208 = vmatpush1.msra.mxu0 0.0
        %1209 = vmatprep.subr.mxu0 0.0
        %1210 = vmatpush1.msra.mxu0 0.0
        %1211 = vmatprep.subr.mxu0 0.0
        %1212 = vmatpush1.msra.mxu0 0.0
        %1213 = vmatprep.subr.mxu0 0.0
        %1214 = vmatpush1.msra.mxu0 0.0
        %1215 = vmatprep.subr.mxu0 0.0
        %1216 = vmatpush1.msra.mxu0 0.0
        %1217 = vmatprep.subr.mxu0 0.0
        %1218 = vmatpush1.msra.mxu0 0.0
        %1219 = vmatprep.subr.mxu0 0.0
        %1220 = vmatpush1.msra.mxu0 0.0
        %1221 = vmatprep.subr.mxu0 0.0
        %1222 = vmatpush1.msra.mxu0 0.0
        %1223 = vmatprep.subr.mxu0 0.0
        %1224 = vmatpush1.msra.mxu0 0.0
        %1225 = vmatprep.subr.mxu0 0.0
        %1226 = vmatpush1.msra.mxu0 0.0
        %1227 = vmatprep.subr.mxu0 0.0
        %1228 = vmatpush1.msra.mxu0 0.0
        %1229 = vmatprep.subr.mxu0 0.0
        %1230 = vmatpush1.msra.mxu0 0.0
        %1231 = vmatprep.subr.mxu0 0.0
        %1232 = vmatpush1.msra.mxu0 0.0
        %1233 = vmatprep.subr.mxu0 0.0
        %1234 = vmatpush1.msra.mxu0 0.0
        %1235 = vmatprep.subr.mxu0 0.0
        %1236 = vmatpush1.msra.mxu0 0.0
        %1237 = vmatprep.subr.mxu0 0.0
        %1238 = vmatpush1.msra.mxu0 0.0
        %1239 = vmatprep.subr.mxu0 0.0
        %1240 = vmatpush1.msra.mxu0 0.0
        %1241 = vmatprep.subr.mxu0 0.0
        %1242 = vmatpush1.msra.mxu0 0.0
        %1243 = vmatprep.subr.mxu0 0.0
        %1244 = vmatpush1.msra.mxu0 0.0
        %1245 = vmatprep.subr.mxu0 0.0
        %1246 = vmatpush1.msra.mxu0 0.0
        %1247 = vmatprep.subr.mxu0 0.0
        %1248 = vmatpush1.msra.mxu0 0.0
        %1249 = vmatprep.subr.mxu0 0.0
        %1250 = vmatpush1.msra.mxu0 0.0
        %1251 = vmatprep.subr.mxu0 0.0
        %1252 = vmatpush1.msra.mxu0 0.0
        %1253 = vmatprep.mubr.f32.mxu0 0.0
        %1254 = vmatmul.mubr.f32.gmra.mrb[0].mxu0 %v1187
        %v1255 = vpop.f32.mrb[0].mxu0
        %v1256 = vadd.f32 0.0, %v1255
        %v1257 = vpop.f32.mrb[0].mxu0
        %1258 = vdwg.mxu0
        %v1260 = vsel %vm845, %v1169, 0
        %1262 = vmatprep.subr.mxu0 0.0
        %1263 = vmatpush1.msra.mxu0 %v835
        %1264 = vmatprep.subr.mxu0 0.0
        %1265 = vmatpush1.msra.mxu0 0.0
        %1266 = vmatprep.subr.mxu0 0.0
        %1267 = vmatpush1.msra.mxu0 0.0
        %1268 = vmatprep.subr.mxu0 0.0
        %1269 = vmatpush1.msra.mxu0 0.0
        %1270 = vmatprep.subr.mxu0 0.0
        %1271 = vmatpush1.msra.mxu0 0.0
        %1272 = vmatprep.subr.mxu0 0.0
        %1273 = vmatpush1.msra.mxu0 0.0
        %1274 = vmatprep.subr.mxu0 0.0
        %1275 = vmatpush1.msra.mxu0 0.0
        %1276 = vmatprep.subr.mxu0 0.0
        %1277 = vmatpush1.msra.mxu0 0.0
        %1278 = vmatprep.subr.mxu0 0.0
        %1279 = vmatpush1.msra.mxu0 0.0
        %1280 = vmatprep.subr.mxu0 0.0
        %1281 = vmatpush1.msra.mxu0 0.0
        %1282 = vmatprep.subr.mxu0 0.0
        %1283 = vmatpush1.msra.mxu0 0.0
        %1284 = vmatprep.subr.mxu0 0.0
        %1285 = vmatpush1.msra.mxu0 0.0
        %1286 = vmatprep.subr.mxu0 0.0
        %1287 = vmatpush1.msra.mxu0 0.0
        %1288 = vmatprep.subr.mxu0 0.0
        %1289 = vmatpush1.msra.mxu0 0.0
        %1290 = vmatprep.subr.mxu0 0.0
        %1291 = vmatpush1.msra.mxu0 0.0
        %1292 = vmatprep.subr.mxu0 0.0
        %1293 = vmatpush1.msra.mxu0 0.0
        %1294 = vmatprep.subr.mxu0 0.0
        %1295 = vmatpush1.msra.mxu0 0.0
        %1296 = vmatprep.subr.mxu0 0.0
        %1297 = vmatpush1.msra.mxu0 0.0
        %1298 = vmatprep.subr.mxu0 0.0
        %1299 = vmatpush1.msra.mxu0 0.0
        %1300 = vmatprep.subr.mxu0 0.0
        %1301 = vmatpush1.msra.mxu0 0.0
        %1302 = vmatprep.subr.mxu0 0.0
        %1303 = vmatpush1.msra.mxu0 0.0
        %1304 = vmatprep.subr.mxu0 0.0
        %1305 = vmatpush1.msra.mxu0 0.0
        %1306 = vmatprep.subr.mxu0 0.0
        %1307 = vmatpush1.msra.mxu0 0.0
        %1308 = vmatprep.subr.mxu0 0.0
        %1309 = vmatpush1.msra.mxu0 0.0
        %1310 = vmatprep.subr.mxu0 0.0
        %1311 = vmatpush1.msra.mxu0 0.0
        %1312 = vmatprep.subr.mxu0 0.0
        %1313 = vmatpush1.msra.mxu0 0.0
        %1314 = vmatprep.subr.mxu0 0.0
        %1315 = vmatpush1.msra.mxu0 0.0
        %1316 = vmatprep.subr.mxu0 0.0
        %1317 = vmatpush1.msra.mxu0 0.0
        %1318 = vmatprep.subr.mxu0 0.0
        %1319 = vmatpush1.msra.mxu0 0.0
        %1320 = vmatprep.subr.mxu0 0.0
        %1321 = vmatpush1.msra.mxu0 0.0
        %1322 = vmatprep.subr.mxu0 0.0
        %1323 = vmatpush1.msra.mxu0 0.0
        %1324 = vmatprep.subr.mxu0 0.0
        %1325 = vmatpush1.msra.mxu0 0.0
        %1326 = vmatprep.mubr.f32.mxu0 0.0
        %1327 = vmatmul.mubr.f32.gmra.mrb[0].mxu0 %v1260
        %v1328 = vpop.f32.mrb[0].mxu0
        %v1329 = vadd.f32 0.0, %v1328
        %v1330 = vpop.f32.mrb[0].mxu0
        %1331 = vdwg.mxu0
        %v1333 = vsel %vm845, %v1171, 0
        %1335 = vmatprep.subr.mxu0 0.0
        %1336 = vmatpush1.msra.mxu0 %v836
        %1337 = vmatprep.subr.mxu0 0.0
        %1338 = vmatpush1.msra.mxu0 0.0
        %1339 = vmatprep.subr.mxu0 0.0
        %1340 = vmatpush1.msra.mxu0 0.0
        %1341 = vmatprep.subr.mxu0 0.0
        %1342 = vmatpush1.msra.mxu0 0.0
        %1343 = vmatprep.subr.mxu0 0.0
        %1344 = vmatpush1.msra.mxu0 0.0
        %1345 = vmatprep.subr.mxu0 0.0
        %1346 = vmatpush1.msra.mxu0 0.0
        %1347 = vmatprep.subr.mxu0 0.0
        %1348 = vmatpush1.msra.mxu0 0.0
        %1349 = vmatprep.subr.mxu0 0.0
        %1350 = vmatpush1.msra.mxu0 0.0
        %1351 = vmatprep.subr.mxu0 0.0
        %1352 = vmatpush1.msra.mxu0 0.0
        %1353 = vmatprep.subr.mxu0 0.0
        %1354 = vmatpush1.msra.mxu0 0.0
        %1355 = vmatprep.subr.mxu0 0.0
        %1356 = vmatpush1.msra.mxu0 0.0
        %1357 = vmatprep.subr.mxu0 0.0
        %1358 = vmatpush1.msra.mxu0 0.0
        %1359 = vmatprep.subr.mxu0 0.0
        %1360 = vmatpush1.msra.mxu0 0.0
        %1361 = vmatprep.subr.mxu0 0.0
        %1362 = vmatpush1.msra.mxu0 0.0
        %1363 = vmatprep.subr.mxu0 0.0
        %1364 = vmatpush1.msra.mxu0 0.0
        %1365 = vmatprep.subr.mxu0 0.0
        %1366 = vmatpush1.msra.mxu0 0.0
        %1367 = vmatprep.subr.mxu0 0.0
        %1368 = vmatpush1.msra.mxu0 0.0
        %1369 = vmatprep.subr.mxu0 0.0
        %1370 = vmatpush1.msra.mxu0 0.0
        %1371 = vmatprep.subr.mxu0 0.0
        %1372 = vmatpush1.msra.mxu0 0.0
        %1373 = vmatprep.subr.mxu0 0.0
        %1374 = vmatpush1.msra.mxu0 0.0
        %1375 = vmatprep.subr.mxu0 0.0
        %1376 = vmatpush1.msra.mxu0 0.0
        %1377 = vmatprep.subr.mxu0 0.0
        %1378 = vmatpush1.msra.mxu0 0.0
        %1379 = vmatprep.subr.mxu0 0.0
        %1380 = vmatpush1.msra.mxu0 0.0
        %1381 = vmatprep.subr.mxu0 0.0
        %1382 = vmatpush1.msra.mxu0 0.0
        %1383 = vmatprep.subr.mxu0 0.0
        %1384 = vmatpush1.msra.mxu0 0.0
        %1385 = vmatprep.subr.mxu0 0.0
        %1386 = vmatpush1.msra.mxu0 0.0
        %1387 = vmatprep.subr.mxu0 0.0
        %1388 = vmatpush1.msra.mxu0 0.0
        %1389 = vmatprep.subr.mxu0 0.0
        %1390 = vmatpush1.msra.mxu0 0.0
        %1391 = vmatprep.subr.mxu0 0.0
        %1392 = vmatpush1.msra.mxu0 0.0
        %1393 = vmatprep.subr.mxu0 0.0
        %1394 = vmatpush1.msra.mxu0 0.0
        %1395 = vmatprep.subr.mxu0 0.0
        %1396 = vmatpush1.msra.mxu0 0.0
        %1397 = vmatprep.subr.mxu0 0.0
        %1398 = vmatpush1.msra.mxu0 0.0
        %1399 = vmatprep.mubr.f32.mxu0 0.0
        %1400 = vmatmul.mubr.f32.gmra.mrb[0].mxu0 %v1333
        %v1401 = vpop.f32.mrb[0].mxu0
        %v1402 = vadd.f32 0.0, %v1401
        %v1403 = vpop.f32.mrb[0].mxu0
        %1404 = vdwg.mxu0
        %v1406 = vsel %vm845, %v1173, 0
        %1408 = vmatprep.subr.mxu0 0.0
        %1409 = vmatpush1.msra.mxu0 %v837
        %1410 = vmatprep.subr.mxu0 0.0
        %1411 = vmatpush1.msra.mxu0 0.0
        %1412 = vmatprep.subr.mxu0 0.0
        %1413 = vmatpush1.msra.mxu0 0.0
        %1414 = vmatprep.subr.mxu0 0.0
        %1415 = vmatpush1.msra.mxu0 0.0
        %1416 = vmatprep.subr.mxu0 0.0
        %1417 = vmatpush1.msra.mxu0 0.0
        %1418 = vmatprep.subr.mxu0 0.0
        %1419 = vmatpush1.msra.mxu0 0.0
        %1420 = vmatprep.subr.mxu0 0.0
        %1421 = vmatpush1.msra.mxu0 0.0
        %1422 = vmatprep.subr.mxu0 0.0
        %1423 = vmatpush1.msra.mxu0 0.0
        %1424 = vmatprep.subr.mxu0 0.0
        %1425 = vmatpush1.msra.mxu0 0.0
        %1426 = vmatprep.subr.mxu0 0.0
        %1427 = vmatpush1.msra.mxu0 0.0
        %1428 = vmatprep.subr.mxu0 0.0
        %1429 = vmatpush1.msra.mxu0 0.0
        %1430 = vmatprep.subr.mxu0 0.0
        %1431 = vmatpush1.msra.mxu0 0.0
        %1432 = vmatprep.subr.mxu0 0.0
        %1433 = vmatpush1.msra.mxu0 0.0
        %1434 = vmatprep.subr.mxu0 0.0
        %1435 = vmatpush1.msra.mxu0 0.0
        %1436 = vmatprep.subr.mxu0 0.0
        %1437 = vmatpush1.msra.mxu0 0.0
        %1438 = vmatprep.subr.mxu0 0.0
        %1439 = vmatpush1.msra.mxu0 0.0
        %1440 = vmatprep.subr.mxu0 0.0
        %1441 = vmatpush1.msra.mxu0 0.0
        %1442 = vmatprep.subr.mxu0 0.0
        %1443 = vmatpush1.msra.mxu0 0.0
        %1444 = vmatprep.subr.mxu0 0.0
        %1445 = vmatpush1.msra.mxu0 0.0
        %1446 = vmatprep.subr.mxu0 0.0
        %1447 = vmatpush1.msra.mxu0 0.0
        %1448 = vmatprep.subr.mxu0 0.0
        %1449 = vmatpush1.msra.mxu0 0.0
        %1450 = vmatprep.subr.mxu0 0.0
        %1451 = vmatpush1.msra.mxu0 0.0
        %1452 = vmatprep.subr.mxu0 0.0
        %1453 = vmatpush1.msra.mxu0 0.0
        %1454 = vmatprep.subr.mxu0 0.0
        %1455 = vmatpush1.msra.mxu0 0.0
        %1456 = vmatprep.subr.mxu0 0.0
        %1457 = vmatpush1.msra.mxu0 0.0
        %1458 = vmatprep.subr.mxu0 0.0
        %1459 = vmatpush1.msra.mxu0 0.0
        %1460 = vmatprep.subr.mxu0 0.0
        %1461 = vmatpush1.msra.mxu0 0.0
        %1462 = vmatprep.subr.mxu0 0.0
        %1463 = vmatpush1.msra.mxu0 0.0
        %1464 = vmatprep.subr.mxu0 0.0
        %1465 = vmatpush1.msra.mxu0 0.0
        %1466 = vmatprep.subr.mxu0 0.0
        %1467 = vmatpush1.msra.mxu0 0.0
        %1468 = vmatprep.subr.mxu0 0.0
        %1469 = vmatpush1.msra.mxu0 0.0
        %1470 = vmatprep.subr.mxu0 0.0
        %1471 = vmatpush1.msra.mxu0 0.0
        %1472 = vmatprep.mubr.f32.mxu0 0.0
        %1473 = vmatmul.mubr.f32.gmra.mrb[0].mxu0 %v1406
        %v1474 = vpop.f32.mrb[0].mxu0
        %v1475 = vadd.f32 0.0, %v1474
        %v1476 = vpop.f32.mrb[0].mxu0
        %1477 = vdwg.mxu0
        %v1478 = vrcp.pop %v1176
        %v1479 = vrcp.pop %v1179
        %v1480 = vrcp.pop %v1182
        %v1481 = vrcp.pop %v1185
        %v1482 = vmul.f32 %v1256, %v1478
        %v1483 = vmul.f32 %v1329, %v1479
        %v1484 = vmul.f32 %v1402, %v1480
        %v1485 = vmul.f32 %v1475, %v1481
        %v1486 = vcombine.low %v1482, %v1484
        %v1487 = vcombine.high %v1482, %v1484
        %v1489 = vunpack.c.l.s4 1983009808
        %v1490 = vunpack.c.0.s8 %v1489
        %v1491 = vlaneseq
        %v1492 = vshrl.u32 %v1491, 7
        %v1493 = vsub.s32 %v1490, %v1492
        %v1494 = vrot.slane %v1486, %v1493
        %v1496 = vunpack.c.l.s4 1983009808
        %v1497 = vunpack.c.0.s8 %v1496
        %v1498 = vlaneseq
        %v1499 = vshrl.u32 %v1498, 7
        %v1500 = vsub.s32 %v1497, %v1499
        %v1501 = vrot.slane %v1487, %v1500
        %v1502 = vcombine.low %v1483, %v1485
        %v1503 = vcombine.high %v1483, %v1485
        %v1505 = vunpack.c.l.s4 1983009808
        %v1506 = vunpack.c.0.s8 %v1505
        %v1507 = vlaneseq
        %v1508 = vshrl.u32 %v1507, 7
        %v1509 = vsub.s32 %v1506, %v1508
        %v1510 = vrot.slane %v1502, %v1509
        %v1512 = vunpack.c.l.s4 1983009808
        %v1513 = vunpack.c.0.s8 %v1512
        %v1514 = vlaneseq
        %v1515 = vshrl.u32 %v1514, 7
        %v1516 = vsub.s32 %v1513, %v1515
        %v1517 = vrot.slane %v1503, %v1516
        %v1518 = vcombine.low %v1494, %v1510
        %v1519 = vcombine.high %v1494, %v1510
        %v1521 = vunpack.c.l.s4 1934713408
        %v1522 = vunpack.c.0.s8 %v1521
        %v1523 = vlaneseq
        %v1524 = vshrl.u32 %v1523, 7
        %v1525 = vsub.s32 %v1522, %v1524
        %v1526 = vrot.slane %v1518, %v1525
        %v1528 = vunpack.c.l.s4 1934713408
        %v1529 = vunpack.c.0.s8 %v1528
        %v1530 = vlaneseq
        %v1531 = vshrl.u32 %v1530, 7
        %v1532 = vsub.s32 %v1529, %v1531
        %v1533 = vrot.slane %v1519, %v1532
        %v1534 = vcombine.low %v1501, %v1517
        %v1535 = vcombine.high %v1501, %v1517
        %v1537 = vunpack.c.l.s4 1934713408
        %v1538 = vunpack.c.0.s8 %v1537
        %v1539 = vlaneseq
        %v1540 = vshrl.u32 %v1539, 7
        %v1541 = vsub.s32 %v1538, %v1540
        %v1542 = vrot.slane %v1534, %v1541
        %v1544 = vunpack.c.l.s4 1934713408
        %v1545 = vunpack.c.0.s8 %v1544
        %v1546 = vlaneseq
        %v1547 = vshrl.u32 %v1546, 7
        %v1548 = vsub.s32 %v1545, %v1547
        %v1549 = vrot.slane %v1535, %v1548
        %v1550 = vcombine.high %v1526, 0.0
        %v1551 = vcombine.high %v1533, 0.0
        %v1552 = vcombine.high %v1542, 0.0
        %v1553 = vcombine.high %v1549, 0.0
        %v1554 = vcombine.low %v1526, %v1533
        %v1556 = vunpack.c.l.s4 1983009808
        %v1557 = vunpack.c.0.s8 %v1556
        %v1558 = vlaneseq
        %v1559 = vshrl.u32 %v1558, 7
        %v1560 = vsub.s32 %v1557, %v1559
        %v1561 = vrot.slane %v1554, %v1560
        %v1562 = vcombine.low %v1550, %v1551
        %v1564 = vunpack.c.l.s4 1983009808
        %v1565 = vunpack.c.0.s8 %v1564
        %v1566 = vlaneseq
        %v1567 = vshrl.u32 %v1566, 7
        %v1568 = vsub.s32 %v1565, %v1567
        %v1569 = vrot.slane %v1562, %v1568
        %v1570 = vcombine.low %v1542, %v1549
        %v1572 = vunpack.c.l.s4 1983009808
        %v1573 = vunpack.c.0.s8 %v1572
        %v1574 = vlaneseq
        %v1575 = vshrl.u32 %v1574, 7
        %v1576 = vsub.s32 %v1573, %v1575
        %v1577 = vrot.slane %v1570, %v1576
        %v1578 = vcombine.low %v1552, %v1553
        %v1580 = vunpack.c.l.s4 1983009808
        %v1581 = vunpack.c.0.s8 %v1580
        %v1582 = vlaneseq
        %v1583 = vshrl.u32 %v1582, 7
        %v1584 = vsub.s32 %v1581, %v1583
        %v1585 = vrot.slane %v1578, %v1584
        %v1586 = vcombine.low %v1561, %v1569
        %v1587 = vcombine.high %v1561, %v1569
        %v1589 = vunpack.c.l.s4 1934713408
        %v1590 = vunpack.c.0.s8 %v1589
        %v1591 = vlaneseq
        %v1592 = vshrl.u32 %v1591, 7
        %v1593 = vsub.s32 %v1590, %v1592
        %v1594 = vrot.slane %v1586, %v1593
        %v1596 = vunpack.c.l.s4 1934713408
        %v1597 = vunpack.c.0.s8 %v1596
        %v1598 = vlaneseq
        %v1599 = vshrl.u32 %v1598, 7
        %v1600 = vsub.s32 %v1597, %v1599
        %v1601 = vrot.slane %v1587, %v1600
        %v1602 = vcombine.low %v1577, %v1585
        %v1603 = vcombine.high %v1577, %v1585
        %v1605 = vunpack.c.l.s4 1934713408
        %v1606 = vunpack.c.0.s8 %v1605
        %v1607 = vlaneseq
        %v1608 = vshrl.u32 %v1607, 7
        %v1609 = vsub.s32 %v1606, %v1608
        %v1610 = vrot.slane %v1602, %v1609
        %v1612 = vunpack.c.l.s4 1934713408
        %v1613 = vunpack.c.0.s8 %v1612
        %v1614 = vlaneseq
        %v1615 = vshrl.u32 %v1614, 7
        %v1616 = vsub.s32 %v1613, %v1615
        %v1617 = vrot.slane %v1603, %v1616
        %v1618 = vcombine.low %v1594, %v1610
        %v1619 = vcombine.high %v1594, %v1610
        %v1620 = vcombine.low %v1601, %v1617
        %v1621 = vcombine.high %v1601, %v1617
        %1623 = vrot.lane.b32.xlu0 %v1619, 8
        %v1624 = vpop.permute.xlu0 %1623
        %1627 = vrot.lane.b32.xlu0 %v1620, 16
        %v1628 = vpop.permute.xlu0 %1627
        %1631 = vrot.lane.b32.xlu0 %v1621, 24
        %v1632 = vpop.permute.xlu0 %1631
        %v1634 = vsel %vm845, %v1618, %v1624
        %vm1635 = vcmask 130048
        %v1636 = vsel %vm1635, %v1634, %v1628
        %vm1637 = vcmask 195584
        %v1638 = vsel %vm1637, %v1636, %v1632
        %v1639 = vld [vmem:[#allocation7] sm:$0xff]
        %v1640 = vld [vmem:[#allocation7 + $0x8] sm:$0xff]
        %v1641 = vld [vmem:[#allocation7 + $0x10] sm:$0xff]
        %v1642 = vld [vmem:[#allocation7 + $0x18] sm:$0xff]
        %v1643 = vld [vmem:[%s5] sm:$0x1]
        %v1645 = vlaneseq
        %v1646 = vshrl.u32 %v1645, 7
        %v1647 = vsub.s32 0, %v1646
        %v1648 = vrot.slane %v1643, %v1647
        %v1651 = vsel %vm322, %v1638, 0
        %1653 = vmatprep.subr.mxu0 0.0
        %1654 = vmatpush1.msra.mxu0 %v1639
        %1655 = vmatprep.subr.mxu0 0.0
        %1656 = vmatpush1.msra.mxu0 %v1640
        %1657 = vmatprep.subr.mxu0 0.0
        %1658 = vmatpush1.msra.mxu0 %v1641
        %1659 = vmatprep.subr.mxu0 0.0
        %1660 = vmatpush1.msra.mxu0 %v1642
        %1661 = vmatprep.subr.mxu0 0.0
        %1662 = vmatpush1.msra.mxu0 0.0
        %1663 = vmatprep.subr.mxu0 0.0
        %1664 = vmatpush1.msra.mxu0 0.0
        %1665 = vmatprep.subr.mxu0 0.0
        %1666 = vmatpush1.msra.mxu0 0.0
        %1667 = vmatprep.subr.mxu0 0.0
        %1668 = vmatpush1.msra.mxu0 0.0
        %1669 = vmatprep.subr.mxu0 0.0
        %1670 = vmatpush1.msra.mxu0 0.0
        %1671 = vmatprep.subr.mxu0 0.0
        %1672 = vmatpush1.msra.mxu0 0.0
        %1673 = vmatprep.subr.mxu0 0.0
        %1674 = vmatpush1.msra.mxu0 0.0
        %1675 = vmatprep.subr.mxu0 0.0
        %1676 = vmatpush1.msra.mxu0 0.0
        %1677 = vmatprep.subr.mxu0 0.0
        %1678 = vmatpush1.msra.mxu0 0.0
        %1679 = vmatprep.subr.mxu0 0.0
        %1680 = vmatpush1.msra.mxu0 0.0
        %1681 = vmatprep.subr.mxu0 0.0
        %1682 = vmatpush1.msra.mxu0 0.0
        %1683 = vmatprep.subr.mxu0 0.0
        %1684 = vmatpush1.msra.mxu0 0.0
        %1685 = vmatprep.subr.mxu0 0.0
        %1686 = vmatpush1.msra.mxu0 0.0
        %1687 = vmatprep.subr.mxu0 0.0
        %1688 = vmatpush1.msra.mxu0 0.0
        %1689 = vmatprep.subr.mxu0 0.0
        %1690 = vmatpush1.msra.mxu0 0.0
        %1691 = vmatprep.subr.mxu0 0.0
        %1692 = vmatpush1.msra.mxu0 0.0
        %1693 = vmatprep.subr.mxu0 0.0
        %1694 = vmatpush1.msra.mxu0 0.0
        %1695 = vmatprep.subr.mxu0 0.0
        %1696 = vmatpush1.msra.mxu0 0.0
        %1697 = vmatprep.subr.mxu0 0.0
        %1698 = vmatpush1.msra.mxu0 0.0
        %1699 = vmatprep.subr.mxu0 0.0
        %1700 = vmatpush1.msra.mxu0 0.0
        %1701 = vmatprep.subr.mxu0 0.0
        %1702 = vmatpush1.msra.mxu0 0.0
        %1703 = vmatprep.subr.mxu0 0.0
        %1704 = vmatpush1.msra.mxu0 0.0
        %1705 = vmatprep.subr.mxu0 0.0
        %1706 = vmatpush1.msra.mxu0 0.0
        %1707 = vmatprep.subr.mxu0 0.0
        %1708 = vmatpush1.msra.mxu0 0.0
        %1709 = vmatprep.subr.mxu0 0.0
        %1710 = vmatpush1.msra.mxu0 0.0
        %1711 = vmatprep.subr.mxu0 0.0
        %1712 = vmatpush1.msra.mxu0 0.0
        %1713 = vmatprep.subr.mxu0 0.0
        %1714 = vmatpush1.msra.mxu0 0.0
        %1715 = vmatprep.subr.mxu0 0.0
        %1716 = vmatpush1.msra.mxu0 0.0
        %1717 = vmatprep.mubr.f32.mxu0 0.0
        %1718 = vmatmul.mubr.f32.gmra.mrb[0].mxu0 %v1651
        %v1719 = vpop.f32.mrb[0].mxu0
        %v1720 = vadd.f32 %v1648, %v1719
        %v1721 = vpop.f32.mrb[0].mxu0
        %1722 = vdwg.mxu0
        %1723 = vst.msk [vmem:[%s306] sm:$0xff] %vm322, %v1720
        %s1724 = sand.u32 %s168, 1
        %s1725 = scalar_lea.sflag [#allocation4], %s1724
        %s1726 = sand.u32 %s168, 1
        %s1727 = smul.addr %s1726, 8
        %s1728 = scalar_lea.vmem [#allocation8], %s1727
        // Predicated region
        $region57: #{tpu_custom_call.1} parent=43 // pred_check
          %p1729 = pneg %p178
        $region58: #{tpu_custom_call.1} parent=43 // pred_check_branch
          %1731 = sbr.rel (%p1729) target = $region60
        $region59: #{tpu_custom_call.1} parent=43 // pred_region
          %s1733 = ssub.s32 128, 128
          %1734 = vsyncadd %s1725, %s1733
          %s1735 = smul.addr %s24, 128
          %s1736 = scalar_lea.hbm %s6, %s1735
          %s1738 = sshll.u32 %s1728, 4
          %s1739 = int_to_ptr.vmem [resolvable:$true] %s1738
          %1741 = dma.vmem_to_hbm [thread:$0]  %s1739, 128, %s1736, %s1725
        $region60: #{tpu_custom_call.1} parent=43 // pred_fallthru
          _
      $region44: #{tpu_custom_call.1} parent=5 // pred_fallthru
        _
      %p1742 = scmp.le.s32.totalorder 2, %s19
      // Predicated region
      $region61: #{tpu_custom_call.1} parent=5 // pred_check
        %p1743 = pneg %p1742
      $region62: #{tpu_custom_call.1} parent=5 // pred_check_branch
        %1745 = sbr.rel (%p1743) target = $region64
      $region63: #{tpu_custom_call.1} parent=5 // pred_region
        %s1746 = ssub.s32 %s19, 2
        // Predicated region
        $region65: #{tpu_custom_call.1} parent=63 // pred_check
          %p1747 = pneg %p184
        $region66: #{tpu_custom_call.1} parent=63 // pred_check_branch
          %1749 = sbr.rel (%p1747) target = $region68
        $region67: #{tpu_custom_call.1} parent=63 // pred_region
          %s1750 = sand.u32 %s169, 1
          %s1751 = scalar_lea.sflag [#allocation4], %s1750
          %s1752 = sand.u32 %s169, 1
          %s1753 = smul.addr %s1752, 8
          %s1754 = scalar_lea.vmem [#allocation8], %s1753
          %1755 = dma.done %s1751, 128
        $region68: #{tpu_custom_call.1} parent=63 // pred_fallthru
          _
      $region64: #{tpu_custom_call.1} parent=5 // pred_fallthru
        _
    $region6: #{tpu_custom_call.1} parent=1 // loop_footer
      %s23 = sadd.s32 1, %s19
    $region7: #{tpu_custom_call.1} parent=1 // loop_footer_branch
      %18 = sbr.rel target = $region3
    $region8: #{tpu_custom_call.1} parent=1 // loop_exit
      _
    %1756 = vsyncpa [#allocation3], 1
    %s1757 = scalar_lea.sflag [#allocation3], 1
    %1758 = vsyncpa %s1757, 1
    %1759 = vsyncpa [#allocation6], 1
    %1760 = vsyncpa [#allocation4], 1
    %s1761 = scalar_lea.sflag [#allocation4], 1
    %1762 = vsyncpa %s1761, 1

</llo_original>
